<compile_context>
chip_gen: v7x
topology: tpu7x:2x2x1
jax: 0.10.0
libtpu: 0.0.40
codegen_flags: <defaults>
</compile_context>

<pallas_src>
import jax
import jax.numpy as jnp
import numpy as np
from jax.experimental import pallas as pl
from jax.experimental.pallas import tpu as pltpu

# log(float32(1e-45)) == log(1.4013e-45) ~= -103.2789, i.e. exactly what
# PyTorch's `(mask + 1e-45).log()` produces on CPU for masked positions.
_LOG_TINY = float(np.log(np.float64(np.float32(1e-45))))
_NEG_BIG = -1e30  # sentinel for padded (non-existent) sequence positions


def _round_up(x, m):
    return ((x + m - 1) // m) * m


def attention_forward(decoder_state, encoder_outputs, mask, W1, W2, vt):
    """Pallas TPU version of Attention.forward(decoder_state, encoder_outputs, mask)."""
    B, T, H = encoder_outputs.shape

    # Lane-dense padding of the hidden and sequence dims.
    Hp = _round_up(H, 128)
    Tp = _round_up(T, 128)

    # Batch tile: multiple of 8 sublanes; grow while the double-buffered
    # encoder block stays small (safe for v7x's 32 MiB default scoped VMEM).
    Bb = 8
    while (Bb < 32 and 2 * Bb <= _round_up(B, 8)
           and 2 * (2 * Bb) * Tp * Hp * 4 <= (8 << 20)):
        Bb *= 2
    B_pad = _round_up(B, Bb)
    grid = (B_pad // Bb,)

    f32 = jnp.float32
    enc_p = jnp.zeros((B_pad, Tp, Hp), f32).at[:B, :T, :H].set(
        encoder_outputs.astype(f32))
    dec_p = jnp.zeros((B_pad, Hp), f32).at[:B, :H].set(decoder_state.astype(f32))
    mask_p = jnp.zeros((B_pad, Tp), f32).at[:B, :T].set(mask.astype(f32))
    # nn.Linear stores weight as (out, in); y = x @ W.T -> pre-transpose + pad.
    w1t_p = jnp.zeros((Hp, Hp), f32).at[:H, :H].set(W1.T.astype(f32))
    w2t_p = jnp.zeros((Hp, Hp), f32).at[:H, :H].set(W2.T.astype(f32))
    vt_p = jnp.zeros((1, Hp), f32).at[:, :H].set(vt.reshape(1, H).astype(f32))

    # Pre-flatten the encoder in the wrapper (layout-free) so the kernel sees
    # a plain (Bb*Tp, Hp) tile for the big matmul.
    enc_flat = enc_p.reshape(B_pad * Tp, Hp)

    def kernel(dec_ref, enc_ref, mask_ref, w1t_ref, w2t_ref, vt_ref, out_ref):
        # Block shapes:
        #   dec_ref  : (Bb, Hp)       enc_ref : (Bb*Tp, Hp)   mask_ref : (Bb, Tp)
        #   w1t/w2t  : (Hp, Hp)       vt_ref  : (1, Hp)       out_ref  : (Bb, Tp)
        enc_t = jnp.dot(enc_ref[...], w1t_ref[...],
                        preferred_element_type=jnp.float32)        # (Bb*Tp, Hp)
        dec_t = jnp.dot(dec_ref[...], w2t_ref[...],
                        preferred_element_type=jnp.float32)        # (Bb, Hp)

        h = jnp.tanh(enc_t.reshape(Bb, Tp, Hp) + dec_t[:, None, :])  # (Bb,Tp,Hp)

        # u_i = vt(h).squeeze(-1): fold vt into a mul + lane reduce (no h.T).
        u = jnp.sum(h * vt_ref[...], axis=-1)                      # (Bb, Tp)

        # Masked log-softmax with finite offsets (no denormal log, no -inf).
        mask_f = mask_ref[...]
        logits = jnp.where(mask_f > 0, u, u + jnp.float32(_LOG_TINY))
        # Exclude padded tail positions (t >= T) from the softmax entirely.
        t_idx = jax.lax.broadcasted_iota(jnp.int32, (Bb, Tp), 1)
        logits = jnp.where(t_idx < T, logits, jnp.float32(_NEG_BIG))

        m = jnp.max(logits, axis=-1, keepdims=True)
        lse = jnp.log(jnp.sum(jnp.exp(logits - m), axis=-1, keepdims=True))
        out_ref[...] = logits - m - lse

    cost = pl.CostEstimate(
        flops=2 * B_pad * Tp * Hp * Hp + 2 * B_pad * Hp * Hp + 2 * B_pad * Tp * Hp,
        transcendentals=B_pad * Tp * Hp + B_pad * Tp + B_pad,
        bytes_accessed=4 * (B_pad * Tp * Hp + B_pad * Hp + 2 * B_pad * Tp
                            + 2 * Hp * Hp + Hp),
    )

    out = pl.pallas_call(
        kernel,
        out_shape=jax.ShapeDtypeStruct((B_pad, Tp), jnp.float32),
        grid_spec=pltpu.PrefetchScalarGridSpec(
            num_scalar_prefetch=0,
            grid=grid,
            in_specs=[
                pl.BlockSpec((Bb, Hp), lambda b: (b, 0)),        # decoder_state
                pl.BlockSpec((Bb * Tp, Hp), lambda b: (b, 0)),   # encoder (flat)
                pl.BlockSpec((Bb, Tp), lambda b: (b, 0)),        # mask
                pl.BlockSpec((Hp, Hp), lambda b: (0, 0)),        # W1^T
                pl.BlockSpec((Hp, Hp), lambda b: (0, 0)),        # W2^T
                pl.BlockSpec((1, Hp), lambda b: (0, 0)),         # vt
            ],
            out_specs=pl.BlockSpec((Bb, Tp), lambda b: (b, 0)),
        ),
        compiler_params=pltpu.CompilerParams(
            dimension_semantics=("parallel",),
        ),
        cost_estimate=cost,
    )(dec_p, enc_flat, mask_p, w1t_p, w2t_p, vt_p)

    return out[:B, :T]


def attention_reference(decoder_state, encoder_outputs, mask, W1, W2, vt):
    """Pure-JAX reference mirroring the PyTorch forward (finite mask offset)."""
    enc_t = jnp.einsum("bth,kh->btk", encoder_outputs, W1)
    dec_t = (decoder_state @ W2.T)[:, None, :]
    u = jnp.einsum("bth,kh->btk", jnp.tanh(enc_t + dec_t), vt)[..., 0]
    logits = u + jnp.where(mask > 0, 0.0, jnp.float32(_LOG_TINY))
    return jax.nn.log_softmax(logits, axis=-1)


if __name__ == "__main__":
    B, T, H = 2, 8, 32
    key = jax.random.PRNGKey(0)
    k_dec, k_enc, k_w1, k_w2, k_vt = jax.random.split(key, 5)

    decoder_state = jax.random.normal(k_dec, (B, H), dtype=jnp.float32)
    encoder_outputs = jax.random.normal(k_enc, (B, T, H), dtype=jnp.float32)

    # mask: sequence lengths [8, 5]
    lengths = jnp.array([8, 5])
    mask = (jnp.arange(T)[None, :] < lengths[:, None]).astype(jnp.float32)

    # Deterministic init matching init_weights: uniform(-0.08, 0.08), no biases.
    wr = 0.08
    W1 = jax.random.uniform(k_w1, (H, H), minval=-wr, maxval=wr, dtype=jnp.float32)
    W2 = jax.random.uniform(k_w2, (H, H), minval=-wr, maxval=wr, dtype=jnp.float32)
    vt = jax.random.uniform(k_vt, (1, H), minval=-wr, maxval=wr, dtype=jnp.float32)

    out = attention_forward(decoder_state, encoder_outputs, mask, W1, W2, vt)
    jax.block_until_ready(out)

    ref = attention_reference(decoder_state, encoder_outputs, mask, W1, W2, vt)
    jax.block_until_ready(ref)

    assert out.shape == (B, T)
    assert bool(jnp.all(jnp.isfinite(out)))          # no -inf / NaN anywhere
    assert bool(jnp.allclose(out, ref, atol=1e-4, rtol=1e-4))

    print("KERNEL_OK")
</pallas_src>

<mosaic_0001>
module attributes {stable_mosaic.version = 11 : i64} {
  func.func @kernel(%arg0: i32, %arg1: memref<8x128xf32, #tpu.memory_space<vmem>>, %arg2: memref<1024x128xf32, #tpu.memory_space<vmem>>, %arg3: memref<8x128xf32, #tpu.memory_space<vmem>>, %arg4: memref<128x128xf32, #tpu.memory_space<vmem>>, %arg5: memref<128x128xf32, #tpu.memory_space<vmem>>, %arg6: memref<1x128xf32, #tpu.memory_space<vmem>>, %arg7: memref<8x128xf32, #tpu.memory_space<vmem>>) attributes {dimension_semantics = [#tpu.dimension_semantics<parallel>], iteration_bounds = array<i64: 1>, scalar_prefetch = 0 : i64, scratch_operands = 0 : i64, tpu.core_type = #tpu.core_type<tc>, window_params = [{transform_indices = @transform_0, window_bounds = array<i64: 8, 128>}, {transform_indices = @transform_1, window_bounds = array<i64: 1024, 128>}, {transform_indices = @transform_2, window_bounds = array<i64: 8, 128>}, {pipeline_mode = #tpu.pipeline_mode<synchronous>, transform_indices = @transform_3, window_bounds = array<i64: 128, 128>}, {pipeline_mode = #tpu.pipeline_mode<synchronous>, transform_indices = @transform_4, window_bounds = array<i64: 128, 128>}, {pipeline_mode = #tpu.pipeline_mode<synchronous>, transform_indices = @transform_5, window_bounds = array<i64: 1, 128>}, {transform_indices = @transform_6, window_bounds = array<i64: 8, 128>}]} {
    %c0 = arith.constant 0 : index
    %c0_0 = arith.constant 0 : index
    %0 = vector.load %arg2[%c0, %c0_0] : memref<1024x128xf32, #tpu.memory_space<vmem>>, vector<1024x128xf32>
    %c0_1 = arith.constant 0 : index
    %c0_2 = arith.constant 0 : index
    %1 = vector.load %arg4[%c0_1, %c0_2] : memref<128x128xf32, #tpu.memory_space<vmem>>, vector<128x128xf32>
    %cst = arith.constant dense<0.000000e+00> : vector<1024x128xf32>
    %2 = tpu.matmul %0, %1, %cst {dimension_numbers = #tpu.dot_dimension_numbers<[1], [0], [0], [1], [0, 0, 1, 1], [], []>} : vector<1024x128xf32>, vector<128x128xf32>, vector<1024x128xf32> -> vector<1024x128xf32>
    %c0_3 = arith.constant 0 : index
    %c0_4 = arith.constant 0 : index
    %3 = vector.load %arg1[%c0_3, %c0_4] : memref<8x128xf32, #tpu.memory_space<vmem>>, vector<8x128xf32>
    %c0_5 = arith.constant 0 : index
    %c0_6 = arith.constant 0 : index
    %4 = vector.load %arg5[%c0_5, %c0_6] : memref<128x128xf32, #tpu.memory_space<vmem>>, vector<128x128xf32>
    %cst_7 = arith.constant dense<0.000000e+00> : vector<8x128xf32>
    %5 = tpu.matmul %3, %4, %cst_7 {dimension_numbers = #tpu.dot_dimension_numbers<[1], [0], [0], [1], [0, 0, 1, 1], [], []>} : vector<8x128xf32>, vector<128x128xf32>, vector<8x128xf32> -> vector<8x128xf32>
    %6 = vector.shape_cast %2 : vector<1024x128xf32> to vector<8x128x128xf32>
    %7 = vector.shape_cast %5 : vector<8x128xf32> to vector<8x1x128xf32>
    %8 = vector.broadcast %7 : vector<8x1x128xf32> to vector<8x128x128xf32>
    %9 = arith.addf %6, %8 : vector<8x128x128xf32>
    %10 = math.tanh %9 : vector<8x128x128xf32>
    %c0_8 = arith.constant 0 : index
    %c0_9 = arith.constant 0 : index
    %11 = vector.load %arg6[%c0_8, %c0_9] : memref<1x128xf32, #tpu.memory_space<vmem>>, vector<1x128xf32>
    %12 = vector.shape_cast %11 : vector<1x128xf32> to vector<1x1x128xf32>
    %13 = vector.broadcast %12 : vector<1x1x128xf32> to vector<8x128x128xf32>
    %14 = arith.mulf %10, %13 : vector<8x128x128xf32>
    %cst_10 = arith.constant dense<0.000000e+00> : vector<8x128xf32>
    %15 = vector.multi_reduction <add>, %14, %cst_10 [2] : vector<8x128x128xf32> to vector<8x128xf32>
    %c0_11 = arith.constant 0 : index
    %c0_12 = arith.constant 0 : index
    %16 = vector.load %arg3[%c0_11, %c0_12] : memref<8x128xf32, #tpu.memory_space<vmem>>, vector<8x128xf32>
    %cst_13 = arith.constant 0.000000e+00 : f32
    %17 = vector.broadcast %cst_13 : f32 to vector<8x128xf32>
    %18 = arith.cmpf ogt, %16, %17 : vector<8x128xf32>
    %cst_14 = arith.constant -103.278931 : f32
    %19 = vector.broadcast %cst_14 : f32 to vector<8x128xf32>
    %20 = arith.addf %15, %19 : vector<8x128xf32>
    %21 = arith.select %18, %15, %20 : vector<8x128xi1>, vector<8x128xf32>
    %22 = tpu.iota {dimensions = array<i32: 1>} : vector<8x128xi32>
    %c8_i32 = arith.constant 8 : i32
    %23 = vector.broadcast %c8_i32 : i32 to vector<8x128xi32>
    %24 = arith.cmpi slt, %22, %23 : vector<8x128xi32>
    %cst_15 = arith.constant -1.000000e+30 : f32
    %25 = vector.broadcast %cst_15 : f32 to vector<8x128xf32>
    %26 = arith.select %24, %21, %25 : vector<8x128xi1>, vector<8x128xf32>
    %cst_16 = arith.constant dense<0xFF800000> : vector<8xf32>
    %27 = vector.multi_reduction <maximumf>, %26, %cst_16 [1] : vector<8x128xf32> to vector<8xf32>
    %28 = vector.shape_cast %27 : vector<8xf32> to vector<8x1xf32>
    %29 = vector.broadcast %28 : vector<8x1xf32> to vector<8x128xf32>
    %30 = arith.subf %26, %29 : vector<8x128xf32>
    %31 = math.exp %30 : vector<8x128xf32>
    %cst_17 = arith.constant dense<0.000000e+00> : vector<8xf32>
    %32 = vector.multi_reduction <add>, %31, %cst_17 [1] : vector<8x128xf32> to vector<8xf32>
    %33 = vector.shape_cast %32 : vector<8xf32> to vector<8x1xf32>
    %34 = math.log %33 : vector<8x1xf32>
    %35 = vector.broadcast %28 : vector<8x1xf32> to vector<8x128xf32>
    %36 = arith.subf %26, %35 : vector<8x128xf32>
    %37 = vector.broadcast %34 : vector<8x1xf32> to vector<8x128xf32>
    %38 = arith.subf %36, %37 : vector<8x128xf32>
    %c0_18 = arith.constant 0 : index
    %c0_19 = arith.constant 0 : index
    %39 = vector.load %arg7[%c0_18, %c0_19] : memref<8x128xf32, #tpu.memory_space<vmem>>, vector<8x128xf32>
    tpu.vector_store %arg7[%c0_18, %c0_19], %38 {strides = array<i32>} : memref<8x128xf32, #tpu.memory_space<vmem>>, vector<8x128xf32>,
    return
  }
  func.func @transform_0(%arg0: i32) -> (i32, i32) {
    %c0_i32 = arith.constant 0 : i32
    %c0_i32_0 = arith.constant 0 : i32
    return %arg0, %c0_i32 : i32, i32
  }
  func.func @transform_1(%arg0: i32) -> (i32, i32) {
    %c0_i32 = arith.constant 0 : i32
    %c0_i32_0 = arith.constant 0 : i32
    return %arg0, %c0_i32 : i32, i32
  }
  func.func @transform_2(%arg0: i32) -> (i32, i32) {
    %c0_i32 = arith.constant 0 : i32
    %c0_i32_0 = arith.constant 0 : i32
    return %arg0, %c0_i32 : i32, i32
  }
  func.func @transform_3(%arg0: i32) -> (i32, i32) {
    %c0_i32 = arith.constant 0 : i32
    %c0_i32_0 = arith.constant 0 : i32
    %c0_i32_1 = arith.constant 0 : i32
    return %c0_i32, %c0_i32_0 : i32, i32
  }
  func.func @transform_4(%arg0: i32) -> (i32, i32) {
    %c0_i32 = arith.constant 0 : i32
    %c0_i32_0 = arith.constant 0 : i32
    %c0_i32_1 = arith.constant 0 : i32
    return %c0_i32, %c0_i32_0 : i32, i32
  }
  func.func @transform_5(%arg0: i32) -> (i32, i32) {
    %c0_i32 = arith.constant 0 : i32
    %c0_i32_0 = arith.constant 0 : i32
    %c0_i32_1 = arith.constant 0 : i32
    return %c0_i32, %c0_i32_0 : i32, i32
  }
  func.func @transform_6(%arg0: i32) -> (i32, i32) {
    %c0_i32 = arith.constant 0 : i32
    %c0_i32_0 = arith.constant 0 : i32
    return %arg0, %c0_i32 : i32, i32
  }
}

</mosaic_0001>

<llo_original>
// kernel: tpu_custom_call.1
$region0: #{tpu_custom_call.1}
  #allocation0 [shape = 'u32[]', space=smem, size = 0x4, offset = 0x4, fixed_abs, tag = 'smem constant byte address 0x4 - core index']
  #allocation1 [shape = 'u32[144,128]{1,0:T(1,128)}', space=vmem, size = 0x12000, scoped, tag = 'internal scratch']
  %s0 = inlined_call_operand.hbm [shape: f32[8,128], index: 0, kind: input, shape index: {}]
  %s1 = inlined_call_operand.hbm [shape: f32[1024,128], index: 1, kind: input, shape index: {}]
  %s2 = inlined_call_operand.hbm [shape: f32[8,128], index: 2, kind: input, shape index: {}]
  %s3 = inlined_call_operand.hbm [shape: f32[128,128], index: 3, kind: input, shape index: {}]
  %s4 = inlined_call_operand.hbm [shape: f32[128,128], index: 4, kind: input, shape index: {}]
  %s5 = inlined_call_operand.vmem [shape: f32[1,128], index: 5, kind: input, shape index: {}]
  %s6 = inlined_call_operand.hbm [shape: f32[8,128], index: 6, kind: output, shape index: {}]
  %s7 = sld [smem:[#allocation0]]
  $region54: #{tpu_custom_call.1} parent=0
    _
  %s9 = ssub.s32 1, %s7
  %s10 = scalar_select 0, %s9, %s7
  $region1: #{tpu_custom_call.1} parent=0
    #allocation2 [shape = 'u8[4096]{0}', space=vmem, size = 0x1000, scoped, tag = 'input window, operand 0, single buffered']
    #allocation3 [shape = 's32[1]{0}', space=sflag, size = 0x4, scoped, tag = 'scoped memory for tpu_custom_call.1']
    #allocation4 [shape = 's32[1]{0}', space=sflag, size = 0x4, scoped, tag = 'scoped memory for tpu_custom_call.1']
    #allocation5 [shape = 'u8[524288]{0}', space=vmem, size = 0x80000, scoped, tag = 'input window, operand 1, single buffered']
    #allocation6 [shape = 's32[1]{0}', space=sflag, size = 0x4, scoped, tag = 'scoped memory for tpu_custom_call.1']
    #allocation7 [shape = 'u8[4096]{0}', space=vmem, size = 0x1000, scoped, tag = 'input window, operand 2, single buffered']
    #allocation8 [shape = 'u8[65536]{0}', space=vmem, size = 0x10000, scoped, tag = 'input window, operand 3, single buffered']
    #allocation9 [shape = 's32[1]{0}', space=sflag, size = 0x4, scoped, tag = 'scoped memory for tpu_custom_call.1']
    #allocation10 [shape = 'u8[65536]{0}', space=vmem, size = 0x10000, scoped, tag = 'input window, operand 4, single buffered']
    #allocation11 [shape = 'u8[4096]{0}', space=vmem, size = 0x1000, scoped, tag = 'output window, operand 0, single buffered']
    %11 = vsyncpa [#allocation3], 0
    %12 = vsyncpa [#allocation6], 0
    %13 = vsyncpa [#allocation9], 0
    %14 = vsyncpa [#allocation4], 0
    // Predicated region
    $region2: #{tpu_custom_call.1} parent=1 // pred_check
      _
    $region3: #{tpu_custom_call.1} parent=1 // pred_check_branch
      %16 = sbr.rel (0) target = $region5
    $region4: #{tpu_custom_call.1} parent=1 // pred_region
      %s18 = ssub.s32 128, 128
      %19 = vsyncadd [#allocation3], %s18
      %s21 = sshll.u32 [#allocation2], 4
      %s22 = int_to_ptr.vmem [resolvable:$true] %s21
      %24 = dma.hbm_to_vmem [thread:$0]  %s0, 128, %s22, [#allocation3]
    $region5: #{tpu_custom_call.1} parent=1 // pred_fallthru
      _
    // Predicated region
    $region6: #{tpu_custom_call.1} parent=1 // pred_check
      _
    $region7: #{tpu_custom_call.1} parent=1 // pred_check_branch
      %26 = sbr.rel (0) target = $region9
    $region8: #{tpu_custom_call.1} parent=1 // pred_region
      %s28 = ssub.s32 16384, 16384
      %29 = vsyncadd [#allocation6], %s28
      %s30 = sshll.u32 [#allocation5], 4
      %s31 = int_to_ptr.vmem [resolvable:$true] %s30
      %36 = dma.hbm_to_vmem [thread:$0]  %s1, 16384, %s31, [#allocation6], 128, 128, 8
    $region9: #{tpu_custom_call.1} parent=1 // pred_fallthru
      _
    // Predicated region
    $region10: #{tpu_custom_call.1} parent=1 // pred_check
      _
    $region11: #{tpu_custom_call.1} parent=1 // pred_check_branch
      %38 = sbr.rel (0) target = $region13
    $region12: #{tpu_custom_call.1} parent=1 // pred_region
      %s40 = ssub.s32 128, 128
      %41 = vsyncadd [#allocation6], %s40
      %s43 = sshll.u32 [#allocation7], 4
      %s44 = int_to_ptr.vmem [resolvable:$true] %s43
      %46 = dma.hbm_to_vmem [thread:$0]  %s2, 128, %s44, [#allocation6]
    $region13: #{tpu_custom_call.1} parent=1 // pred_fallthru
      _
    // Predicated region
    $region14: #{tpu_custom_call.1} parent=1 // pred_check
      _
    $region15: #{tpu_custom_call.1} parent=1 // pred_check_branch
      %48 = sbr.rel (0) target = $region17
    $region16: #{tpu_custom_call.1} parent=1 // pred_region
      %s50 = ssub.s32 2048, 2048
      %51 = vsyncadd [#allocation9], %s50
      %s52 = sshll.u32 [#allocation8], 4
      %s53 = int_to_ptr.vmem [resolvable:$true] %s52
      %58 = dma.hbm_to_vmem [thread:$0]  %s3, 2048, %s53, [#allocation9], 128, 128, 8
    $region17: #{tpu_custom_call.1} parent=1 // pred_fallthru
      _
    // Predicated region
    $region18: #{tpu_custom_call.1} parent=1 // pred_check
      _
    $region19: #{tpu_custom_call.1} parent=1 // pred_check_branch
      %60 = sbr.rel (0) target = $region21
    $region20: #{tpu_custom_call.1} parent=1 // pred_region
      %s62 = ssub.s32 2048, 2048
      %63 = vsyncadd [#allocation9], %s62
      %s64 = sshll.u32 [#allocation10], 4
      %s65 = int_to_ptr.vmem [resolvable:$true] %s64
      %70 = dma.hbm_to_vmem [thread:$0]  %s4, 2048, %s65, [#allocation9], 128, 128, 8
    $region21: #{tpu_custom_call.1} parent=1 // pred_fallthru
      _
    // Predicated region
    $region22: #{tpu_custom_call.1} parent=1 // pred_check
      _
    $region23: #{tpu_custom_call.1} parent=1 // pred_check_branch
      %72 = sbr.rel (0) target = $region25
    $region24: #{tpu_custom_call.1} parent=1 // pred_region
      _
    $region25: #{tpu_custom_call.1} parent=1 // pred_fallthru
      _
    // Predicated region
    $region26: #{tpu_custom_call.1} parent=1 // pred_check
      _
    $region27: #{tpu_custom_call.1} parent=1 // pred_check_branch
      %74 = sbr.rel (0) target = $region29
    $region28: #{tpu_custom_call.1} parent=1 // pred_region
      %75 = dma.done [#allocation3], 128
    $region29: #{tpu_custom_call.1} parent=1 // pred_fallthru
      _
    // Predicated region
    $region30: #{tpu_custom_call.1} parent=1 // pred_check
      _
    $region31: #{tpu_custom_call.1} parent=1 // pred_check_branch
      %77 = sbr.rel (0) target = $region33
    $region32: #{tpu_custom_call.1} parent=1 // pred_region
      %78 = dma.done [#allocation6], 16384
    $region33: #{tpu_custom_call.1} parent=1 // pred_fallthru
      _
    // Predicated region
    $region34: #{tpu_custom_call.1} parent=1 // pred_check
      _
    $region35: #{tpu_custom_call.1} parent=1 // pred_check_branch
      %80 = sbr.rel (0) target = $region37
    $region36: #{tpu_custom_call.1} parent=1 // pred_region
      %81 = dma.done [#allocation6], 128
    $region37: #{tpu_custom_call.1} parent=1 // pred_fallthru
      _
    // Predicated region
    $region38: #{tpu_custom_call.1} parent=1 // pred_check
      _
    $region39: #{tpu_custom_call.1} parent=1 // pred_check_branch
      %83 = sbr.rel (0) target = $region41
    $region40: #{tpu_custom_call.1} parent=1 // pred_region
      %84 = dma.done [#allocation9], 2048
    $region41: #{tpu_custom_call.1} parent=1 // pred_fallthru
      _
    // Predicated region
    $region42: #{tpu_custom_call.1} parent=1 // pred_check
      _
    $region43: #{tpu_custom_call.1} parent=1 // pred_check_branch
      %86 = sbr.rel (0) target = $region45
    $region44: #{tpu_custom_call.1} parent=1 // pred_region
      %87 = dma.done [#allocation9], 2048
    $region45: #{tpu_custom_call.1} parent=1 // pred_fallthru
      _
    %v88 = vld [vmem:[#allocation5] sm:$0xff]
    %v89 = vld [vmem:[#allocation5 + $0x8] sm:$0xff]
    %v90 = vld [vmem:[#allocation5 + $0x10] sm:$0xff]
    %v91 = vld [vmem:[#allocation5 + $0x18] sm:$0xff]
    %v92 = vld [vmem:[#allocation5 + $0x20] sm:$0xff]
    %v93 = vld [vmem:[#allocation5 + $0x28] sm:$0xff]
    %v94 = vld [vmem:[#allocation5 + $0x30] sm:$0xff]
    %v95 = vld [vmem:[#allocation5 + $0x38] sm:$0xff]
    %v96 = vld [vmem:[#allocation5 + $0x40] sm:$0xff]
    %v97 = vld [vmem:[#allocation5 + $0x48] sm:$0xff]
    %v98 = vld [vmem:[#allocation5 + $0x50] sm:$0xff]
    %v99 = vld [vmem:[#allocation5 + $0x58] sm:$0xff]
    %v100 = vld [vmem:[#allocation5 + $0x60] sm:$0xff]
    %v101 = vld [vmem:[#allocation5 + $0x68] sm:$0xff]
    %v102 = vld [vmem:[#allocation5 + $0x70] sm:$0xff]
    %v103 = vld [vmem:[#allocation5 + $0x78] sm:$0xff]
    %v104 = vld [vmem:[#allocation5 + $0x80] sm:$0xff]
    %v105 = vld [vmem:[#allocation5 + $0x88] sm:$0xff]
    %v106 = vld [vmem:[#allocation5 + $0x90] sm:$0xff]
    %v107 = vld [vmem:[#allocation5 + $0x98] sm:$0xff]
    %v108 = vld [vmem:[#allocation5 + $0xa0] sm:$0xff]
    %v109 = vld [vmem:[#allocation5 + $0xa8] sm:$0xff]
    %v110 = vld [vmem:[#allocation5 + $0xb0] sm:$0xff]
    %v111 = vld [vmem:[#allocation5 + $0xb8] sm:$0xff]
    %v112 = vld [vmem:[#allocation5 + $0xc0] sm:$0xff]
    %v113 = vld [vmem:[#allocation5 + $0xc8] sm:$0xff]
    %v114 = vld [vmem:[#allocation5 + $0xd0] sm:$0xff]
    %v115 = vld [vmem:[#allocation5 + $0xd8] sm:$0xff]
    %v116 = vld [vmem:[#allocation5 + $0xe0] sm:$0xff]
    %v117 = vld [vmem:[#allocation5 + $0xe8] sm:$0xff]
    %v118 = vld [vmem:[#allocation5 + $0xf0] sm:$0xff]
    %v119 = vld [vmem:[#allocation5 + $0xf8] sm:$0xff]
    %v120 = vld [vmem:[#allocation5 + $0x100] sm:$0xff]
    %v121 = vld [vmem:[#allocation5 + $0x108] sm:$0xff]
    %v122 = vld [vmem:[#allocation5 + $0x110] sm:$0xff]
    %v123 = vld [vmem:[#allocation5 + $0x118] sm:$0xff]
    %v124 = vld [vmem:[#allocation5 + $0x120] sm:$0xff]
    %v125 = vld [vmem:[#allocation5 + $0x128] sm:$0xff]
    %v126 = vld [vmem:[#allocation5 + $0x130] sm:$0xff]
    %v127 = vld [vmem:[#allocation5 + $0x138] sm:$0xff]
    %v128 = vld [vmem:[#allocation5 + $0x140] sm:$0xff]
    %v129 = vld [vmem:[#allocation5 + $0x148] sm:$0xff]
    %v130 = vld [vmem:[#allocation5 + $0x150] sm:$0xff]
    %v131 = vld [vmem:[#allocation5 + $0x158] sm:$0xff]
    %v132 = vld [vmem:[#allocation5 + $0x160] sm:$0xff]
    %v133 = vld [vmem:[#allocation5 + $0x168] sm:$0xff]
    %v134 = vld [vmem:[#allocation5 + $0x170] sm:$0xff]
    %v135 = vld [vmem:[#allocation5 + $0x178] sm:$0xff]
    %v136 = vld [vmem:[#allocation5 + $0x180] sm:$0xff]
    %v137 = vld [vmem:[#allocation5 + $0x188] sm:$0xff]
    %v138 = vld [vmem:[#allocation5 + $0x190] sm:$0xff]
    %v139 = vld [vmem:[#allocation5 + $0x198] sm:$0xff]
    %v140 = vld [vmem:[#allocation5 + $0x1a0] sm:$0xff]
    %v141 = vld [vmem:[#allocation5 + $0x1a8] sm:$0xff]
    %v142 = vld [vmem:[#allocation5 + $0x1b0] sm:$0xff]
    %v143 = vld [vmem:[#allocation5 + $0x1b8] sm:$0xff]
    %v144 = vld [vmem:[#allocation5 + $0x1c0] sm:$0xff]
    %v145 = vld [vmem:[#allocation5 + $0x1c8] sm:$0xff]
    %v146 = vld [vmem:[#allocation5 + $0x1d0] sm:$0xff]
    %v147 = vld [vmem:[#allocation5 + $0x1d8] sm:$0xff]
    %v148 = vld [vmem:[#allocation5 + $0x1e0] sm:$0xff]
    %v149 = vld [vmem:[#allocation5 + $0x1e8] sm:$0xff]
    %v150 = vld [vmem:[#allocation5 + $0x1f0] sm:$0xff]
    %v151 = vld [vmem:[#allocation5 + $0x1f8] sm:$0xff]
    %v152 = vld [vmem:[#allocation5 + $0x200] sm:$0xff]
    %v153 = vld [vmem:[#allocation5 + $0x208] sm:$0xff]
    %v154 = vld [vmem:[#allocation5 + $0x210] sm:$0xff]
    %v155 = vld [vmem:[#allocation5 + $0x218] sm:$0xff]
    %v156 = vld [vmem:[#allocation5 + $0x220] sm:$0xff]
    %v157 = vld [vmem:[#allocation5 + $0x228] sm:$0xff]
    %v158 = vld [vmem:[#allocation5 + $0x230] sm:$0xff]
    %v159 = vld [vmem:[#allocation5 + $0x238] sm:$0xff]
    %v160 = vld [vmem:[#allocation5 + $0x240] sm:$0xff]
    %v161 = vld [vmem:[#allocation5 + $0x248] sm:$0xff]
    %v162 = vld [vmem:[#allocation5 + $0x250] sm:$0xff]
    %v163 = vld [vmem:[#allocation5 + $0x258] sm:$0xff]
    %v164 = vld [vmem:[#allocation5 + $0x260] sm:$0xff]
    %v165 = vld [vmem:[#allocation5 + $0x268] sm:$0xff]
    %v166 = vld [vmem:[#allocation5 + $0x270] sm:$0xff]
    %v167 = vld [vmem:[#allocation5 + $0x278] sm:$0xff]
    %v168 = vld [vmem:[#allocation5 + $0x280] sm:$0xff]
    %v169 = vld [vmem:[#allocation5 + $0x288] sm:$0xff]
    %v170 = vld [vmem:[#allocation5 + $0x290] sm:$0xff]
    %v171 = vld [vmem:[#allocation5 + $0x298] sm:$0xff]
    %v172 = vld [vmem:[#allocation5 + $0x2a0] sm:$0xff]
    %v173 = vld [vmem:[#allocation5 + $0x2a8] sm:$0xff]
    %v174 = vld [vmem:[#allocation5 + $0x2b0] sm:$0xff]
    %v175 = vld [vmem:[#allocation5 + $0x2b8] sm:$0xff]
    %v176 = vld [vmem:[#allocation5 + $0x2c0] sm:$0xff]
    %v177 = vld [vmem:[#allocation5 + $0x2c8] sm:$0xff]
    %v178 = vld [vmem:[#allocation5 + $0x2d0] sm:$0xff]
    %v179 = vld [vmem:[#allocation5 + $0x2d8] sm:$0xff]
    %v180 = vld [vmem:[#allocation5 + $0x2e0] sm:$0xff]
    %v181 = vld [vmem:[#allocation5 + $0x2e8] sm:$0xff]
    %v182 = vld [vmem:[#allocation5 + $0x2f0] sm:$0xff]
    %v183 = vld [vmem:[#allocation5 + $0x2f8] sm:$0xff]
    %v184 = vld [vmem:[#allocation5 + $0x300] sm:$0xff]
    %v185 = vld [vmem:[#allocation5 + $0x308] sm:$0xff]
    %v186 = vld [vmem:[#allocation5 + $0x310] sm:$0xff]
    %v187 = vld [vmem:[#allocation5 + $0x318] sm:$0xff]
    %v188 = vld [vmem:[#allocation5 + $0x320] sm:$0xff]
    %v189 = vld [vmem:[#allocation5 + $0x328] sm:$0xff]
    %v190 = vld [vmem:[#allocation5 + $0x330] sm:$0xff]
    %v191 = vld [vmem:[#allocation5 + $0x338] sm:$0xff]
    %v192 = vld [vmem:[#allocation5 + $0x340] sm:$0xff]
    %v193 = vld [vmem:[#allocation5 + $0x348] sm:$0xff]
    %v194 = vld [vmem:[#allocation5 + $0x350] sm:$0xff]
    %v195 = vld [vmem:[#allocation5 + $0x358] sm:$0xff]
    %v196 = vld [vmem:[#allocation5 + $0x360] sm:$0xff]
    %v197 = vld [vmem:[#allocation5 + $0x368] sm:$0xff]
    %v198 = vld [vmem:[#allocation5 + $0x370] sm:$0xff]
    %v199 = vld [vmem:[#allocation5 + $0x378] sm:$0xff]
    %v200 = vld [vmem:[#allocation5 + $0x380] sm:$0xff]
    %v201 = vld [vmem:[#allocation5 + $0x388] sm:$0xff]
    %v202 = vld [vmem:[#allocation5 + $0x390] sm:$0xff]
    %v203 = vld [vmem:[#allocation5 + $0x398] sm:$0xff]
    %v204 = vld [vmem:[#allocation5 + $0x3a0] sm:$0xff]
    %v205 = vld [vmem:[#allocation5 + $0x3a8] sm:$0xff]
    %v206 = vld [vmem:[#allocation5 + $0x3b0] sm:$0xff]
    %v207 = vld [vmem:[#allocation5 + $0x3b8] sm:$0xff]
    %v208 = vld [vmem:[#allocation5 + $0x3c0] sm:$0xff]
    %v209 = vld [vmem:[#allocation5 + $0x3c8] sm:$0xff]
    %v210 = vld [vmem:[#allocation5 + $0x3d0] sm:$0xff]
    %v211 = vld [vmem:[#allocation5 + $0x3d8] sm:$0xff]
    %v212 = vld [vmem:[#allocation5 + $0x3e0] sm:$0xff]
    %v213 = vld [vmem:[#allocation5 + $0x3e8] sm:$0xff]
    %v214 = vld [vmem:[#allocation5 + $0x3f0] sm:$0xff]
    %v215 = vld [vmem:[#allocation5 + $0x3f8] sm:$0xff]
    %v216 = vld [vmem:[#allocation8] sm:$0xff]
    %v217 = vld [vmem:[#allocation8 + $0x8] sm:$0xff]
    %v218 = vld [vmem:[#allocation8 + $0x10] sm:$0xff]
    %v219 = vld [vmem:[#allocation8 + $0x18] sm:$0xff]
    %v220 = vld [vmem:[#allocation8 + $0x20] sm:$0xff]
    %v221 = vld [vmem:[#allocation8 + $0x28] sm:$0xff]
    %v222 = vld [vmem:[#allocation8 + $0x30] sm:$0xff]
    %v223 = vld [vmem:[#allocation8 + $0x38] sm:$0xff]
    %v224 = vld [vmem:[#allocation8 + $0x40] sm:$0xff]
    %v225 = vld [vmem:[#allocation8 + $0x48] sm:$0xff]
    %v226 = vld [vmem:[#allocation8 + $0x50] sm:$0xff]
    %v227 = vld [vmem:[#allocation8 + $0x58] sm:$0xff]
    %v228 = vld [vmem:[#allocation8 + $0x60] sm:$0xff]
    %v229 = vld [vmem:[#allocation8 + $0x68] sm:$0xff]
    %v230 = vld [vmem:[#allocation8 + $0x70] sm:$0xff]
    %v231 = vld [vmem:[#allocation8 + $0x78] sm:$0xff]
    %232 = vmatprep.subr.mxu0 0.0
    %233 = vmatpush1.msra.mxu0 %v216
    %234 = vmatprep.subr.mxu0 0.0
    %235 = vmatpush1.msra.mxu0 %v217
    %236 = vmatprep.subr.mxu0 0.0
    %237 = vmatpush1.msra.mxu0 %v218
    %238 = vmatprep.subr.mxu0 0.0
    %239 = vmatpush1.msra.mxu0 %v219
    %240 = vmatprep.subr.mxu0 0.0
    %241 = vmatpush1.msra.mxu0 %v220
    %242 = vmatprep.subr.mxu0 0.0
    %243 = vmatpush1.msra.mxu0 %v221
    %244 = vmatprep.subr.mxu0 0.0
    %245 = vmatpush1.msra.mxu0 %v222
    %246 = vmatprep.subr.mxu0 0.0
    %247 = vmatpush1.msra.mxu0 %v223
    %248 = vmatprep.subr.mxu0 0.0
    %249 = vmatpush1.msra.mxu0 %v224
    %250 = vmatprep.subr.mxu0 0.0
    %251 = vmatpush1.msra.mxu0 %v225
    %252 = vmatprep.subr.mxu0 0.0
    %253 = vmatpush1.msra.mxu0 %v226
    %254 = vmatprep.subr.mxu0 0.0
    %255 = vmatpush1.msra.mxu0 %v227
    %256 = vmatprep.subr.mxu0 0.0
    %257 = vmatpush1.msra.mxu0 %v228
    %258 = vmatprep.subr.mxu0 0.0
    %259 = vmatpush1.msra.mxu0 %v229
    %260 = vmatprep.subr.mxu0 0.0
    %261 = vmatpush1.msra.mxu0 %v230
    %262 = vmatprep.subr.mxu0 0.0
    %263 = vmatpush1.msra.mxu0 %v231
    %264 = vmatprep.subr.mxu0 0.0
    %265 = vmatpush1.msra.mxu0 0.0
    %266 = vmatprep.subr.mxu0 0.0
    %267 = vmatpush1.msra.mxu0 0.0
    %268 = vmatprep.subr.mxu0 0.0
    %269 = vmatpush1.msra.mxu0 0.0
    %270 = vmatprep.subr.mxu0 0.0
    %271 = vmatpush1.msra.mxu0 0.0
    %272 = vmatprep.subr.mxu0 0.0
    %273 = vmatpush1.msra.mxu0 0.0
    %274 = vmatprep.subr.mxu0 0.0
    %275 = vmatpush1.msra.mxu0 0.0
    %276 = vmatprep.subr.mxu0 0.0
    %277 = vmatpush1.msra.mxu0 0.0
    %278 = vmatprep.subr.mxu0 0.0
    %279 = vmatpush1.msra.mxu0 0.0
    %280 = vmatprep.subr.mxu0 0.0
    %281 = vmatpush1.msra.mxu0 0.0
    %282 = vmatprep.subr.mxu0 0.0
    %283 = vmatpush1.msra.mxu0 0.0
    %284 = vmatprep.subr.mxu0 0.0
    %285 = vmatpush1.msra.mxu0 0.0
    %286 = vmatprep.subr.mxu0 0.0
    %287 = vmatpush1.msra.mxu0 0.0
    %288 = vmatprep.subr.mxu0 0.0
    %289 = vmatpush1.msra.mxu0 0.0
    %290 = vmatprep.subr.mxu0 0.0
    %291 = vmatpush1.msra.mxu0 0.0
    %292 = vmatprep.subr.mxu0 0.0
    %293 = vmatpush1.msra.mxu0 0.0
    %294 = vmatprep.subr.mxu0 0.0
    %295 = vmatpush1.msra.mxu0 0.0
    %296 = vmatprep.mubr.f32.mxu0 0.0
    %297 = vmatmul.mubr.f32.gmra.mrb[0].mxu0 %v88
    %v298 = vpop.f32.mrb[0].mxu0
    %v299 = vadd.f32 0.0, %v298
    %v300 = vpop.f32.mrb[0].mxu0
    %301 = vmatprep.mubr.f32.mxu0 0.0
    %302 = vmatmul.mubr.f32.gmra.mrb[0].mxu0 %v89
    %v303 = vpop.f32.mrb[0].mxu0
    %v304 = vadd.f32 0.0, %v303
    %v305 = vpop.f32.mrb[0].mxu0
    %306 = vmatprep.mubr.f32.mxu0 0.0
    %307 = vmatmul.mubr.f32.gmra.mrb[0].mxu0 %v90
    %v308 = vpop.f32.mrb[0].mxu0
    %v309 = vadd.f32 0.0, %v308
    %v310 = vpop.f32.mrb[0].mxu0
    %311 = vmatprep.mubr.f32.mxu0 0.0
    %312 = vmatmul.mubr.f32.gmra.mrb[0].mxu0 %v91
    %v313 = vpop.f32.mrb[0].mxu0
    %v314 = vadd.f32 0.0, %v313
    %v315 = vpop.f32.mrb[0].mxu0
    %316 = vmatprep.mubr.f32.mxu0 0.0
    %317 = vmatmul.mubr.f32.gmra.mrb[0].mxu0 %v92
    %v318 = vpop.f32.mrb[0].mxu0
    %v319 = vadd.f32 0.0, %v318
    %v320 = vpop.f32.mrb[0].mxu0
    %321 = vmatprep.mubr.f32.mxu0 0.0
    %322 = vmatmul.mubr.f32.gmra.mrb[0].mxu0 %v93
    %v323 = vpop.f32.mrb[0].mxu0
    %v324 = vadd.f32 0.0, %v323
    %v325 = vpop.f32.mrb[0].mxu0
    %326 = vmatprep.mubr.f32.mxu0 0.0
    %327 = vmatmul.mubr.f32.gmra.mrb[0].mxu0 %v94
    %v328 = vpop.f32.mrb[0].mxu0
    %v329 = vadd.f32 0.0, %v328
    %v330 = vpop.f32.mrb[0].mxu0
    %331 = vmatprep.mubr.f32.mxu0 0.0
    %332 = vmatmul.mubr.f32.gmra.mrb[0].mxu0 %v95
    %v333 = vpop.f32.mrb[0].mxu0
    %v334 = vadd.f32 0.0, %v333
    %v335 = vpop.f32.mrb[0].mxu0
    %336 = vmatprep.mubr.f32.mxu0 0.0
    %337 = vmatmul.mubr.f32.gmra.mrb[0].mxu0 %v96
    %v338 = vpop.f32.mrb[0].mxu0
    %v339 = vadd.f32 0.0, %v338
    %v340 = vpop.f32.mrb[0].mxu0
    %341 = vmatprep.mubr.f32.mxu0 0.0
    %342 = vmatmul.mubr.f32.gmra.mrb[0].mxu0 %v97
    %v343 = vpop.f32.mrb[0].mxu0
    %v344 = vadd.f32 0.0, %v343
    %v345 = vpop.f32.mrb[0].mxu0
    %346 = vmatprep.mubr.f32.mxu0 0.0
    %347 = vmatmul.mubr.f32.gmra.mrb[0].mxu0 %v98
    %v348 = vpop.f32.mrb[0].mxu0
    %v349 = vadd.f32 0.0, %v348
    %v350 = vpop.f32.mrb[0].mxu0
    %351 = vmatprep.mubr.f32.mxu0 0.0
    %352 = vmatmul.mubr.f32.gmra.mrb[0].mxu0 %v99
    %v353 = vpop.f32.mrb[0].mxu0
    %v354 = vadd.f32 0.0, %v353
    %v355 = vpop.f32.mrb[0].mxu0
    %356 = vmatprep.mubr.f32.mxu0 0.0
    %357 = vmatmul.mubr.f32.gmra.mrb[0].mxu0 %v100
    %v358 = vpop.f32.mrb[0].mxu0
    %v359 = vadd.f32 0.0, %v358
    %v360 = vpop.f32.mrb[0].mxu0
    %361 = vmatprep.mubr.f32.mxu0 0.0
    %362 = vmatmul.mubr.f32.gmra.mrb[0].mxu0 %v101
    %v363 = vpop.f32.mrb[0].mxu0
    %v364 = vadd.f32 0.0, %v363
    %v365 = vpop.f32.mrb[0].mxu0
    %366 = vmatprep.mubr.f32.mxu0 0.0
    %367 = vmatmul.mubr.f32.gmra.mrb[0].mxu0 %v102
    %v368 = vpop.f32.mrb[0].mxu0
    %v369 = vadd.f32 0.0, %v368
    %v370 = vpop.f32.mrb[0].mxu0
    %371 = vmatprep.mubr.f32.mxu0 0.0
    %372 = vmatmul.mubr.f32.gmra.mrb[0].mxu0 %v103
    %v373 = vpop.f32.mrb[0].mxu0
    %v374 = vadd.f32 0.0, %v373
    %v375 = vpop.f32.mrb[0].mxu0
    %376 = vmatprep.mubr.f32.mxu0 0.0
    %377 = vmatmul.mubr.f32.gmra.mrb[0].mxu0 %v104
    %v378 = vpop.f32.mrb[0].mxu0
    %v379 = vadd.f32 0.0, %v378
    %v380 = vpop.f32.mrb[0].mxu0
    %381 = vmatprep.mubr.f32.mxu0 0.0
    %382 = vmatmul.mubr.f32.gmra.mrb[0].mxu0 %v105
    %v383 = vpop.f32.mrb[0].mxu0
    %v384 = vadd.f32 0.0, %v383
    %v385 = vpop.f32.mrb[0].mxu0
    %386 = vmatprep.mubr.f32.mxu0 0.0
    %387 = vmatmul.mubr.f32.gmra.mrb[0].mxu0 %v106
    %v388 = vpop.f32.mrb[0].mxu0
    %v389 = vadd.f32 0.0, %v388
    %v390 = vpop.f32.mrb[0].mxu0
    %391 = vmatprep.mubr.f32.mxu0 0.0
    %392 = vmatmul.mubr.f32.gmra.mrb[0].mxu0 %v107
    %v393 = vpop.f32.mrb[0].mxu0
    %v394 = vadd.f32 0.0, %v393
    %v395 = vpop.f32.mrb[0].mxu0
    %396 = vmatprep.mubr.f32.mxu0 0.0
    %397 = vmatmul.mubr.f32.gmra.mrb[0].mxu0 %v108
    %v398 = vpop.f32.mrb[0].mxu0
    %v399 = vadd.f32 0.0, %v398
    %v400 = vpop.f32.mrb[0].mxu0
    %401 = vmatprep.mubr.f32.mxu0 0.0
    %402 = vmatmul.mubr.f32.gmra.mrb[0].mxu0 %v109
    %v403 = vpop.f32.mrb[0].mxu0
    %v404 = vadd.f32 0.0, %v403
    %v405 = vpop.f32.mrb[0].mxu0
    %406 = vmatprep.mubr.f32.mxu0 0.0
    %407 = vmatmul.mubr.f32.gmra.mrb[0].mxu0 %v110
    %v408 = vpop.f32.mrb[0].mxu0
    %v409 = vadd.f32 0.0, %v408
    %v410 = vpop.f32.mrb[0].mxu0
    %411 = vmatprep.mubr.f32.mxu0 0.0
    %412 = vmatmul.mubr.f32.gmra.mrb[0].mxu0 %v111
    %v413 = vpop.f32.mrb[0].mxu0
    %v414 = vadd.f32 0.0, %v413
    %v415 = vpop.f32.mrb[0].mxu0
    %416 = vmatprep.mubr.f32.mxu0 0.0
    %417 = vmatmul.mubr.f32.gmra.mrb[0].mxu0 %v112
    %v418 = vpop.f32.mrb[0].mxu0
    %v419 = vadd.f32 0.0, %v418
    %v420 = vpop.f32.mrb[0].mxu0
    %421 = vmatprep.mubr.f32.mxu0 0.0
    %422 = vmatmul.mubr.f32.gmra.mrb[0].mxu0 %v113
    %v423 = vpop.f32.mrb[0].mxu0
    %v424 = vadd.f32 0.0, %v423
    %v425 = vpop.f32.mrb[0].mxu0
    %426 = vmatprep.mubr.f32.mxu0 0.0
    %427 = vmatmul.mubr.f32.gmra.mrb[0].mxu0 %v114
    %v428 = vpop.f32.mrb[0].mxu0
    %v429 = vadd.f32 0.0, %v428
    %v430 = vpop.f32.mrb[0].mxu0
    %431 = vmatprep.mubr.f32.mxu0 0.0
    %432 = vmatmul.mubr.f32.gmra.mrb[0].mxu0 %v115
    %v433 = vpop.f32.mrb[0].mxu0
    %v434 = vadd.f32 0.0, %v433
    %v435 = vpop.f32.mrb[0].mxu0
    %436 = vmatprep.mubr.f32.mxu0 0.0
    %437 = vmatmul.mubr.f32.gmra.mrb[0].mxu0 %v116
    %v438 = vpop.f32.mrb[0].mxu0
    %v439 = vadd.f32 0.0, %v438
    %v440 = vpop.f32.mrb[0].mxu0
    %441 = vmatprep.mubr.f32.mxu0 0.0
    %442 = vmatmul.mubr.f32.gmra.mrb[0].mxu0 %v117
    %v443 = vpop.f32.mrb[0].mxu0
    %v444 = vadd.f32 0.0, %v443
    %v445 = vpop.f32.mrb[0].mxu0
    %446 = vmatprep.mubr.f32.mxu0 0.0
    %447 = vmatmul.mubr.f32.gmra.mrb[0].mxu0 %v118
    %v448 = vpop.f32.mrb[0].mxu0
    %v449 = vadd.f32 0.0, %v448
    %v450 = vpop.f32.mrb[0].mxu0
    %451 = vmatprep.mubr.f32.mxu0 0.0
    %452 = vmatmul.mubr.f32.gmra.mrb[0].mxu0 %v119
    %v453 = vpop.f32.mrb[0].mxu0
    %v454 = vadd.f32 0.0, %v453
    %v455 = vpop.f32.mrb[0].mxu0
    %456 = vmatprep.mubr.f32.mxu0 0.0
    %457 = vmatmul.mubr.f32.gmra.mrb[0].mxu0 %v120
    %v458 = vpop.f32.mrb[0].mxu0
    %v459 = vadd.f32 0.0, %v458
    %v460 = vpop.f32.mrb[0].mxu0
    %461 = vmatprep.mubr.f32.mxu0 0.0
    %462 = vmatmul.mubr.f32.gmra.mrb[0].mxu0 %v121
    %v463 = vpop.f32.mrb[0].mxu0
    %v464 = vadd.f32 0.0, %v463
    %v465 = vpop.f32.mrb[0].mxu0
    %466 = vmatprep.mubr.f32.mxu0 0.0
    %467 = vmatmul.mubr.f32.gmra.mrb[0].mxu0 %v122
    %v468 = vpop.f32.mrb[0].mxu0
    %v469 = vadd.f32 0.0, %v468
    %v470 = vpop.f32.mrb[0].mxu0
    %471 = vmatprep.mubr.f32.mxu0 0.0
    %472 = vmatmul.mubr.f32.gmra.mrb[0].mxu0 %v123
    %v473 = vpop.f32.mrb[0].mxu0
    %v474 = vadd.f32 0.0, %v473
    %v475 = vpop.f32.mrb[0].mxu0
    %476 = vmatprep.mubr.f32.mxu0 0.0
    %477 = vmatmul.mubr.f32.gmra.mrb[0].mxu0 %v124
    %v478 = vpop.f32.mrb[0].mxu0
    %v479 = vadd.f32 0.0, %v478
    %v480 = vpop.f32.mrb[0].mxu0
    %481 = vmatprep.mubr.f32.mxu0 0.0
    %482 = vmatmul.mubr.f32.gmra.mrb[0].mxu0 %v125
    %v483 = vpop.f32.mrb[0].mxu0
    %v484 = vadd.f32 0.0, %v483
    %v485 = vpop.f32.mrb[0].mxu0
    %486 = vmatprep.mubr.f32.mxu0 0.0
    %487 = vmatmul.mubr.f32.gmra.mrb[0].mxu0 %v126
    %v488 = vpop.f32.mrb[0].mxu0
    %v489 = vadd.f32 0.0, %v488
    %v490 = vpop.f32.mrb[0].mxu0
    %491 = vmatprep.mubr.f32.mxu0 0.0
    %492 = vmatmul.mubr.f32.gmra.mrb[0].mxu0 %v127
    %v493 = vpop.f32.mrb[0].mxu0
    %v494 = vadd.f32 0.0, %v493
    %v495 = vpop.f32.mrb[0].mxu0
    %496 = vmatprep.mubr.f32.mxu0 0.0
    %497 = vmatmul.mubr.f32.gmra.mrb[0].mxu0 %v128
    %v498 = vpop.f32.mrb[0].mxu0
    %v499 = vadd.f32 0.0, %v498
    %v500 = vpop.f32.mrb[0].mxu0
    %501 = vmatprep.mubr.f32.mxu0 0.0
    %502 = vmatmul.mubr.f32.gmra.mrb[0].mxu0 %v129
    %v503 = vpop.f32.mrb[0].mxu0
    %v504 = vadd.f32 0.0, %v503
    %v505 = vpop.f32.mrb[0].mxu0
    %506 = vmatprep.mubr.f32.mxu0 0.0
    %507 = vmatmul.mubr.f32.gmra.mrb[0].mxu0 %v130
    %v508 = vpop.f32.mrb[0].mxu0
    %v509 = vadd.f32 0.0, %v508
    %v510 = vpop.f32.mrb[0].mxu0
    %511 = vmatprep.mubr.f32.mxu0 0.0
    %512 = vmatmul.mubr.f32.gmra.mrb[0].mxu0 %v131
    %v513 = vpop.f32.mrb[0].mxu0
    %v514 = vadd.f32 0.0, %v513
    %v515 = vpop.f32.mrb[0].mxu0
    %516 = vmatprep.mubr.f32.mxu0 0.0
    %517 = vmatmul.mubr.f32.gmra.mrb[0].mxu0 %v132
    %v518 = vpop.f32.mrb[0].mxu0
    %v519 = vadd.f32 0.0, %v518
    %v520 = vpop.f32.mrb[0].mxu0
    %521 = vmatprep.mubr.f32.mxu0 0.0
    %522 = vmatmul.mubr.f32.gmra.mrb[0].mxu0 %v133
    %v523 = vpop.f32.mrb[0].mxu0
    %v524 = vadd.f32 0.0, %v523
    %v525 = vpop.f32.mrb[0].mxu0
    %526 = vmatprep.mubr.f32.mxu0 0.0
    %527 = vmatmul.mubr.f32.gmra.mrb[0].mxu0 %v134
    %v528 = vpop.f32.mrb[0].mxu0
    %v529 = vadd.f32 0.0, %v528
    %v530 = vpop.f32.mrb[0].mxu0
    %531 = vmatprep.mubr.f32.mxu0 0.0
    %532 = vmatmul.mubr.f32.gmra.mrb[0].mxu0 %v135
    %v533 = vpop.f32.mrb[0].mxu0
    %v534 = vadd.f32 0.0, %v533
    %v535 = vpop.f32.mrb[0].mxu0
    %536 = vmatprep.mubr.f32.mxu0 0.0
    %537 = vmatmul.mubr.f32.gmra.mrb[0].mxu0 %v136
    %v538 = vpop.f32.mrb[0].mxu0
    %v539 = vadd.f32 0.0, %v538
    %v540 = vpop.f32.mrb[0].mxu0
    %541 = vmatprep.mubr.f32.mxu0 0.0
    %542 = vmatmul.mubr.f32.gmra.mrb[0].mxu0 %v137
    %v543 = vpop.f32.mrb[0].mxu0
    %v544 = vadd.f32 0.0, %v543
    %v545 = vpop.f32.mrb[0].mxu0
    %546 = vmatprep.mubr.f32.mxu0 0.0
    %547 = vmatmul.mubr.f32.gmra.mrb[0].mxu0 %v138
    %v548 = vpop.f32.mrb[0].mxu0
    %v549 = vadd.f32 0.0, %v548
    %v550 = vpop.f32.mrb[0].mxu0
    %551 = vmatprep.mubr.f32.mxu0 0.0
    %552 = vmatmul.mubr.f32.gmra.mrb[0].mxu0 %v139
    %v553 = vpop.f32.mrb[0].mxu0
    %v554 = vadd.f32 0.0, %v553
    %v555 = vpop.f32.mrb[0].mxu0
    %556 = vmatprep.mubr.f32.mxu0 0.0
    %557 = vmatmul.mubr.f32.gmra.mrb[0].mxu0 %v140
    %v558 = vpop.f32.mrb[0].mxu0
    %v559 = vadd.f32 0.0, %v558
    %v560 = vpop.f32.mrb[0].mxu0
    %561 = vmatprep.mubr.f32.mxu0 0.0
    %562 = vmatmul.mubr.f32.gmra.mrb[0].mxu0 %v141
    %v563 = vpop.f32.mrb[0].mxu0
    %v564 = vadd.f32 0.0, %v563
    %v565 = vpop.f32.mrb[0].mxu0
    %566 = vmatprep.mubr.f32.mxu0 0.0
    %567 = vmatmul.mubr.f32.gmra.mrb[0].mxu0 %v142
    %v568 = vpop.f32.mrb[0].mxu0
    %v569 = vadd.f32 0.0, %v568
    %v570 = vpop.f32.mrb[0].mxu0
    %571 = vmatprep.mubr.f32.mxu0 0.0
    %572 = vmatmul.mubr.f32.gmra.mrb[0].mxu0 %v143
    %v573 = vpop.f32.mrb[0].mxu0
    %v574 = vadd.f32 0.0, %v573
    %v575 = vpop.f32.mrb[0].mxu0
    %576 = vmatprep.mubr.f32.mxu0 0.0
    %577 = vmatmul.mubr.f32.gmra.mrb[0].mxu0 %v144
    %v578 = vpop.f32.mrb[0].mxu0
    %v579 = vadd.f32 0.0, %v578
    %v580 = vpop.f32.mrb[0].mxu0
    %581 = vmatprep.mubr.f32.mxu0 0.0
    %582 = vmatmul.mubr.f32.gmra.mrb[0].mxu0 %v145
    %v583 = vpop.f32.mrb[0].mxu0
    %v584 = vadd.f32 0.0, %v583
    %v585 = vpop.f32.mrb[0].mxu0
    %586 = vmatprep.mubr.f32.mxu0 0.0
    %587 = vmatmul.mubr.f32.gmra.mrb[0].mxu0 %v146
    %v588 = vpop.f32.mrb[0].mxu0
    %v589 = vadd.f32 0.0, %v588
    %v590 = vpop.f32.mrb[0].mxu0
    %591 = vmatprep.mubr.f32.mxu0 0.0
    %592 = vmatmul.mubr.f32.gmra.mrb[0].mxu0 %v147
    %v593 = vpop.f32.mrb[0].mxu0
    %v594 = vadd.f32 0.0, %v593
    %v595 = vpop.f32.mrb[0].mxu0
    %596 = vmatprep.mubr.f32.mxu0 0.0
    %597 = vmatmul.mubr.f32.gmra.mrb[0].mxu0 %v148
    %v598 = vpop.f32.mrb[0].mxu0
    %v599 = vadd.f32 0.0, %v598
    %v600 = vpop.f32.mrb[0].mxu0
    %601 = vmatprep.mubr.f32.mxu0 0.0
    %602 = vmatmul.mubr.f32.gmra.mrb[0].mxu0 %v149
    %v603 = vpop.f32.mrb[0].mxu0
    %v604 = vadd.f32 0.0, %v603
    %v605 = vpop.f32.mrb[0].mxu0
    %606 = vmatprep.mubr.f32.mxu0 0.0
    %607 = vmatmul.mubr.f32.gmra.mrb[0].mxu0 %v150
    %v608 = vpop.f32.mrb[0].mxu0
    %v609 = vadd.f32 0.0, %v608
    %v610 = vpop.f32.mrb[0].mxu0
    %611 = vmatprep.mubr.f32.mxu0 0.0
    %612 = vmatmul.mubr.f32.gmra.mrb[0].mxu0 %v151
    %v613 = vpop.f32.mrb[0].mxu0
    %v614 = vadd.f32 0.0, %v613
    %v615 = vpop.f32.mrb[0].mxu0
    %616 = vmatprep.mubr.f32.mxu0 0.0
    %617 = vmatmul.mubr.f32.gmra.mrb[0].mxu0 %v152
    %v618 = vpop.f32.mrb[0].mxu0
    %v619 = vadd.f32 0.0, %v618
    %v620 = vpop.f32.mrb[0].mxu0
    %621 = vmatprep.mubr.f32.mxu0 0.0
    %622 = vmatmul.mubr.f32.gmra.mrb[0].mxu0 %v153
    %v623 = vpop.f32.mrb[0].mxu0
    %v624 = vadd.f32 0.0, %v623
    %v625 = vpop.f32.mrb[0].mxu0
    %626 = vmatprep.mubr.f32.mxu0 0.0
    %627 = vmatmul.mubr.f32.gmra.mrb[0].mxu0 %v154
    %v628 = vpop.f32.mrb[0].mxu0
    %v629 = vadd.f32 0.0, %v628
    %v630 = vpop.f32.mrb[0].mxu0
    %631 = vmatprep.mubr.f32.mxu0 0.0
    %632 = vmatmul.mubr.f32.gmra.mrb[0].mxu0 %v155
    %v633 = vpop.f32.mrb[0].mxu0
    %v634 = vadd.f32 0.0, %v633
    %v635 = vpop.f32.mrb[0].mxu0
    %636 = vmatprep.mubr.f32.mxu0 0.0
    %637 = vmatmul.mubr.f32.gmra.mrb[0].mxu0 %v156
    %v638 = vpop.f32.mrb[0].mxu0
    %v639 = vadd.f32 0.0, %v638
    %v640 = vpop.f32.mrb[0].mxu0
    %641 = vmatprep.mubr.f32.mxu0 0.0
    %642 = vmatmul.mubr.f32.gmra.mrb[0].mxu0 %v157
    %v643 = vpop.f32.mrb[0].mxu0
    %v644 = vadd.f32 0.0, %v643
    %v645 = vpop.f32.mrb[0].mxu0
    %646 = vmatprep.mubr.f32.mxu0 0.0
    %647 = vmatmul.mubr.f32.gmra.mrb[0].mxu0 %v158
    %v648 = vpop.f32.mrb[0].mxu0
    %v649 = vadd.f32 0.0, %v648
    %v650 = vpop.f32.mrb[0].mxu0
    %651 = vmatprep.mubr.f32.mxu0 0.0
    %652 = vmatmul.mubr.f32.gmra.mrb[0].mxu0 %v159
    %v653 = vpop.f32.mrb[0].mxu0
    %v654 = vadd.f32 0.0, %v653
    %v655 = vpop.f32.mrb[0].mxu0
    %656 = vmatprep.mubr.f32.mxu0 0.0
    %657 = vmatmul.mubr.f32.gmra.mrb[0].mxu0 %v160
    %v658 = vpop.f32.mrb[0].mxu0
    %v659 = vadd.f32 0.0, %v658
    %v660 = vpop.f32.mrb[0].mxu0
    %661 = vmatprep.mubr.f32.mxu0 0.0
    %662 = vmatmul.mubr.f32.gmra.mrb[0].mxu0 %v161
    %v663 = vpop.f32.mrb[0].mxu0
    %v664 = vadd.f32 0.0, %v663
    %v665 = vpop.f32.mrb[0].mxu0
    %666 = vmatprep.mubr.f32.mxu0 0.0
    %667 = vmatmul.mubr.f32.gmra.mrb[0].mxu0 %v162
    %v668 = vpop.f32.mrb[0].mxu0
    %v669 = vadd.f32 0.0, %v668
    %v670 = vpop.f32.mrb[0].mxu0
    %671 = vmatprep.mubr.f32.mxu0 0.0
    %672 = vmatmul.mubr.f32.gmra.mrb[0].mxu0 %v163
    %v673 = vpop.f32.mrb[0].mxu0
    %v674 = vadd.f32 0.0, %v673
    %v675 = vpop.f32.mrb[0].mxu0
    %676 = vmatprep.mubr.f32.mxu0 0.0
    %677 = vmatmul.mubr.f32.gmra.mrb[0].mxu0 %v164
    %v678 = vpop.f32.mrb[0].mxu0
    %v679 = vadd.f32 0.0, %v678
    %v680 = vpop.f32.mrb[0].mxu0
    %681 = vmatprep.mubr.f32.mxu0 0.0
    %682 = vmatmul.mubr.f32.gmra.mrb[0].mxu0 %v165
    %v683 = vpop.f32.mrb[0].mxu0
    %v684 = vadd.f32 0.0, %v683
    %v685 = vpop.f32.mrb[0].mxu0
    %686 = vmatprep.mubr.f32.mxu0 0.0
    %687 = vmatmul.mubr.f32.gmra.mrb[0].mxu0 %v166
    %v688 = vpop.f32.mrb[0].mxu0
    %v689 = vadd.f32 0.0, %v688
    %v690 = vpop.f32.mrb[0].mxu0
    %691 = vmatprep.mubr.f32.mxu0 0.0
    %692 = vmatmul.mubr.f32.gmra.mrb[0].mxu0 %v167
    %v693 = vpop.f32.mrb[0].mxu0
    %v694 = vadd.f32 0.0, %v693
    %v695 = vpop.f32.mrb[0].mxu0
    %696 = vmatprep.mubr.f32.mxu0 0.0
    %697 = vmatmul.mubr.f32.gmra.mrb[0].mxu0 %v168
    %v698 = vpop.f32.mrb[0].mxu0
    %v699 = vadd.f32 0.0, %v698
    %v700 = vpop.f32.mrb[0].mxu0
    %701 = vmatprep.mubr.f32.mxu0 0.0
    %702 = vmatmul.mubr.f32.gmra.mrb[0].mxu0 %v169
    %v703 = vpop.f32.mrb[0].mxu0
    %v704 = vadd.f32 0.0, %v703
    %v705 = vpop.f32.mrb[0].mxu0
    %706 = vmatprep.mubr.f32.mxu0 0.0
    %707 = vmatmul.mubr.f32.gmra.mrb[0].mxu0 %v170
    %v708 = vpop.f32.mrb[0].mxu0
    %v709 = vadd.f32 0.0, %v708
    %v710 = vpop.f32.mrb[0].mxu0
    %711 = vmatprep.mubr.f32.mxu0 0.0
    %712 = vmatmul.mubr.f32.gmra.mrb[0].mxu0 %v171
    %v713 = vpop.f32.mrb[0].mxu0
    %v714 = vadd.f32 0.0, %v713
    %v715 = vpop.f32.mrb[0].mxu0
    %716 = vmatprep.mubr.f32.mxu0 0.0
    %717 = vmatmul.mubr.f32.gmra.mrb[0].mxu0 %v172
    %v718 = vpop.f32.mrb[0].mxu0
    %v719 = vadd.f32 0.0, %v718
    %v720 = vpop.f32.mrb[0].mxu0
    %721 = vmatprep.mubr.f32.mxu0 0.0
    %722 = vmatmul.mubr.f32.gmra.mrb[0].mxu0 %v173
    %v723 = vpop.f32.mrb[0].mxu0
    %v724 = vadd.f32 0.0, %v723
    %v725 = vpop.f32.mrb[0].mxu0
    %726 = vmatprep.mubr.f32.mxu0 0.0
    %727 = vmatmul.mubr.f32.gmra.mrb[0].mxu0 %v174
    %v728 = vpop.f32.mrb[0].mxu0
    %v729 = vadd.f32 0.0, %v728
    %v730 = vpop.f32.mrb[0].mxu0
    %731 = vmatprep.mubr.f32.mxu0 0.0
    %732 = vmatmul.mubr.f32.gmra.mrb[0].mxu0 %v175
    %v733 = vpop.f32.mrb[0].mxu0
    %v734 = vadd.f32 0.0, %v733
    %v735 = vpop.f32.mrb[0].mxu0
    %736 = vmatprep.mubr.f32.mxu0 0.0
    %737 = vmatmul.mubr.f32.gmra.mrb[0].mxu0 %v176
    %v738 = vpop.f32.mrb[0].mxu0
    %v739 = vadd.f32 0.0, %v738
    %v740 = vpop.f32.mrb[0].mxu0
    %741 = vmatprep.mubr.f32.mxu0 0.0
    %742 = vmatmul.mubr.f32.gmra.mrb[0].mxu0 %v177
    %v743 = vpop.f32.mrb[0].mxu0
    %v744 = vadd.f32 0.0, %v743
    %v745 = vpop.f32.mrb[0].mxu0
    %746 = vmatprep.mubr.f32.mxu0 0.0
    %747 = vmatmul.mubr.f32.gmra.mrb[0].mxu0 %v178
    %v748 = vpop.f32.mrb[0].mxu0
    %v749 = vadd.f32 0.0, %v748
    %v750 = vpop.f32.mrb[0].mxu0
    %751 = vmatprep.mubr.f32.mxu0 0.0
    %752 = vmatmul.mubr.f32.gmra.mrb[0].mxu0 %v179
    %v753 = vpop.f32.mrb[0].mxu0
    %v754 = vadd.f32 0.0, %v753
    %v755 = vpop.f32.mrb[0].mxu0
    %756 = vmatprep.mubr.f32.mxu0 0.0
    %757 = vmatmul.mubr.f32.gmra.mrb[0].mxu0 %v180
    %v758 = vpop.f32.mrb[0].mxu0
    %v759 = vadd.f32 0.0, %v758
    %v760 = vpop.f32.mrb[0].mxu0
    %761 = vmatprep.mubr.f32.mxu0 0.0
    %762 = vmatmul.mubr.f32.gmra.mrb[0].mxu0 %v181
    %v763 = vpop.f32.mrb[0].mxu0
    %v764 = vadd.f32 0.0, %v763
    %v765 = vpop.f32.mrb[0].mxu0
    %766 = vmatprep.mubr.f32.mxu0 0.0
    %767 = vmatmul.mubr.f32.gmra.mrb[0].mxu0 %v182
    %v768 = vpop.f32.mrb[0].mxu0
    %v769 = vadd.f32 0.0, %v768
    %v770 = vpop.f32.mrb[0].mxu0
    %771 = vmatprep.mubr.f32.mxu0 0.0
    %772 = vmatmul.mubr.f32.gmra.mrb[0].mxu0 %v183
    %v773 = vpop.f32.mrb[0].mxu0
    %v774 = vadd.f32 0.0, %v773
    %v775 = vpop.f32.mrb[0].mxu0
    %776 = vmatprep.mubr.f32.mxu0 0.0
    %777 = vmatmul.mubr.f32.gmra.mrb[0].mxu0 %v184
    %v778 = vpop.f32.mrb[0].mxu0
    %v779 = vadd.f32 0.0, %v778
    %v780 = vpop.f32.mrb[0].mxu0
    %781 = vmatprep.mubr.f32.mxu0 0.0
    %782 = vmatmul.mubr.f32.gmra.mrb[0].mxu0 %v185
    %v783 = vpop.f32.mrb[0].mxu0
    %v784 = vadd.f32 0.0, %v783
    %v785 = vpop.f32.mrb[0].mxu0
    %786 = vmatprep.mubr.f32.mxu0 0.0
    %787 = vmatmul.mubr.f32.gmra.mrb[0].mxu0 %v186
    %v788 = vpop.f32.mrb[0].mxu0
    %v789 = vadd.f32 0.0, %v788
    %v790 = vpop.f32.mrb[0].mxu0
    %791 = vmatprep.mubr.f32.mxu0 0.0
    %792 = vmatmul.mubr.f32.gmra.mrb[0].mxu0 %v187
    %v793 = vpop.f32.mrb[0].mxu0
    %v794 = vadd.f32 0.0, %v793
    %v795 = vpop.f32.mrb[0].mxu0
    %796 = vmatprep.mubr.f32.mxu0 0.0
    %797 = vmatmul.mubr.f32.gmra.mrb[0].mxu0 %v188
    %v798 = vpop.f32.mrb[0].mxu0
    %v799 = vadd.f32 0.0, %v798
    %v800 = vpop.f32.mrb[0].mxu0
    %801 = vmatprep.mubr.f32.mxu0 0.0
    %802 = vmatmul.mubr.f32.gmra.mrb[0].mxu0 %v189
    %v803 = vpop.f32.mrb[0].mxu0
    %v804 = vadd.f32 0.0, %v803
    %v805 = vpop.f32.mrb[0].mxu0
    %806 = vmatprep.mubr.f32.mxu0 0.0
    %807 = vmatmul.mubr.f32.gmra.mrb[0].mxu0 %v190
    %v808 = vpop.f32.mrb[0].mxu0
    %v809 = vadd.f32 0.0, %v808
    %v810 = vpop.f32.mrb[0].mxu0
    %811 = vmatprep.mubr.f32.mxu0 0.0
    %812 = vmatmul.mubr.f32.gmra.mrb[0].mxu0 %v191
    %v813 = vpop.f32.mrb[0].mxu0
    %v814 = vadd.f32 0.0, %v813
    %v815 = vpop.f32.mrb[0].mxu0
    %816 = vmatprep.mubr.f32.mxu0 0.0
    %817 = vmatmul.mubr.f32.gmra.mrb[0].mxu0 %v192
    %v818 = vpop.f32.mrb[0].mxu0
    %v819 = vadd.f32 0.0, %v818
    %v820 = vpop.f32.mrb[0].mxu0
    %821 = vmatprep.mubr.f32.mxu0 0.0
    %822 = vmatmul.mubr.f32.gmra.mrb[0].mxu0 %v193
    %v823 = vpop.f32.mrb[0].mxu0
    %v824 = vadd.f32 0.0, %v823
    %v825 = vpop.f32.mrb[0].mxu0
    %826 = vmatprep.mubr.f32.mxu0 0.0
    %827 = vmatmul.mubr.f32.gmra.mrb[0].mxu0 %v194
    %v828 = vpop.f32.mrb[0].mxu0
    %v829 = vadd.f32 0.0, %v828
    %v830 = vpop.f32.mrb[0].mxu0
    %831 = vmatprep.mubr.f32.mxu0 0.0
    %832 = vmatmul.mubr.f32.gmra.mrb[0].mxu0 %v195
    %v833 = vpop.f32.mrb[0].mxu0
    %v834 = vadd.f32 0.0, %v833
    %v835 = vpop.f32.mrb[0].mxu0
    %836 = vmatprep.mubr.f32.mxu0 0.0
    %837 = vmatmul.mubr.f32.gmra.mrb[0].mxu0 %v196
    %v838 = vpop.f32.mrb[0].mxu0
    %v839 = vadd.f32 0.0, %v838
    %v840 = vpop.f32.mrb[0].mxu0
    %841 = vmatprep.mubr.f32.mxu0 0.0
    %842 = vmatmul.mubr.f32.gmra.mrb[0].mxu0 %v197
    %v843 = vpop.f32.mrb[0].mxu0
    %v844 = vadd.f32 0.0, %v843
    %v845 = vpop.f32.mrb[0].mxu0
    %846 = vmatprep.mubr.f32.mxu0 0.0
    %847 = vmatmul.mubr.f32.gmra.mrb[0].mxu0 %v198
    %v848 = vpop.f32.mrb[0].mxu0
    %v849 = vadd.f32 0.0, %v848
    %v850 = vpop.f32.mrb[0].mxu0
    %851 = vmatprep.mubr.f32.mxu0 0.0
    %852 = vmatmul.mubr.f32.gmra.mrb[0].mxu0 %v199
    %v853 = vpop.f32.mrb[0].mxu0
    %v854 = vadd.f32 0.0, %v853
    %v855 = vpop.f32.mrb[0].mxu0
    %856 = vmatprep.mubr.f32.mxu0 0.0
    %857 = vmatmul.mubr.f32.gmra.mrb[0].mxu0 %v200
    %v858 = vpop.f32.mrb[0].mxu0
    %v859 = vadd.f32 0.0, %v858
    %v860 = vpop.f32.mrb[0].mxu0
    %861 = vmatprep.mubr.f32.mxu0 0.0
    %862 = vmatmul.mubr.f32.gmra.mrb[0].mxu0 %v201
    %v863 = vpop.f32.mrb[0].mxu0
    %v864 = vadd.f32 0.0, %v863
    %v865 = vpop.f32.mrb[0].mxu0
    %866 = vmatprep.mubr.f32.mxu0 0.0
    %867 = vmatmul.mubr.f32.gmra.mrb[0].mxu0 %v202
    %v868 = vpop.f32.mrb[0].mxu0
    %v869 = vadd.f32 0.0, %v868
    %v870 = vpop.f32.mrb[0].mxu0
    %871 = vmatprep.mubr.f32.mxu0 0.0
    %872 = vmatmul.mubr.f32.gmra.mrb[0].mxu0 %v203
    %v873 = vpop.f32.mrb[0].mxu0
    %v874 = vadd.f32 0.0, %v873
    %v875 = vpop.f32.mrb[0].mxu0
    %876 = vmatprep.mubr.f32.mxu0 0.0
    %877 = vmatmul.mubr.f32.gmra.mrb[0].mxu0 %v204
    %v878 = vpop.f32.mrb[0].mxu0
    %v879 = vadd.f32 0.0, %v878
    %v880 = vpop.f32.mrb[0].mxu0
    %881 = vmatprep.mubr.f32.mxu0 0.0
    %882 = vmatmul.mubr.f32.gmra.mrb[0].mxu0 %v205
    %v883 = vpop.f32.mrb[0].mxu0
    %v884 = vadd.f32 0.0, %v883
    %v885 = vpop.f32.mrb[0].mxu0
    %886 = vmatprep.mubr.f32.mxu0 0.0
    %887 = vmatmul.mubr.f32.gmra.mrb[0].mxu0 %v206
    %v888 = vpop.f32.mrb[0].mxu0
    %v889 = vadd.f32 0.0, %v888
    %v890 = vpop.f32.mrb[0].mxu0
    %891 = vmatprep.mubr.f32.mxu0 0.0
    %892 = vmatmul.mubr.f32.gmra.mrb[0].mxu0 %v207
    %v893 = vpop.f32.mrb[0].mxu0
    %v894 = vadd.f32 0.0, %v893
    %v895 = vpop.f32.mrb[0].mxu0
    %896 = vmatprep.mubr.f32.mxu0 0.0
    %897 = vmatmul.mubr.f32.gmra.mrb[0].mxu0 %v208
    %v898 = vpop.f32.mrb[0].mxu0
    %v899 = vadd.f32 0.0, %v898
    %v900 = vpop.f32.mrb[0].mxu0
    %901 = vmatprep.mubr.f32.mxu0 0.0
    %902 = vmatmul.mubr.f32.gmra.mrb[0].mxu0 %v209
    %v903 = vpop.f32.mrb[0].mxu0
    %v904 = vadd.f32 0.0, %v903
    %v905 = vpop.f32.mrb[0].mxu0
    %906 = vmatprep.mubr.f32.mxu0 0.0
    %907 = vmatmul.mubr.f32.gmra.mrb[0].mxu0 %v210
    %v908 = vpop.f32.mrb[0].mxu0
    %v909 = vadd.f32 0.0, %v908
    %v910 = vpop.f32.mrb[0].mxu0
    %911 = vmatprep.mubr.f32.mxu0 0.0
    %912 = vmatmul.mubr.f32.gmra.mrb[0].mxu0 %v211
    %v913 = vpop.f32.mrb[0].mxu0
    %v914 = vadd.f32 0.0, %v913
    %v915 = vpop.f32.mrb[0].mxu0
    %916 = vmatprep.mubr.f32.mxu0 0.0
    %917 = vmatmul.mubr.f32.gmra.mrb[0].mxu0 %v212
    %v918 = vpop.f32.mrb[0].mxu0
    %v919 = vadd.f32 0.0, %v918
    %v920 = vpop.f32.mrb[0].mxu0
    %921 = vmatprep.mubr.f32.mxu0 0.0
    %922 = vmatmul.mubr.f32.gmra.mrb[0].mxu0 %v213
    %v923 = vpop.f32.mrb[0].mxu0
    %v924 = vadd.f32 0.0, %v923
    %v925 = vpop.f32.mrb[0].mxu0
    %926 = vmatprep.mubr.f32.mxu0 0.0
    %927 = vmatmul.mubr.f32.gmra.mrb[0].mxu0 %v214
    %v928 = vpop.f32.mrb[0].mxu0
    %v929 = vadd.f32 0.0, %v928
    %v930 = vpop.f32.mrb[0].mxu0
    %931 = vmatprep.mubr.f32.mxu0 0.0
    %932 = vmatmul.mubr.f32.gmra.mrb[0].mxu0 %v215
    %v933 = vpop.f32.mrb[0].mxu0
    %v934 = vadd.f32 0.0, %v933
    %v935 = vpop.f32.mrb[0].mxu0
    %936 = vdwg.mxu0
    %v937 = vld [vmem:[#allocation2] sm:$0xff]
    %v938 = vld [vmem:[#allocation10] sm:$0xff]
    %v939 = vld [vmem:[#allocation10 + $0x8] sm:$0xff]
    %v940 = vld [vmem:[#allocation10 + $0x10] sm:$0xff]
    %v941 = vld [vmem:[#allocation10 + $0x18] sm:$0xff]
    %v942 = vld [vmem:[#allocation10 + $0x20] sm:$0xff]
    %v943 = vld [vmem:[#allocation10 + $0x28] sm:$0xff]
    %v944 = vld [vmem:[#allocation10 + $0x30] sm:$0xff]
    %v945 = vld [vmem:[#allocation10 + $0x38] sm:$0xff]
    %v946 = vld [vmem:[#allocation10 + $0x40] sm:$0xff]
    %v947 = vld [vmem:[#allocation10 + $0x48] sm:$0xff]
    %v948 = vld [vmem:[#allocation10 + $0x50] sm:$0xff]
    %v949 = vld [vmem:[#allocation10 + $0x58] sm:$0xff]
    %v950 = vld [vmem:[#allocation10 + $0x60] sm:$0xff]
    %v951 = vld [vmem:[#allocation10 + $0x68] sm:$0xff]
    %v952 = vld [vmem:[#allocation10 + $0x70] sm:$0xff]
    %v953 = vld [vmem:[#allocation10 + $0x78] sm:$0xff]
    %954 = vmatprep.subr.mxu0 0.0
    %955 = vmatpush1.msra.mxu0 %v938
    %956 = vmatprep.subr.mxu0 0.0
    %957 = vmatpush1.msra.mxu0 %v939
    %958 = vmatprep.subr.mxu0 0.0
    %959 = vmatpush1.msra.mxu0 %v940
    %960 = vmatprep.subr.mxu0 0.0
    %961 = vmatpush1.msra.mxu0 %v941
    %962 = vmatprep.subr.mxu0 0.0
    %963 = vmatpush1.msra.mxu0 %v942
    %964 = vmatprep.subr.mxu0 0.0
    %965 = vmatpush1.msra.mxu0 %v943
    %966 = vmatprep.subr.mxu0 0.0
    %967 = vmatpush1.msra.mxu0 %v944
    %968 = vmatprep.subr.mxu0 0.0
    %969 = vmatpush1.msra.mxu0 %v945
    %970 = vmatprep.subr.mxu0 0.0
    %971 = vmatpush1.msra.mxu0 %v946
    %972 = vmatprep.subr.mxu0 0.0
    %973 = vmatpush1.msra.mxu0 %v947
    %974 = vmatprep.subr.mxu0 0.0
    %975 = vmatpush1.msra.mxu0 %v948
    %976 = vmatprep.subr.mxu0 0.0
    %977 = vmatpush1.msra.mxu0 %v949
    %978 = vmatprep.subr.mxu0 0.0
    %979 = vmatpush1.msra.mxu0 %v950
    %980 = vmatprep.subr.mxu0 0.0
    %981 = vmatpush1.msra.mxu0 %v951
    %982 = vmatprep.subr.mxu0 0.0
    %983 = vmatpush1.msra.mxu0 %v952
    %984 = vmatprep.subr.mxu0 0.0
    %985 = vmatpush1.msra.mxu0 %v953
    %986 = vmatprep.subr.mxu0 0.0
    %987 = vmatpush1.msra.mxu0 0.0
    %988 = vmatprep.subr.mxu0 0.0
    %989 = vmatpush1.msra.mxu0 0.0
    %990 = vmatprep.subr.mxu0 0.0
    %991 = vmatpush1.msra.mxu0 0.0
    %992 = vmatprep.subr.mxu0 0.0
    %993 = vmatpush1.msra.mxu0 0.0
    %994 = vmatprep.subr.mxu0 0.0
    %995 = vmatpush1.msra.mxu0 0.0
    %996 = vmatprep.subr.mxu0 0.0
    %997 = vmatpush1.msra.mxu0 0.0
    %998 = vmatprep.subr.mxu0 0.0
    %999 = vmatpush1.msra.mxu0 0.0
    %1000 = vmatprep.subr.mxu0 0.0
    %1001 = vmatpush1.msra.mxu0 0.0
    %1002 = vmatprep.subr.mxu0 0.0
    %1003 = vmatpush1.msra.mxu0 0.0
    %1004 = vmatprep.subr.mxu0 0.0
    %1005 = vmatpush1.msra.mxu0 0.0
    %1006 = vmatprep.subr.mxu0 0.0
    %1007 = vmatpush1.msra.mxu0 0.0
    %1008 = vmatprep.subr.mxu0 0.0
    %1009 = vmatpush1.msra.mxu0 0.0
    %1010 = vmatprep.subr.mxu0 0.0
    %1011 = vmatpush1.msra.mxu0 0.0
    %1012 = vmatprep.subr.mxu0 0.0
    %1013 = vmatpush1.msra.mxu0 0.0
    %1014 = vmatprep.subr.mxu0 0.0
    %1015 = vmatpush1.msra.mxu0 0.0
    %1016 = vmatprep.subr.mxu0 0.0
    %1017 = vmatpush1.msra.mxu0 0.0
    %1018 = vmatprep.mubr.f32.mxu0 0.0
    %1019 = vmatmul.mubr.f32.gmra.mrb[0].mxu0 %v937
    %v1020 = vpop.f32.mrb[0].mxu0
    %v1021 = vadd.f32 0.0, %v1020
    %v1022 = vpop.f32.mrb[0].mxu0
    %1023 = vdwg.mxu0
    %v1025 = vcombine.high %v1021, %v1021
    %v1027 = vunpack.c.l.s4 1966171168
    %v1028 = vunpack.c.0.s8 %v1027
    %v1029 = vlaneseq
    %v1030 = vshrl.u32 %v1029, 7
    %v1031 = vsub.s32 %v1028, %v1030
    %v1032 = vrot.slane %v1021, %v1031
    %v1034 = vunpack.c.l.s4 1966171168
    %v1035 = vunpack.c.0.s8 %v1034
    %v1036 = vlaneseq
    %v1037 = vshrl.u32 %v1036, 7
    %v1038 = vsub.s32 %v1035, %v1037
    %v1039 = vrot.slane %v1025, %v1038
    %v1040 = vcombine.high %v1032, %v1032
    %v1041 = vcombine.high %v1039, %v1039
    %v1043 = vunpack.c.l.s4 1966171168
    %v1044 = vunpack.c.0.s8 %v1043
    %v1045 = vlaneseq
    %v1046 = vshrl.u32 %v1045, 7
    %v1047 = vsub.s32 %v1044, %v1046
    %v1048 = vrot.slane %v1032, %v1047
    %v1050 = vunpack.c.l.s4 1966171168
    %v1051 = vunpack.c.0.s8 %v1050
    %v1052 = vlaneseq
    %v1053 = vshrl.u32 %v1052, 7
    %v1054 = vsub.s32 %v1051, %v1053
    %v1055 = vrot.slane %v1039, %v1054
    %v1057 = vunpack.c.l.s4 1966171168
    %v1058 = vunpack.c.0.s8 %v1057
    %v1059 = vlaneseq
    %v1060 = vshrl.u32 %v1059, 7
    %v1061 = vsub.s32 %v1058, %v1060
    %v1062 = vrot.slane %v1040, %v1061
    %v1064 = vunpack.c.l.s4 1966171168
    %v1065 = vunpack.c.0.s8 %v1064
    %v1066 = vlaneseq
    %v1067 = vshrl.u32 %v1066, 7
    %v1068 = vsub.s32 %v1065, %v1067
    %v1069 = vrot.slane %v1041, %v1068
    %v1070 = vcombine.high %v1048, %v1048
    %v1071 = vcombine.high %v1055, %v1055
    %v1072 = vcombine.high %v1062, %v1062
    %v1073 = vcombine.high %v1069, %v1069
    %v1074 = vlaneseq
    %v1075 = vshrl.u32 %v1074, 7
    %v1076 = vsub.s32 0, %v1075
    %v1077 = vrot.slane %v1048, %v1076
    %v1078 = vlaneseq
    %v1079 = vshrl.u32 %v1078, 7
    %v1080 = vsub.s32 0, %v1079
    %v1081 = vrot.slane %v1062, %v1080
    %v1082 = vlaneseq
    %v1083 = vshrl.u32 %v1082, 7
    %v1084 = vsub.s32 0, %v1083
    %v1085 = vrot.slane %v1070, %v1084
    %v1086 = vlaneseq
    %v1087 = vshrl.u32 %v1086, 7
    %v1088 = vsub.s32 0, %v1087
    %v1089 = vrot.slane %v1072, %v1088
    %v1090 = vlaneseq
    %v1091 = vshrl.u32 %v1090, 7
    %v1092 = vsub.s32 0, %v1091
    %v1093 = vrot.slane %v1055, %v1092
    %v1094 = vlaneseq
    %v1095 = vshrl.u32 %v1094, 7
    %v1096 = vsub.s32 0, %v1095
    %v1097 = vrot.slane %v1069, %v1096
    %v1098 = vlaneseq
    %v1099 = vshrl.u32 %v1098, 7
    %v1100 = vsub.s32 0, %v1099
    %v1101 = vrot.slane %v1071, %v1100
    %v1102 = vlaneseq
    %v1103 = vshrl.u32 %v1102, 7
    %v1104 = vsub.s32 0, %v1103
    %v1105 = vrot.slane %v1073, %v1104
    %v1114 = vadd.f32 %v299, %v1077
    %v1115 = vadd.f32 %v304, %v1077
    %v1116 = vadd.f32 %v309, %v1077
    %v1117 = vadd.f32 %v314, %v1077
    %v1118 = vadd.f32 %v319, %v1077
    %v1119 = vadd.f32 %v324, %v1077
    %v1120 = vadd.f32 %v329, %v1077
    %v1121 = vadd.f32 %v334, %v1077
    %v1122 = vadd.f32 %v339, %v1077
    %v1123 = vadd.f32 %v344, %v1077
    %v1124 = vadd.f32 %v349, %v1077
    %v1125 = vadd.f32 %v354, %v1077
    %v1126 = vadd.f32 %v359, %v1077
    %v1127 = vadd.f32 %v364, %v1077
    %v1128 = vadd.f32 %v369, %v1077
    %v1129 = vadd.f32 %v374, %v1077
    %v1130 = vadd.f32 %v379, %v1081
    %v1131 = vadd.f32 %v384, %v1081
    %v1132 = vadd.f32 %v389, %v1081
    %v1133 = vadd.f32 %v394, %v1081
    %v1134 = vadd.f32 %v399, %v1081
    %v1135 = vadd.f32 %v404, %v1081
    %v1136 = vadd.f32 %v409, %v1081
    %v1137 = vadd.f32 %v414, %v1081
    %v1138 = vadd.f32 %v419, %v1081
    %v1139 = vadd.f32 %v424, %v1081
    %v1140 = vadd.f32 %v429, %v1081
    %v1141 = vadd.f32 %v434, %v1081
    %v1142 = vadd.f32 %v439, %v1081
    %v1143 = vadd.f32 %v444, %v1081
    %v1144 = vadd.f32 %v449, %v1081
    %v1145 = vadd.f32 %v454, %v1081
    %v1146 = vadd.f32 %v459, %v1085
    %v1147 = vadd.f32 %v464, %v1085
    %v1148 = vadd.f32 %v469, %v1085
    %v1149 = vadd.f32 %v474, %v1085
    %v1150 = vadd.f32 %v479, %v1085
    %v1151 = vadd.f32 %v484, %v1085
    %v1152 = vadd.f32 %v489, %v1085
    %v1153 = vadd.f32 %v494, %v1085
    %v1154 = vadd.f32 %v499, %v1085
    %v1155 = vadd.f32 %v504, %v1085
    %v1156 = vadd.f32 %v509, %v1085
    %v1157 = vadd.f32 %v514, %v1085
    %v1158 = vadd.f32 %v519, %v1085
    %v1159 = vadd.f32 %v524, %v1085
    %v1160 = vadd.f32 %v529, %v1085
    %v1161 = vadd.f32 %v534, %v1085
    %v1162 = vadd.f32 %v539, %v1089
    %v1163 = vadd.f32 %v544, %v1089
    %v1164 = vadd.f32 %v549, %v1089
    %v1165 = vadd.f32 %v554, %v1089
    %v1166 = vadd.f32 %v559, %v1089
    %v1167 = vadd.f32 %v564, %v1089
    %v1168 = vadd.f32 %v569, %v1089
    %v1169 = vadd.f32 %v574, %v1089
    %v1170 = vadd.f32 %v579, %v1089
    %v1171 = vadd.f32 %v584, %v1089
    %v1172 = vadd.f32 %v589, %v1089
    %v1173 = vadd.f32 %v594, %v1089
    %v1174 = vadd.f32 %v599, %v1089
    %v1175 = vadd.f32 %v604, %v1089
    %v1176 = vadd.f32 %v609, %v1089
    %v1177 = vadd.f32 %v614, %v1089
    %v1178 = vadd.f32 %v619, %v1093
    %v1179 = vadd.f32 %v624, %v1093
    %v1180 = vadd.f32 %v629, %v1093
    %v1181 = vadd.f32 %v634, %v1093
    %v1182 = vadd.f32 %v639, %v1093
    %v1183 = vadd.f32 %v644, %v1093
    %v1184 = vadd.f32 %v649, %v1093
    %v1185 = vadd.f32 %v654, %v1093
    %v1186 = vadd.f32 %v659, %v1093
    %v1187 = vadd.f32 %v664, %v1093
    %v1188 = vadd.f32 %v669, %v1093
    %v1189 = vadd.f32 %v674, %v1093
    %v1190 = vadd.f32 %v679, %v1093
    %v1191 = vadd.f32 %v684, %v1093
    %v1192 = vadd.f32 %v689, %v1093
    %v1193 = vadd.f32 %v694, %v1093
    %v1194 = vadd.f32 %v699, %v1097
    %v1195 = vadd.f32 %v704, %v1097
    %v1196 = vadd.f32 %v709, %v1097
    %v1197 = vadd.f32 %v714, %v1097
    %v1198 = vadd.f32 %v719, %v1097
    %v1199 = vadd.f32 %v724, %v1097
    %v1200 = vadd.f32 %v729, %v1097
    %v1201 = vadd.f32 %v734, %v1097
    %v1202 = vadd.f32 %v739, %v1097
    %v1203 = vadd.f32 %v744, %v1097
    %v1204 = vadd.f32 %v749, %v1097
    %v1205 = vadd.f32 %v754, %v1097
    %v1206 = vadd.f32 %v759, %v1097
    %v1207 = vadd.f32 %v764, %v1097
    %v1208 = vadd.f32 %v769, %v1097
    %v1209 = vadd.f32 %v774, %v1097
    %v1210 = vadd.f32 %v779, %v1101
    %v1211 = vadd.f32 %v784, %v1101
    %v1212 = vadd.f32 %v789, %v1101
    %v1213 = vadd.f32 %v794, %v1101
    %v1214 = vadd.f32 %v799, %v1101
    %v1215 = vadd.f32 %v804, %v1101
    %v1216 = vadd.f32 %v809, %v1101
    %v1217 = vadd.f32 %v814, %v1101
    %v1218 = vadd.f32 %v819, %v1101
    %v1219 = vadd.f32 %v824, %v1101
    %v1220 = vadd.f32 %v829, %v1101
    %v1221 = vadd.f32 %v834, %v1101
    %v1222 = vadd.f32 %v839, %v1101
    %v1223 = vadd.f32 %v844, %v1101
    %v1224 = vadd.f32 %v849, %v1101
    %v1225 = vadd.f32 %v854, %v1101
    %v1226 = vadd.f32 %v859, %v1105
    %v1227 = vadd.f32 %v864, %v1105
    %v1228 = vadd.f32 %v869, %v1105
    %v1229 = vadd.f32 %v874, %v1105
    %v1230 = vadd.f32 %v879, %v1105
    %v1231 = vadd.f32 %v884, %v1105
    %v1232 = vadd.f32 %v889, %v1105
    %v1233 = vadd.f32 %v894, %v1105
    %v1234 = vadd.f32 %v899, %v1105
    %v1235 = vadd.f32 %v904, %v1105
    %v1236 = vadd.f32 %v909, %v1105
    %v1237 = vadd.f32 %v914, %v1105
    %v1238 = vadd.f32 %v919, %v1105
    %v1239 = vadd.f32 %v924, %v1105
    %v1240 = vadd.f32 %v929, %v1105
    %v1241 = vadd.f32 %v934, %v1105
    %v1242 = vtanh.pop %v1114
    %v1243 = vtanh.pop %v1115
    %v1244 = vtanh.pop %v1116
    %v1245 = vtanh.pop %v1117
    %v1246 = vtanh.pop %v1118
    %v1247 = vtanh.pop %v1119
    %v1248 = vtanh.pop %v1120
    %v1249 = vtanh.pop %v1121
    %v1250 = vtanh.pop %v1122
    %v1251 = vtanh.pop %v1123
    %v1252 = vtanh.pop %v1124
    %v1253 = vtanh.pop %v1125
    %v1254 = vtanh.pop %v1126
    %v1255 = vtanh.pop %v1127
    %v1256 = vtanh.pop %v1128
    %v1257 = vtanh.pop %v1129
    %v1258 = vtanh.pop %v1130
    %v1259 = vtanh.pop %v1131
    %v1260 = vtanh.pop %v1132
    %v1261 = vtanh.pop %v1133
    %v1262 = vtanh.pop %v1134
    %v1263 = vtanh.pop %v1135
    %v1264 = vtanh.pop %v1136
    %v1265 = vtanh.pop %v1137
    %v1266 = vtanh.pop %v1138
    %v1267 = vtanh.pop %v1139
    %v1268 = vtanh.pop %v1140
    %v1269 = vtanh.pop %v1141
    %v1270 = vtanh.pop %v1142
    %v1271 = vtanh.pop %v1143
    %v1272 = vtanh.pop %v1144
    %v1273 = vtanh.pop %v1145
    %v1274 = vtanh.pop %v1146
    %v1275 = vtanh.pop %v1147
    %v1276 = vtanh.pop %v1148
    %v1277 = vtanh.pop %v1149
    %v1278 = vtanh.pop %v1150
    %v1279 = vtanh.pop %v1151
    %v1280 = vtanh.pop %v1152
    %v1281 = vtanh.pop %v1153
    %v1282 = vtanh.pop %v1154
    %v1283 = vtanh.pop %v1155
    %v1284 = vtanh.pop %v1156
    %v1285 = vtanh.pop %v1157
    %v1286 = vtanh.pop %v1158
    %v1287 = vtanh.pop %v1159
    %v1288 = vtanh.pop %v1160
    %v1289 = vtanh.pop %v1161
    %v1290 = vtanh.pop %v1162
    %v1291 = vtanh.pop %v1163
    %v1292 = vtanh.pop %v1164
    %v1293 = vtanh.pop %v1165
    %v1294 = vtanh.pop %v1166
    %v1295 = vtanh.pop %v1167
    %v1296 = vtanh.pop %v1168
    %v1297 = vtanh.pop %v1169
    %v1298 = vtanh.pop %v1170
    %v1299 = vtanh.pop %v1171
    %v1300 = vtanh.pop %v1172
    %v1301 = vtanh.pop %v1173
    %v1302 = vtanh.pop %v1174
    %v1303 = vtanh.pop %v1175
    %v1304 = vtanh.pop %v1176
    %v1305 = vtanh.pop %v1177
    %v1306 = vtanh.pop %v1178
    %v1307 = vtanh.pop %v1179
    %v1308 = vtanh.pop %v1180
    %v1309 = vtanh.pop %v1181
    %v1310 = vtanh.pop %v1182
    %v1311 = vtanh.pop %v1183
    %v1312 = vtanh.pop %v1184
    %v1313 = vtanh.pop %v1185
    %v1314 = vtanh.pop %v1186
    %v1315 = vtanh.pop %v1187
    %v1316 = vtanh.pop %v1188
    %v1317 = vtanh.pop %v1189
    %v1318 = vtanh.pop %v1190
    %v1319 = vtanh.pop %v1191
    %v1320 = vtanh.pop %v1192
    %v1321 = vtanh.pop %v1193
    %v1322 = vtanh.pop %v1194
    %v1323 = vtanh.pop %v1195
    %v1324 = vtanh.pop %v1196
    %v1325 = vtanh.pop %v1197
    %v1326 = vtanh.pop %v1198
    %v1327 = vtanh.pop %v1199
    %v1328 = vtanh.pop %v1200
    %v1329 = vtanh.pop %v1201
    %v1330 = vtanh.pop %v1202
    %v1331 = vtanh.pop %v1203
    %v1332 = vtanh.pop %v1204
    %v1333 = vtanh.pop %v1205
    %v1334 = vtanh.pop %v1206
    %v1335 = vtanh.pop %v1207
    %v1336 = vtanh.pop %v1208
    %v1337 = vtanh.pop %v1209
    %v1338 = vtanh.pop %v1210
    %v1339 = vtanh.pop %v1211
    %v1340 = vtanh.pop %v1212
    %v1341 = vtanh.pop %v1213
    %v1342 = vtanh.pop %v1214
    %v1343 = vtanh.pop %v1215
    %v1344 = vtanh.pop %v1216
    %v1345 = vtanh.pop %v1217
    %v1346 = vtanh.pop %v1218
    %v1347 = vtanh.pop %v1219
    %v1348 = vtanh.pop %v1220
    %v1349 = vtanh.pop %v1221
    %v1350 = vtanh.pop %v1222
    %v1351 = vtanh.pop %v1223
    %v1352 = vtanh.pop %v1224
    %v1353 = vtanh.pop %v1225
    %v1354 = vtanh.pop %v1226
    %v1355 = vtanh.pop %v1227
    %v1356 = vtanh.pop %v1228
    %v1357 = vtanh.pop %v1229
    %v1358 = vtanh.pop %v1230
    %v1359 = vtanh.pop %v1231
    %v1360 = vtanh.pop %v1232
    %v1361 = vtanh.pop %v1233
    %v1362 = vtanh.pop %v1234
    %v1363 = vtanh.pop %v1235
    %v1364 = vtanh.pop %v1236
    %v1365 = vtanh.pop %v1237
    %v1366 = vtanh.pop %v1238
    %v1367 = vtanh.pop %v1239
    %v1368 = vtanh.pop %v1240
    %v1369 = vtanh.pop %v1241
    %v1370 = vld [vmem:[%s5] sm:$0x1]
    %v1372 = vlaneseq
    %v1373 = vshrl.u32 %v1372, 7
    %v1374 = vsub.s32 0, %v1373
    %v1375 = vrot.slane %v1370, %v1374
    %v1377 = vmul.f32 %v1242, %v1375
    %v1378 = vmul.f32 %v1243, %v1375
    %v1379 = vmul.f32 %v1244, %v1375
    %v1380 = vmul.f32 %v1245, %v1375
    %v1381 = vmul.f32 %v1246, %v1375
    %v1382 = vmul.f32 %v1247, %v1375
    %v1383 = vmul.f32 %v1248, %v1375
    %v1384 = vmul.f32 %v1249, %v1375
    %v1385 = vmul.f32 %v1250, %v1375
    %v1386 = vmul.f32 %v1251, %v1375
    %v1387 = vmul.f32 %v1252, %v1375
    %v1388 = vmul.f32 %v1253, %v1375
    %v1389 = vmul.f32 %v1254, %v1375
    %v1390 = vmul.f32 %v1255, %v1375
    %v1391 = vmul.f32 %v1256, %v1375
    %v1392 = vmul.f32 %v1257, %v1375
    %v1393 = vmul.f32 %v1258, %v1375
    %v1394 = vmul.f32 %v1259, %v1375
    %v1395 = vmul.f32 %v1260, %v1375
    %v1396 = vmul.f32 %v1261, %v1375
    %v1397 = vmul.f32 %v1262, %v1375
    %v1398 = vmul.f32 %v1263, %v1375
    %v1399 = vmul.f32 %v1264, %v1375
    %v1400 = vmul.f32 %v1265, %v1375
    %v1401 = vmul.f32 %v1266, %v1375
    %v1402 = vmul.f32 %v1267, %v1375
    %v1403 = vmul.f32 %v1268, %v1375
    %v1404 = vmul.f32 %v1269, %v1375
    %v1405 = vmul.f32 %v1270, %v1375
    %v1406 = vmul.f32 %v1271, %v1375
    %v1407 = vmul.f32 %v1272, %v1375
    %v1408 = vmul.f32 %v1273, %v1375
    %v1409 = vmul.f32 %v1274, %v1375
    %v1410 = vmul.f32 %v1275, %v1375
    %v1411 = vmul.f32 %v1276, %v1375
    %v1412 = vmul.f32 %v1277, %v1375
    %v1413 = vmul.f32 %v1278, %v1375
    %v1414 = vmul.f32 %v1279, %v1375
    %v1415 = vmul.f32 %v1280, %v1375
    %v1416 = vmul.f32 %v1281, %v1375
    %v1417 = vmul.f32 %v1282, %v1375
    %v1418 = vmul.f32 %v1283, %v1375
    %v1419 = vmul.f32 %v1284, %v1375
    %v1420 = vmul.f32 %v1285, %v1375
    %v1421 = vmul.f32 %v1286, %v1375
    %v1422 = vmul.f32 %v1287, %v1375
    %v1423 = vmul.f32 %v1288, %v1375
    %v1424 = vmul.f32 %v1289, %v1375
    %v1425 = vmul.f32 %v1290, %v1375
    %v1426 = vmul.f32 %v1291, %v1375
    %v1427 = vmul.f32 %v1292, %v1375
    %v1428 = vmul.f32 %v1293, %v1375
    %v1429 = vmul.f32 %v1294, %v1375
    %v1430 = vmul.f32 %v1295, %v1375
    %v1431 = vmul.f32 %v1296, %v1375
    %v1432 = vmul.f32 %v1297, %v1375
    %v1433 = vmul.f32 %v1298, %v1375
    %v1434 = vmul.f32 %v1299, %v1375
    %v1435 = vmul.f32 %v1300, %v1375
    %v1436 = vmul.f32 %v1301, %v1375
    %v1437 = vmul.f32 %v1302, %v1375
    %v1438 = vmul.f32 %v1303, %v1375
    %v1439 = vmul.f32 %v1304, %v1375
    %v1440 = vmul.f32 %v1305, %v1375
    %v1441 = vmul.f32 %v1306, %v1375
    %v1442 = vmul.f32 %v1307, %v1375
    %v1443 = vmul.f32 %v1308, %v1375
    %v1444 = vmul.f32 %v1309, %v1375
    %v1445 = vmul.f32 %v1310, %v1375
    %v1446 = vmul.f32 %v1311, %v1375
    %v1447 = vmul.f32 %v1312, %v1375
    %v1448 = vmul.f32 %v1313, %v1375
    %v1449 = vmul.f32 %v1314, %v1375
    %v1450 = vmul.f32 %v1315, %v1375
    %v1451 = vmul.f32 %v1316, %v1375
    %v1452 = vmul.f32 %v1317, %v1375
    %v1453 = vmul.f32 %v1318, %v1375
    %v1454 = vmul.f32 %v1319, %v1375
    %v1455 = vmul.f32 %v1320, %v1375
    %v1456 = vmul.f32 %v1321, %v1375
    %v1457 = vmul.f32 %v1322, %v1375
    %v1458 = vmul.f32 %v1323, %v1375
    %v1459 = vmul.f32 %v1324, %v1375
    %v1460 = vmul.f32 %v1325, %v1375
    %v1461 = vmul.f32 %v1326, %v1375
    %v1462 = vmul.f32 %v1327, %v1375
    %v1463 = vmul.f32 %v1328, %v1375
    %v1464 = vmul.f32 %v1329, %v1375
    %v1465 = vmul.f32 %v1330, %v1375
    %v1466 = vmul.f32 %v1331, %v1375
    %v1467 = vmul.f32 %v1332, %v1375
    %v1468 = vmul.f32 %v1333, %v1375
    %v1469 = vmul.f32 %v1334, %v1375
    %v1470 = vmul.f32 %v1335, %v1375
    %v1471 = vmul.f32 %v1336, %v1375
    %v1472 = vmul.f32 %v1337, %v1375
    %v1473 = vmul.f32 %v1338, %v1375
    %v1474 = vmul.f32 %v1339, %v1375
    %v1475 = vmul.f32 %v1340, %v1375
    %v1476 = vmul.f32 %v1341, %v1375
    %v1477 = vmul.f32 %v1342, %v1375
    %v1478 = vmul.f32 %v1343, %v1375
    %v1479 = vmul.f32 %v1344, %v1375
    %v1480 = vmul.f32 %v1345, %v1375
    %v1481 = vmul.f32 %v1346, %v1375
    %v1482 = vmul.f32 %v1347, %v1375
    %v1483 = vmul.f32 %v1348, %v1375
    %v1484 = vmul.f32 %v1349, %v1375
    %v1485 = vmul.f32 %v1350, %v1375
    %v1486 = vmul.f32 %v1351, %v1375
    %v1487 = vmul.f32 %v1352, %v1375
    %v1488 = vmul.f32 %v1353, %v1375
    %v1489 = vmul.f32 %v1354, %v1375
    %v1490 = vmul.f32 %v1355, %v1375
    %v1491 = vmul.f32 %v1356, %v1375
    %v1492 = vmul.f32 %v1357, %v1375
    %v1493 = vmul.f32 %v1358, %v1375
    %v1494 = vmul.f32 %v1359, %v1375
    %v1495 = vmul.f32 %v1360, %v1375
    %v1496 = vmul.f32 %v1361, %v1375
    %v1497 = vmul.f32 %v1362, %v1375
    %v1498 = vmul.f32 %v1363, %v1375
    %v1499 = vmul.f32 %v1364, %v1375
    %v1500 = vmul.f32 %v1365, %v1375
    %v1501 = vmul.f32 %v1366, %v1375
    %v1502 = vmul.f32 %v1367, %v1375
    %v1503 = vmul.f32 %v1368, %v1375
    %v1504 = vmul.f32 %v1369, %v1375
    %1505 = vadd.xlane.f32.xlu0 %v1377
    %v1506 = vpop.xlane.xlu0 %1505
    %1507 = vadd.xlane.f32.xlu0 %v1378
    %v1508 = vpop.xlane.xlu0 %1507
    %1509 = vadd.xlane.f32.xlu0 %v1379
    %v1510 = vpop.xlane.xlu0 %1509
    %1511 = vadd.xlane.f32.xlu0 %v1380
    %v1512 = vpop.xlane.xlu0 %1511
    %1513 = vadd.xlane.f32.xlu0 %v1381
    %v1514 = vpop.xlane.xlu0 %1513
    %1515 = vadd.xlane.f32.xlu0 %v1382
    %v1516 = vpop.xlane.xlu0 %1515
    %1517 = vadd.xlane.f32.xlu0 %v1383
    %v1518 = vpop.xlane.xlu0 %1517
    %1519 = vadd.xlane.f32.xlu0 %v1384
    %v1520 = vpop.xlane.xlu0 %1519
    %1521 = vadd.xlane.f32.xlu0 %v1385
    %v1522 = vpop.xlane.xlu0 %1521
    %1523 = vadd.xlane.f32.xlu0 %v1386
    %v1524 = vpop.xlane.xlu0 %1523
    %1525 = vadd.xlane.f32.xlu0 %v1387
    %v1526 = vpop.xlane.xlu0 %1525
    %1527 = vadd.xlane.f32.xlu0 %v1388
    %v1528 = vpop.xlane.xlu0 %1527
    %1529 = vadd.xlane.f32.xlu0 %v1389
    %v1530 = vpop.xlane.xlu0 %1529
    %1531 = vadd.xlane.f32.xlu0 %v1390
    %v1532 = vpop.xlane.xlu0 %1531
    %1533 = vadd.xlane.f32.xlu0 %v1391
    %v1534 = vpop.xlane.xlu0 %1533
    %1535 = vadd.xlane.f32.xlu0 %v1392
    %v1536 = vpop.xlane.xlu0 %1535
    %1537 = vadd.xlane.f32.xlu0 %v1393
    %v1538 = vpop.xlane.xlu0 %1537
    %1539 = vadd.xlane.f32.xlu0 %v1394
    %v1540 = vpop.xlane.xlu0 %1539
    %1541 = vadd.xlane.f32.xlu0 %v1395
    %v1542 = vpop.xlane.xlu0 %1541
    %1543 = vadd.xlane.f32.xlu0 %v1396
    %v1544 = vpop.xlane.xlu0 %1543
    %1545 = vadd.xlane.f32.xlu0 %v1397
    %v1546 = vpop.xlane.xlu0 %1545
    %1547 = vadd.xlane.f32.xlu0 %v1398
    %v1548 = vpop.xlane.xlu0 %1547
    %1549 = vadd.xlane.f32.xlu0 %v1399
    %v1550 = vpop.xlane.xlu0 %1549
    %1551 = vadd.xlane.f32.xlu0 %v1400
    %v1552 = vpop.xlane.xlu0 %1551
    %1553 = vadd.xlane.f32.xlu0 %v1401
    %v1554 = vpop.xlane.xlu0 %1553
    %1555 = vadd.xlane.f32.xlu0 %v1402
    %v1556 = vpop.xlane.xlu0 %1555
    %1557 = vadd.xlane.f32.xlu0 %v1403
    %v1558 = vpop.xlane.xlu0 %1557
    %1559 = vadd.xlane.f32.xlu0 %v1404
    %v1560 = vpop.xlane.xlu0 %1559
    %1561 = vadd.xlane.f32.xlu0 %v1405
    %v1562 = vpop.xlane.xlu0 %1561
    %1563 = vadd.xlane.f32.xlu0 %v1406
    %v1564 = vpop.xlane.xlu0 %1563
    %1565 = vadd.xlane.f32.xlu0 %v1407
    %v1566 = vpop.xlane.xlu0 %1565
    %1567 = vadd.xlane.f32.xlu0 %v1408
    %v1568 = vpop.xlane.xlu0 %1567
    %1569 = vadd.xlane.f32.xlu0 %v1409
    %v1570 = vpop.xlane.xlu0 %1569
    %1571 = vadd.xlane.f32.xlu0 %v1410
    %v1572 = vpop.xlane.xlu0 %1571
    %1573 = vadd.xlane.f32.xlu0 %v1411
    %v1574 = vpop.xlane.xlu0 %1573
    %1575 = vadd.xlane.f32.xlu0 %v1412
    %v1576 = vpop.xlane.xlu0 %1575
    %1577 = vadd.xlane.f32.xlu0 %v1413
    %v1578 = vpop.xlane.xlu0 %1577
    %1579 = vadd.xlane.f32.xlu0 %v1414
    %v1580 = vpop.xlane.xlu0 %1579
    %1581 = vadd.xlane.f32.xlu0 %v1415
    %v1582 = vpop.xlane.xlu0 %1581
    %1583 = vadd.xlane.f32.xlu0 %v1416
    %v1584 = vpop.xlane.xlu0 %1583
    %1585 = vadd.xlane.f32.xlu0 %v1417
    %v1586 = vpop.xlane.xlu0 %1585
    %1587 = vadd.xlane.f32.xlu0 %v1418
    %v1588 = vpop.xlane.xlu0 %1587
    %1589 = vadd.xlane.f32.xlu0 %v1419
    %v1590 = vpop.xlane.xlu0 %1589
    %1591 = vadd.xlane.f32.xlu0 %v1420
    %v1592 = vpop.xlane.xlu0 %1591
    %1593 = vadd.xlane.f32.xlu0 %v1421
    %v1594 = vpop.xlane.xlu0 %1593
    %1595 = vadd.xlane.f32.xlu0 %v1422
    %v1596 = vpop.xlane.xlu0 %1595
    %1597 = vadd.xlane.f32.xlu0 %v1423
    %v1598 = vpop.xlane.xlu0 %1597
    %1599 = vadd.xlane.f32.xlu0 %v1424
    %v1600 = vpop.xlane.xlu0 %1599
    %1601 = vadd.xlane.f32.xlu0 %v1425
    %v1602 = vpop.xlane.xlu0 %1601
    %1603 = vadd.xlane.f32.xlu0 %v1426
    %v1604 = vpop.xlane.xlu0 %1603
    %1605 = vadd.xlane.f32.xlu0 %v1427
    %v1606 = vpop.xlane.xlu0 %1605
    %1607 = vadd.xlane.f32.xlu0 %v1428
    %v1608 = vpop.xlane.xlu0 %1607
    %1609 = vadd.xlane.f32.xlu0 %v1429
    %v1610 = vpop.xlane.xlu0 %1609
    %1611 = vadd.xlane.f32.xlu0 %v1430
    %v1612 = vpop.xlane.xlu0 %1611
    %1613 = vadd.xlane.f32.xlu0 %v1431
    %v1614 = vpop.xlane.xlu0 %1613
    %1615 = vadd.xlane.f32.xlu0 %v1432
    %v1616 = vpop.xlane.xlu0 %1615
    %1617 = vadd.xlane.f32.xlu0 %v1433
    %v1618 = vpop.xlane.xlu0 %1617
    %1619 = vadd.xlane.f32.xlu0 %v1434
    %v1620 = vpop.xlane.xlu0 %1619
    %1621 = vadd.xlane.f32.xlu0 %v1435
    %v1622 = vpop.xlane.xlu0 %1621
    %1623 = vadd.xlane.f32.xlu0 %v1436
    %v1624 = vpop.xlane.xlu0 %1623
    %1625 = vadd.xlane.f32.xlu0 %v1437
    %v1626 = vpop.xlane.xlu0 %1625
    %1627 = vadd.xlane.f32.xlu0 %v1438
    %v1628 = vpop.xlane.xlu0 %1627
    %1629 = vadd.xlane.f32.xlu0 %v1439
    %v1630 = vpop.xlane.xlu0 %1629
    %1631 = vadd.xlane.f32.xlu0 %v1440
    %v1632 = vpop.xlane.xlu0 %1631
    %1633 = vadd.xlane.f32.xlu0 %v1441
    %v1634 = vpop.xlane.xlu0 %1633
    %1635 = vadd.xlane.f32.xlu0 %v1442
    %v1636 = vpop.xlane.xlu0 %1635
    %1637 = vadd.xlane.f32.xlu0 %v1443
    %v1638 = vpop.xlane.xlu0 %1637
    %1639 = vadd.xlane.f32.xlu0 %v1444
    %v1640 = vpop.xlane.xlu0 %1639
    %1641 = vadd.xlane.f32.xlu0 %v1445
    %v1642 = vpop.xlane.xlu0 %1641
    %1643 = vadd.xlane.f32.xlu0 %v1446
    %v1644 = vpop.xlane.xlu0 %1643
    %1645 = vadd.xlane.f32.xlu0 %v1447
    %v1646 = vpop.xlane.xlu0 %1645
    %1647 = vadd.xlane.f32.xlu0 %v1448
    %v1648 = vpop.xlane.xlu0 %1647
    %1649 = vadd.xlane.f32.xlu0 %v1449
    %v1650 = vpop.xlane.xlu0 %1649
    %1651 = vadd.xlane.f32.xlu0 %v1450
    %v1652 = vpop.xlane.xlu0 %1651
    %1653 = vadd.xlane.f32.xlu0 %v1451
    %v1654 = vpop.xlane.xlu0 %1653
    %1655 = vadd.xlane.f32.xlu0 %v1452
    %v1656 = vpop.xlane.xlu0 %1655
    %1657 = vadd.xlane.f32.xlu0 %v1453
    %v1658 = vpop.xlane.xlu0 %1657
    %1659 = vadd.xlane.f32.xlu0 %v1454
    %v1660 = vpop.xlane.xlu0 %1659
    %1661 = vadd.xlane.f32.xlu0 %v1455
    %v1662 = vpop.xlane.xlu0 %1661
    %1663 = vadd.xlane.f32.xlu0 %v1456
    %v1664 = vpop.xlane.xlu0 %1663
    %1665 = vadd.xlane.f32.xlu0 %v1457
    %v1666 = vpop.xlane.xlu0 %1665
    %1667 = vadd.xlane.f32.xlu0 %v1458
    %v1668 = vpop.xlane.xlu0 %1667
    %1669 = vadd.xlane.f32.xlu0 %v1459
    %v1670 = vpop.xlane.xlu0 %1669
    %1671 = vadd.xlane.f32.xlu0 %v1460
    %v1672 = vpop.xlane.xlu0 %1671
    %1673 = vadd.xlane.f32.xlu0 %v1461
    %v1674 = vpop.xlane.xlu0 %1673
    %1675 = vadd.xlane.f32.xlu0 %v1462
    %v1676 = vpop.xlane.xlu0 %1675
    %1677 = vadd.xlane.f32.xlu0 %v1463
    %v1678 = vpop.xlane.xlu0 %1677
    %1679 = vadd.xlane.f32.xlu0 %v1464
    %v1680 = vpop.xlane.xlu0 %1679
    %1681 = vadd.xlane.f32.xlu0 %v1465
    %v1682 = vpop.xlane.xlu0 %1681
    %1683 = vadd.xlane.f32.xlu0 %v1466
    %v1684 = vpop.xlane.xlu0 %1683
    %1685 = vadd.xlane.f32.xlu0 %v1467
    %v1686 = vpop.xlane.xlu0 %1685
    %1687 = vadd.xlane.f32.xlu0 %v1468
    %v1688 = vpop.xlane.xlu0 %1687
    %1689 = vadd.xlane.f32.xlu0 %v1469
    %v1690 = vpop.xlane.xlu0 %1689
    %1691 = vadd.xlane.f32.xlu0 %v1470
    %v1692 = vpop.xlane.xlu0 %1691
    %1693 = vadd.xlane.f32.xlu0 %v1471
    %v1694 = vpop.xlane.xlu0 %1693
    %1695 = vadd.xlane.f32.xlu0 %v1472
    %v1696 = vpop.xlane.xlu0 %1695
    %1697 = vadd.xlane.f32.xlu0 %v1473
    %v1698 = vpop.xlane.xlu0 %1697
    %1699 = vadd.xlane.f32.xlu0 %v1474
    %v1700 = vpop.xlane.xlu0 %1699
    %1701 = vadd.xlane.f32.xlu0 %v1475
    %v1702 = vpop.xlane.xlu0 %1701
    %1703 = vadd.xlane.f32.xlu0 %v1476
    %v1704 = vpop.xlane.xlu0 %1703
    %1705 = vadd.xlane.f32.xlu0 %v1477
    %v1706 = vpop.xlane.xlu0 %1705
    %1707 = vadd.xlane.f32.xlu0 %v1478
    %v1708 = vpop.xlane.xlu0 %1707
    %1709 = vadd.xlane.f32.xlu0 %v1479
    %v1710 = vpop.xlane.xlu0 %1709
    %1711 = vadd.xlane.f32.xlu0 %v1480
    %v1712 = vpop.xlane.xlu0 %1711
    %1713 = vadd.xlane.f32.xlu0 %v1481
    %v1714 = vpop.xlane.xlu0 %1713
    %1715 = vadd.xlane.f32.xlu0 %v1482
    %v1716 = vpop.xlane.xlu0 %1715
    %1717 = vadd.xlane.f32.xlu0 %v1483
    %v1718 = vpop.xlane.xlu0 %1717
    %1719 = vadd.xlane.f32.xlu0 %v1484
    %v1720 = vpop.xlane.xlu0 %1719
    %1721 = vadd.xlane.f32.xlu0 %v1485
    %v1722 = vpop.xlane.xlu0 %1721
    %1723 = vadd.xlane.f32.xlu0 %v1486
    %v1724 = vpop.xlane.xlu0 %1723
    %1725 = vadd.xlane.f32.xlu0 %v1487
    %v1726 = vpop.xlane.xlu0 %1725
    %1727 = vadd.xlane.f32.xlu0 %v1488
    %v1728 = vpop.xlane.xlu0 %1727
    %1729 = vadd.xlane.f32.xlu0 %v1489
    %v1730 = vpop.xlane.xlu0 %1729
    %1731 = vadd.xlane.f32.xlu0 %v1490
    %v1732 = vpop.xlane.xlu0 %1731
    %1733 = vadd.xlane.f32.xlu0 %v1491
    %v1734 = vpop.xlane.xlu0 %1733
    %1735 = vadd.xlane.f32.xlu0 %v1492
    %v1736 = vpop.xlane.xlu0 %1735
    %1737 = vadd.xlane.f32.xlu0 %v1493
    %v1738 = vpop.xlane.xlu0 %1737
    %1739 = vadd.xlane.f32.xlu0 %v1494
    %v1740 = vpop.xlane.xlu0 %1739
    %1741 = vadd.xlane.f32.xlu0 %v1495
    %v1742 = vpop.xlane.xlu0 %1741
    %1743 = vadd.xlane.f32.xlu0 %v1496
    %v1744 = vpop.xlane.xlu0 %1743
    %1745 = vadd.xlane.f32.xlu0 %v1497
    %v1746 = vpop.xlane.xlu0 %1745
    %1747 = vadd.xlane.f32.xlu0 %v1498
    %v1748 = vpop.xlane.xlu0 %1747
    %1749 = vadd.xlane.f32.xlu0 %v1499
    %v1750 = vpop.xlane.xlu0 %1749
    %1751 = vadd.xlane.f32.xlu0 %v1500
    %v1752 = vpop.xlane.xlu0 %1751
    %1753 = vadd.xlane.f32.xlu0 %v1501
    %v1754 = vpop.xlane.xlu0 %1753
    %1755 = vadd.xlane.f32.xlu0 %v1502
    %v1756 = vpop.xlane.xlu0 %1755
    %1757 = vadd.xlane.f32.xlu0 %v1503
    %v1758 = vpop.xlane.xlu0 %1757
    %1759 = vadd.xlane.f32.xlu0 %v1504
    %v1760 = vpop.xlane.xlu0 %1759
    %v1761 = vld [vmem:[#allocation7] sm:$0xff]
    %vm1762 = vcmp.gt.f32.partialorder %v1761, 0.0
    %v1763 = vadd.f32 %v1506, -103.27893
    %v1764 = vadd.f32 %v1508, -103.27893
    %v1765 = vadd.f32 %v1510, -103.27893
    %v1766 = vadd.f32 %v1512, -103.27893
    %v1767 = vadd.f32 %v1514, -103.27893
    %v1768 = vadd.f32 %v1516, -103.27893
    %v1769 = vadd.f32 %v1518, -103.27893
    %v1770 = vadd.f32 %v1520, -103.27893
    %v1771 = vadd.f32 %v1522, -103.27893
    %v1772 = vadd.f32 %v1524, -103.27893
    %v1773 = vadd.f32 %v1526, -103.27893
    %v1774 = vadd.f32 %v1528, -103.27893
    %v1775 = vadd.f32 %v1530, -103.27893
    %v1776 = vadd.f32 %v1532, -103.27893
    %v1777 = vadd.f32 %v1534, -103.27893
    %v1778 = vadd.f32 %v1536, -103.27893
    %v1779 = vadd.f32 %v1538, -103.27893
    %v1780 = vadd.f32 %v1540, -103.27893
    %v1781 = vadd.f32 %v1542, -103.27893
    %v1782 = vadd.f32 %v1544, -103.27893
    %v1783 = vadd.f32 %v1546, -103.27893
    %v1784 = vadd.f32 %v1548, -103.27893
    %v1785 = vadd.f32 %v1550, -103.27893
    %v1786 = vadd.f32 %v1552, -103.27893
    %v1787 = vadd.f32 %v1554, -103.27893
    %v1788 = vadd.f32 %v1556, -103.27893
    %v1789 = vadd.f32 %v1558, -103.27893
    %v1790 = vadd.f32 %v1560, -103.27893
    %v1791 = vadd.f32 %v1562, -103.27893
    %v1792 = vadd.f32 %v1564, -103.27893
    %v1793 = vadd.f32 %v1566, -103.27893
    %v1794 = vadd.f32 %v1568, -103.27893
    %v1795 = vadd.f32 %v1570, -103.27893
    %v1796 = vadd.f32 %v1572, -103.27893
    %v1797 = vadd.f32 %v1574, -103.27893
    %v1798 = vadd.f32 %v1576, -103.27893
    %v1799 = vadd.f32 %v1578, -103.27893
    %v1800 = vadd.f32 %v1580, -103.27893
    %v1801 = vadd.f32 %v1582, -103.27893
    %v1802 = vadd.f32 %v1584, -103.27893
    %v1803 = vadd.f32 %v1586, -103.27893
    %v1804 = vadd.f32 %v1588, -103.27893
    %v1805 = vadd.f32 %v1590, -103.27893
    %v1806 = vadd.f32 %v1592, -103.27893
    %v1807 = vadd.f32 %v1594, -103.27893
    %v1808 = vadd.f32 %v1596, -103.27893
    %v1809 = vadd.f32 %v1598, -103.27893
    %v1810 = vadd.f32 %v1600, -103.27893
    %v1811 = vadd.f32 %v1602, -103.27893
    %v1812 = vadd.f32 %v1604, -103.27893
    %v1813 = vadd.f32 %v1606, -103.27893
    %v1814 = vadd.f32 %v1608, -103.27893
    %v1815 = vadd.f32 %v1610, -103.27893
    %v1816 = vadd.f32 %v1612, -103.27893
    %v1817 = vadd.f32 %v1614, -103.27893
    %v1818 = vadd.f32 %v1616, -103.27893
    %v1819 = vadd.f32 %v1618, -103.27893
    %v1820 = vadd.f32 %v1620, -103.27893
    %v1821 = vadd.f32 %v1622, -103.27893
    %v1822 = vadd.f32 %v1624, -103.27893
    %v1823 = vadd.f32 %v1626, -103.27893
    %v1824 = vadd.f32 %v1628, -103.27893
    %v1825 = vadd.f32 %v1630, -103.27893
    %v1826 = vadd.f32 %v1632, -103.27893
    %v1827 = vadd.f32 %v1634, -103.27893
    %v1828 = vadd.f32 %v1636, -103.27893
    %v1829 = vadd.f32 %v1638, -103.27893
    %v1830 = vadd.f32 %v1640, -103.27893
    %v1831 = vadd.f32 %v1642, -103.27893
    %v1832 = vadd.f32 %v1644, -103.27893
    %v1833 = vadd.f32 %v1646, -103.27893
    %v1834 = vadd.f32 %v1648, -103.27893
    %v1835 = vadd.f32 %v1650, -103.27893
    %v1836 = vadd.f32 %v1652, -103.27893
    %v1837 = vadd.f32 %v1654, -103.27893
    %v1838 = vadd.f32 %v1656, -103.27893
    %v1839 = vadd.f32 %v1658, -103.27893
    %v1840 = vadd.f32 %v1660, -103.27893
    %v1841 = vadd.f32 %v1662, -103.27893
    %v1842 = vadd.f32 %v1664, -103.27893
    %v1843 = vadd.f32 %v1666, -103.27893
    %v1844 = vadd.f32 %v1668, -103.27893
    %v1845 = vadd.f32 %v1670, -103.27893
    %v1846 = vadd.f32 %v1672, -103.27893
    %v1847 = vadd.f32 %v1674, -103.27893
    %v1848 = vadd.f32 %v1676, -103.27893
    %v1849 = vadd.f32 %v1678, -103.27893
    %v1850 = vadd.f32 %v1680, -103.27893
    %v1851 = vadd.f32 %v1682, -103.27893
    %v1852 = vadd.f32 %v1684, -103.27893
    %v1853 = vadd.f32 %v1686, -103.27893
    %v1854 = vadd.f32 %v1688, -103.27893
    %v1855 = vadd.f32 %v1690, -103.27893
    %v1856 = vadd.f32 %v1692, -103.27893
    %v1857 = vadd.f32 %v1694, -103.27893
    %v1858 = vadd.f32 %v1696, -103.27893
    %v1859 = vadd.f32 %v1698, -103.27893
    %v1860 = vadd.f32 %v1700, -103.27893
    %v1861 = vadd.f32 %v1702, -103.27893
    %v1862 = vadd.f32 %v1704, -103.27893
    %v1863 = vadd.f32 %v1706, -103.27893
    %v1864 = vadd.f32 %v1708, -103.27893
    %v1865 = vadd.f32 %v1710, -103.27893
    %v1866 = vadd.f32 %v1712, -103.27893
    %v1867 = vadd.f32 %v1714, -103.27893
    %v1868 = vadd.f32 %v1716, -103.27893
    %v1869 = vadd.f32 %v1718, -103.27893
    %v1870 = vadd.f32 %v1720, -103.27893
    %v1871 = vadd.f32 %v1722, -103.27893
    %v1872 = vadd.f32 %v1724, -103.27893
    %v1873 = vadd.f32 %v1726, -103.27893
    %v1874 = vadd.f32 %v1728, -103.27893
    %v1875 = vadd.f32 %v1730, -103.27893
    %v1876 = vadd.f32 %v1732, -103.27893
    %v1877 = vadd.f32 %v1734, -103.27893
    %v1878 = vadd.f32 %v1736, -103.27893
    %v1879 = vadd.f32 %v1738, -103.27893
    %v1880 = vadd.f32 %v1740, -103.27893
    %v1881 = vadd.f32 %v1742, -103.27893
    %v1882 = vadd.f32 %v1744, -103.27893
    %v1883 = vadd.f32 %v1746, -103.27893
    %v1884 = vadd.f32 %v1748, -103.27893
    %v1885 = vadd.f32 %v1750, -103.27893
    %v1886 = vadd.f32 %v1752, -103.27893
    %v1887 = vadd.f32 %v1754, -103.27893
    %v1888 = vadd.f32 %v1756, -103.27893
    %v1889 = vadd.f32 %v1758, -103.27893
    %v1890 = vadd.f32 %v1760, -103.27893
    %v2019 = vlaneseq
    %v2020 = vand.u32 %v2019, 127
    %v2021 = vlaneseq
    %v2022 = vshrl.u32 %v2021, 7
    %v2023 = vsub.s32 %v2020, %v2022
    %v2024 = vrot.slane %v1506, %v2023
    %v2025 = vadd.s32 %v2020, 4294967288
    %v2026 = vlaneseq
    %v2027 = vshrl.u32 %v2026, 7
    %v2028 = vsub.s32 %v2025, %v2027
    %v2029 = vrot.slane %v1508, %v2028
    %vm2030 = vcmask 130112
    %v2031 = vsel %vm2030, %v2029, %v2024
    %v2032 = vadd.s32 %v2020, 4294967280
    %v2033 = vlaneseq
    %v2034 = vshrl.u32 %v2033, 7
    %v2035 = vsub.s32 %v2032, %v2034
    %v2036 = vrot.slane %v1510, %v2035
    %vm2037 = vcmask 195712
    %v2038 = vsel %vm2037, %v2036, %v2031
    %v2039 = vadd.s32 %v2020, 4294967272
    %v2040 = vlaneseq
    %v2041 = vshrl.u32 %v2040, 7
    %v2042 = vsub.s32 %v2039, %v2041
    %v2043 = vrot.slane %v1512, %v2042
    %vm2044 = vcmask 261312
    %v2045 = vsel %vm2044, %v2043, %v2038
    %v2046 = vadd.s32 %v2020, 4294967264
    %v2047 = vlaneseq
    %v2048 = vshrl.u32 %v2047, 7
    %v2049 = vsub.s32 %v2046, %v2048
    %v2050 = vrot.slane %v1514, %v2049
    %vm2051 = vcmask 326912
    %v2052 = vsel %vm2051, %v2050, %v2045
    %v2053 = vadd.s32 %v2020, 4294967256
    %v2054 = vlaneseq
    %v2055 = vshrl.u32 %v2054, 7
    %v2056 = vsub.s32 %v2053, %v2055
    %v2057 = vrot.slane %v1516, %v2056
    %vm2058 = vcmask 392512
    %v2059 = vsel %vm2058, %v2057, %v2052
    %v2060 = vadd.s32 %v2020, 4294967248
    %v2061 = vlaneseq
    %v2062 = vshrl.u32 %v2061, 7
    %v2063 = vsub.s32 %v2060, %v2062
    %v2064 = vrot.slane %v1518, %v2063
    %vm2065 = vcmask 458112
    %v2066 = vsel %vm2065, %v2064, %v2059
    %v2067 = vadd.s32 %v2020, 4294967240
    %v2068 = vlaneseq
    %v2069 = vshrl.u32 %v2068, 7
    %v2070 = vsub.s32 %v2067, %v2069
    %v2071 = vrot.slane %v1520, %v2070
    %vm2072 = vcmask 523712
    %v2073 = vsel %vm2072, %v2071, %v2066
    %v2074 = vadd.s32 %v2020, 4294967232
    %v2075 = vlaneseq
    %v2076 = vshrl.u32 %v2075, 7
    %v2077 = vsub.s32 %v2074, %v2076
    %v2078 = vrot.slane %v1522, %v2077
    %vm2079 = vcmask 589312
    %v2080 = vsel %vm2079, %v2078, %v2073
    %v2081 = vadd.s32 %v2020, 4294967224
    %v2082 = vlaneseq
    %v2083 = vshrl.u32 %v2082, 7
    %v2084 = vsub.s32 %v2081, %v2083
    %v2085 = vrot.slane %v1524, %v2084
    %vm2086 = vcmask 654912
    %v2087 = vsel %vm2086, %v2085, %v2080
    %v2088 = vadd.s32 %v2020, 4294967216
    %v2089 = vlaneseq
    %v2090 = vshrl.u32 %v2089, 7
    %v2091 = vsub.s32 %v2088, %v2090
    %v2092 = vrot.slane %v1526, %v2091
    %vm2093 = vcmask 720512
    %v2094 = vsel %vm2093, %v2092, %v2087
    %v2095 = vadd.s32 %v2020, 4294967208
    %v2096 = vlaneseq
    %v2097 = vshrl.u32 %v2096, 7
    %v2098 = vsub.s32 %v2095, %v2097
    %v2099 = vrot.slane %v1528, %v2098
    %vm2100 = vcmask 786112
    %v2101 = vsel %vm2100, %v2099, %v2094
    %v2102 = vadd.s32 %v2020, 4294967200
    %v2103 = vlaneseq
    %v2104 = vshrl.u32 %v2103, 7
    %v2105 = vsub.s32 %v2102, %v2104
    %v2106 = vrot.slane %v1530, %v2105
    %vm2107 = vcmask 851712
    %v2108 = vsel %vm2107, %v2106, %v2101
    %v2109 = vadd.s32 %v2020, 4294967192
    %v2110 = vlaneseq
    %v2111 = vshrl.u32 %v2110, 7
    %v2112 = vsub.s32 %v2109, %v2111
    %v2113 = vrot.slane %v1532, %v2112
    %vm2114 = vcmask 917312
    %v2115 = vsel %vm2114, %v2113, %v2108
    %v2116 = vadd.s32 %v2020, 4294967184
    %v2117 = vlaneseq
    %v2118 = vshrl.u32 %v2117, 7
    %v2119 = vsub.s32 %v2116, %v2118
    %v2120 = vrot.slane %v1534, %v2119
    %vm2121 = vcmask 982912
    %v2122 = vsel %vm2121, %v2120, %v2115
    %v2123 = vadd.s32 %v2020, 4294967176
    %v2124 = vlaneseq
    %v2125 = vshrl.u32 %v2124, 7
    %v2126 = vsub.s32 %v2123, %v2125
    %v2127 = vrot.slane %v1536, %v2126
    %vm2128 = vcmask 1048512
    %v2129 = vsel %vm2128, %v2127, %v2122
    %v2130 = vlaneseq
    %v2131 = vshrl.u32 %v2130, 7
    %v2132 = vsub.s32 %v2020, %v2131
    %v2133 = vrot.slane %v1538, %v2132
    %v2134 = vlaneseq
    %v2135 = vshrl.u32 %v2134, 7
    %v2136 = vsub.s32 %v2025, %v2135
    %v2137 = vrot.slane %v1540, %v2136
    %v2138 = vsel %vm2030, %v2137, %v2133
    %v2139 = vlaneseq
    %v2140 = vshrl.u32 %v2139, 7
    %v2141 = vsub.s32 %v2032, %v2140
    %v2142 = vrot.slane %v1542, %v2141
    %v2143 = vsel %vm2037, %v2142, %v2138
    %v2144 = vlaneseq
    %v2145 = vshrl.u32 %v2144, 7
    %v2146 = vsub.s32 %v2039, %v2145
    %v2147 = vrot.slane %v1544, %v2146
    %v2148 = vsel %vm2044, %v2147, %v2143
    %v2149 = vlaneseq
    %v2150 = vshrl.u32 %v2149, 7
    %v2151 = vsub.s32 %v2046, %v2150
    %v2152 = vrot.slane %v1546, %v2151
    %v2153 = vsel %vm2051, %v2152, %v2148
    %v2154 = vlaneseq
    %v2155 = vshrl.u32 %v2154, 7
    %v2156 = vsub.s32 %v2053, %v2155
    %v2157 = vrot.slane %v1548, %v2156
    %v2158 = vsel %vm2058, %v2157, %v2153
    %v2159 = vlaneseq
    %v2160 = vshrl.u32 %v2159, 7
    %v2161 = vsub.s32 %v2060, %v2160
    %v2162 = vrot.slane %v1550, %v2161
    %v2163 = vsel %vm2065, %v2162, %v2158
    %v2164 = vlaneseq
    %v2165 = vshrl.u32 %v2164, 7
    %v2166 = vsub.s32 %v2067, %v2165
    %v2167 = vrot.slane %v1552, %v2166
    %v2168 = vsel %vm2072, %v2167, %v2163
    %v2169 = vlaneseq
    %v2170 = vshrl.u32 %v2169, 7
    %v2171 = vsub.s32 %v2074, %v2170
    %v2172 = vrot.slane %v1554, %v2171
    %v2173 = vsel %vm2079, %v2172, %v2168
    %v2174 = vlaneseq
    %v2175 = vshrl.u32 %v2174, 7
    %v2176 = vsub.s32 %v2081, %v2175
    %v2177 = vrot.slane %v1556, %v2176
    %v2178 = vsel %vm2086, %v2177, %v2173
    %v2179 = vlaneseq
    %v2180 = vshrl.u32 %v2179, 7
    %v2181 = vsub.s32 %v2088, %v2180
    %v2182 = vrot.slane %v1558, %v2181
    %v2183 = vsel %vm2093, %v2182, %v2178
    %v2184 = vlaneseq
    %v2185 = vshrl.u32 %v2184, 7
    %v2186 = vsub.s32 %v2095, %v2185
    %v2187 = vrot.slane %v1560, %v2186
    %v2188 = vsel %vm2100, %v2187, %v2183
    %v2189 = vlaneseq
    %v2190 = vshrl.u32 %v2189, 7
    %v2191 = vsub.s32 %v2102, %v2190
    %v2192 = vrot.slane %v1562, %v2191
    %v2193 = vsel %vm2107, %v2192, %v2188
    %v2194 = vlaneseq
    %v2195 = vshrl.u32 %v2194, 7
    %v2196 = vsub.s32 %v2109, %v2195
    %v2197 = vrot.slane %v1564, %v2196
    %v2198 = vsel %vm2114, %v2197, %v2193
    %v2199 = vlaneseq
    %v2200 = vshrl.u32 %v2199, 7
    %v2201 = vsub.s32 %v2116, %v2200
    %v2202 = vrot.slane %v1566, %v2201
    %v2203 = vsel %vm2121, %v2202, %v2198
    %v2204 = vlaneseq
    %v2205 = vshrl.u32 %v2204, 7
    %v2206 = vsub.s32 %v2123, %v2205
    %v2207 = vrot.slane %v1568, %v2206
    %v2208 = vsel %vm2128, %v2207, %v2203
    %v2209 = vlaneseq
    %v2210 = vshrl.u32 %v2209, 7
    %v2211 = vsub.s32 %v2020, %v2210
    %v2212 = vrot.slane %v1570, %v2211
    %v2213 = vlaneseq
    %v2214 = vshrl.u32 %v2213, 7
    %v2215 = vsub.s32 %v2025, %v2214
    %v2216 = vrot.slane %v1572, %v2215
    %v2217 = vsel %vm2030, %v2216, %v2212
    %v2218 = vlaneseq
    %v2219 = vshrl.u32 %v2218, 7
    %v2220 = vsub.s32 %v2032, %v2219
    %v2221 = vrot.slane %v1574, %v2220
    %v2222 = vsel %vm2037, %v2221, %v2217
    %v2223 = vlaneseq
    %v2224 = vshrl.u32 %v2223, 7
    %v2225 = vsub.s32 %v2039, %v2224
    %v2226 = vrot.slane %v1576, %v2225
    %v2227 = vsel %vm2044, %v2226, %v2222
    %v2228 = vlaneseq
    %v2229 = vshrl.u32 %v2228, 7
    %v2230 = vsub.s32 %v2046, %v2229
    %v2231 = vrot.slane %v1578, %v2230
    %v2232 = vsel %vm2051, %v2231, %v2227
    %v2233 = vlaneseq
    %v2234 = vshrl.u32 %v2233, 7
    %v2235 = vsub.s32 %v2053, %v2234
    %v2236 = vrot.slane %v1580, %v2235
    %v2237 = vsel %vm2058, %v2236, %v2232
    %v2238 = vlaneseq
    %v2239 = vshrl.u32 %v2238, 7
    %v2240 = vsub.s32 %v2060, %v2239
    %v2241 = vrot.slane %v1582, %v2240
    %v2242 = vsel %vm2065, %v2241, %v2237
    %v2243 = vlaneseq
    %v2244 = vshrl.u32 %v2243, 7
    %v2245 = vsub.s32 %v2067, %v2244
    %v2246 = vrot.slane %v1584, %v2245
    %v2247 = vsel %vm2072, %v2246, %v2242
    %v2248 = vlaneseq
    %v2249 = vshrl.u32 %v2248, 7
    %v2250 = vsub.s32 %v2074, %v2249
    %v2251 = vrot.slane %v1586, %v2250
    %v2252 = vsel %vm2079, %v2251, %v2247
    %v2253 = vlaneseq
    %v2254 = vshrl.u32 %v2253, 7
    %v2255 = vsub.s32 %v2081, %v2254
    %v2256 = vrot.slane %v1588, %v2255
    %v2257 = vsel %vm2086, %v2256, %v2252
    %v2258 = vlaneseq
    %v2259 = vshrl.u32 %v2258, 7
    %v2260 = vsub.s32 %v2088, %v2259
    %v2261 = vrot.slane %v1590, %v2260
    %v2262 = vsel %vm2093, %v2261, %v2257
    %v2263 = vlaneseq
    %v2264 = vshrl.u32 %v2263, 7
    %v2265 = vsub.s32 %v2095, %v2264
    %v2266 = vrot.slane %v1592, %v2265
    %v2267 = vsel %vm2100, %v2266, %v2262
    %v2268 = vlaneseq
    %v2269 = vshrl.u32 %v2268, 7
    %v2270 = vsub.s32 %v2102, %v2269
    %v2271 = vrot.slane %v1594, %v2270
    %v2272 = vsel %vm2107, %v2271, %v2267
    %v2273 = vlaneseq
    %v2274 = vshrl.u32 %v2273, 7
    %v2275 = vsub.s32 %v2109, %v2274
    %v2276 = vrot.slane %v1596, %v2275
    %v2277 = vsel %vm2114, %v2276, %v2272
    %v2278 = vlaneseq
    %v2279 = vshrl.u32 %v2278, 7
    %v2280 = vsub.s32 %v2116, %v2279
    %v2281 = vrot.slane %v1598, %v2280
    %v2282 = vsel %vm2121, %v2281, %v2277
    %v2283 = vlaneseq
    %v2284 = vshrl.u32 %v2283, 7
    %v2285 = vsub.s32 %v2123, %v2284
    %v2286 = vrot.slane %v1600, %v2285
    %v2287 = vsel %vm2128, %v2286, %v2282
    %v2288 = vlaneseq
    %v2289 = vshrl.u32 %v2288, 7
    %v2290 = vsub.s32 %v2020, %v2289
    %v2291 = vrot.slane %v1602, %v2290
    %v2292 = vlaneseq
    %v2293 = vshrl.u32 %v2292, 7
    %v2294 = vsub.s32 %v2025, %v2293
    %v2295 = vrot.slane %v1604, %v2294
    %v2296 = vsel %vm2030, %v2295, %v2291
    %v2297 = vlaneseq
    %v2298 = vshrl.u32 %v2297, 7
    %v2299 = vsub.s32 %v2032, %v2298
    %v2300 = vrot.slane %v1606, %v2299
    %v2301 = vsel %vm2037, %v2300, %v2296
    %v2302 = vlaneseq
    %v2303 = vshrl.u32 %v2302, 7
    %v2304 = vsub.s32 %v2039, %v2303
    %v2305 = vrot.slane %v1608, %v2304
    %v2306 = vsel %vm2044, %v2305, %v2301
    %v2307 = vlaneseq
    %v2308 = vshrl.u32 %v2307, 7
    %v2309 = vsub.s32 %v2046, %v2308
    %v2310 = vrot.slane %v1610, %v2309
    %v2311 = vsel %vm2051, %v2310, %v2306
    %v2312 = vlaneseq
    %v2313 = vshrl.u32 %v2312, 7
    %v2314 = vsub.s32 %v2053, %v2313
    %v2315 = vrot.slane %v1612, %v2314
    %v2316 = vsel %vm2058, %v2315, %v2311
    %v2317 = vlaneseq
    %v2318 = vshrl.u32 %v2317, 7
    %v2319 = vsub.s32 %v2060, %v2318
    %v2320 = vrot.slane %v1614, %v2319
    %v2321 = vsel %vm2065, %v2320, %v2316
    %v2322 = vlaneseq
    %v2323 = vshrl.u32 %v2322, 7
    %v2324 = vsub.s32 %v2067, %v2323
    %v2325 = vrot.slane %v1616, %v2324
    %v2326 = vsel %vm2072, %v2325, %v2321
    %v2327 = vlaneseq
    %v2328 = vshrl.u32 %v2327, 7
    %v2329 = vsub.s32 %v2074, %v2328
    %v2330 = vrot.slane %v1618, %v2329
    %v2331 = vsel %vm2079, %v2330, %v2326
    %v2332 = vlaneseq
    %v2333 = vshrl.u32 %v2332, 7
    %v2334 = vsub.s32 %v2081, %v2333
    %v2335 = vrot.slane %v1620, %v2334
    %v2336 = vsel %vm2086, %v2335, %v2331
    %v2337 = vlaneseq
    %v2338 = vshrl.u32 %v2337, 7
    %v2339 = vsub.s32 %v2088, %v2338
    %v2340 = vrot.slane %v1622, %v2339
    %v2341 = vsel %vm2093, %v2340, %v2336
    %v2342 = vlaneseq
    %v2343 = vshrl.u32 %v2342, 7
    %v2344 = vsub.s32 %v2095, %v2343
    %v2345 = vrot.slane %v1624, %v2344
    %v2346 = vsel %vm2100, %v2345, %v2341
    %v2347 = vlaneseq
    %v2348 = vshrl.u32 %v2347, 7
    %v2349 = vsub.s32 %v2102, %v2348
    %v2350 = vrot.slane %v1626, %v2349
    %v2351 = vsel %vm2107, %v2350, %v2346
    %v2352 = vlaneseq
    %v2353 = vshrl.u32 %v2352, 7
    %v2354 = vsub.s32 %v2109, %v2353
    %v2355 = vrot.slane %v1628, %v2354
    %v2356 = vsel %vm2114, %v2355, %v2351
    %v2357 = vlaneseq
    %v2358 = vshrl.u32 %v2357, 7
    %v2359 = vsub.s32 %v2116, %v2358
    %v2360 = vrot.slane %v1630, %v2359
    %v2361 = vsel %vm2121, %v2360, %v2356
    %v2362 = vlaneseq
    %v2363 = vshrl.u32 %v2362, 7
    %v2364 = vsub.s32 %v2123, %v2363
    %v2365 = vrot.slane %v1632, %v2364
    %v2366 = vsel %vm2128, %v2365, %v2361
    %v2367 = vlaneseq
    %v2368 = vshrl.u32 %v2367, 7
    %v2369 = vsub.s32 %v2020, %v2368
    %v2370 = vrot.slane %v1634, %v2369
    %v2371 = vlaneseq
    %v2372 = vshrl.u32 %v2371, 7
    %v2373 = vsub.s32 %v2025, %v2372
    %v2374 = vrot.slane %v1636, %v2373
    %v2375 = vsel %vm2030, %v2374, %v2370
    %v2376 = vlaneseq
    %v2377 = vshrl.u32 %v2376, 7
    %v2378 = vsub.s32 %v2032, %v2377
    %v2379 = vrot.slane %v1638, %v2378
    %v2380 = vsel %vm2037, %v2379, %v2375
    %v2381 = vlaneseq
    %v2382 = vshrl.u32 %v2381, 7
    %v2383 = vsub.s32 %v2039, %v2382
    %v2384 = vrot.slane %v1640, %v2383
    %v2385 = vsel %vm2044, %v2384, %v2380
    %v2386 = vlaneseq
    %v2387 = vshrl.u32 %v2386, 7
    %v2388 = vsub.s32 %v2046, %v2387
    %v2389 = vrot.slane %v1642, %v2388
    %v2390 = vsel %vm2051, %v2389, %v2385
    %v2391 = vlaneseq
    %v2392 = vshrl.u32 %v2391, 7
    %v2393 = vsub.s32 %v2053, %v2392
    %v2394 = vrot.slane %v1644, %v2393
    %v2395 = vsel %vm2058, %v2394, %v2390
    %v2396 = vlaneseq
    %v2397 = vshrl.u32 %v2396, 7
    %v2398 = vsub.s32 %v2060, %v2397
    %v2399 = vrot.slane %v1646, %v2398
    %v2400 = vsel %vm2065, %v2399, %v2395
    %v2401 = vlaneseq
    %v2402 = vshrl.u32 %v2401, 7
    %v2403 = vsub.s32 %v2067, %v2402
    %v2404 = vrot.slane %v1648, %v2403
    %v2405 = vsel %vm2072, %v2404, %v2400
    %v2406 = vlaneseq
    %v2407 = vshrl.u32 %v2406, 7
    %v2408 = vsub.s32 %v2074, %v2407
    %v2409 = vrot.slane %v1650, %v2408
    %v2410 = vsel %vm2079, %v2409, %v2405
    %v2411 = vlaneseq
    %v2412 = vshrl.u32 %v2411, 7
    %v2413 = vsub.s32 %v2081, %v2412
    %v2414 = vrot.slane %v1652, %v2413
    %v2415 = vsel %vm2086, %v2414, %v2410
    %v2416 = vlaneseq
    %v2417 = vshrl.u32 %v2416, 7
    %v2418 = vsub.s32 %v2088, %v2417
    %v2419 = vrot.slane %v1654, %v2418
    %v2420 = vsel %vm2093, %v2419, %v2415
    %v2421 = vlaneseq
    %v2422 = vshrl.u32 %v2421, 7
    %v2423 = vsub.s32 %v2095, %v2422
    %v2424 = vrot.slane %v1656, %v2423
    %v2425 = vsel %vm2100, %v2424, %v2420
    %v2426 = vlaneseq
    %v2427 = vshrl.u32 %v2426, 7
    %v2428 = vsub.s32 %v2102, %v2427
    %v2429 = vrot.slane %v1658, %v2428
    %v2430 = vsel %vm2107, %v2429, %v2425
    %v2431 = vlaneseq
    %v2432 = vshrl.u32 %v2431, 7
    %v2433 = vsub.s32 %v2109, %v2432
    %v2434 = vrot.slane %v1660, %v2433
    %v2435 = vsel %vm2114, %v2434, %v2430
    %v2436 = vlaneseq
    %v2437 = vshrl.u32 %v2436, 7
    %v2438 = vsub.s32 %v2116, %v2437
    %v2439 = vrot.slane %v1662, %v2438
    %v2440 = vsel %vm2121, %v2439, %v2435
    %v2441 = vlaneseq
    %v2442 = vshrl.u32 %v2441, 7
    %v2443 = vsub.s32 %v2123, %v2442
    %v2444 = vrot.slane %v1664, %v2443
    %v2445 = vsel %vm2128, %v2444, %v2440
    %v2446 = vlaneseq
    %v2447 = vshrl.u32 %v2446, 7
    %v2448 = vsub.s32 %v2020, %v2447
    %v2449 = vrot.slane %v1666, %v2448
    %v2450 = vlaneseq
    %v2451 = vshrl.u32 %v2450, 7
    %v2452 = vsub.s32 %v2025, %v2451
    %v2453 = vrot.slane %v1668, %v2452
    %v2454 = vsel %vm2030, %v2453, %v2449
    %v2455 = vlaneseq
    %v2456 = vshrl.u32 %v2455, 7
    %v2457 = vsub.s32 %v2032, %v2456
    %v2458 = vrot.slane %v1670, %v2457
    %v2459 = vsel %vm2037, %v2458, %v2454
    %v2460 = vlaneseq
    %v2461 = vshrl.u32 %v2460, 7
    %v2462 = vsub.s32 %v2039, %v2461
    %v2463 = vrot.slane %v1672, %v2462
    %v2464 = vsel %vm2044, %v2463, %v2459
    %v2465 = vlaneseq
    %v2466 = vshrl.u32 %v2465, 7
    %v2467 = vsub.s32 %v2046, %v2466
    %v2468 = vrot.slane %v1674, %v2467
    %v2469 = vsel %vm2051, %v2468, %v2464
    %v2470 = vlaneseq
    %v2471 = vshrl.u32 %v2470, 7
    %v2472 = vsub.s32 %v2053, %v2471
    %v2473 = vrot.slane %v1676, %v2472
    %v2474 = vsel %vm2058, %v2473, %v2469
    %v2475 = vlaneseq
    %v2476 = vshrl.u32 %v2475, 7
    %v2477 = vsub.s32 %v2060, %v2476
    %v2478 = vrot.slane %v1678, %v2477
    %v2479 = vsel %vm2065, %v2478, %v2474
    %v2480 = vlaneseq
    %v2481 = vshrl.u32 %v2480, 7
    %v2482 = vsub.s32 %v2067, %v2481
    %v2483 = vrot.slane %v1680, %v2482
    %v2484 = vsel %vm2072, %v2483, %v2479
    %v2485 = vlaneseq
    %v2486 = vshrl.u32 %v2485, 7
    %v2487 = vsub.s32 %v2074, %v2486
    %v2488 = vrot.slane %v1682, %v2487
    %v2489 = vsel %vm2079, %v2488, %v2484
    %v2490 = vlaneseq
    %v2491 = vshrl.u32 %v2490, 7
    %v2492 = vsub.s32 %v2081, %v2491
    %v2493 = vrot.slane %v1684, %v2492
    %v2494 = vsel %vm2086, %v2493, %v2489
    %v2495 = vlaneseq
    %v2496 = vshrl.u32 %v2495, 7
    %v2497 = vsub.s32 %v2088, %v2496
    %v2498 = vrot.slane %v1686, %v2497
    %v2499 = vsel %vm2093, %v2498, %v2494
    %v2500 = vlaneseq
    %v2501 = vshrl.u32 %v2500, 7
    %v2502 = vsub.s32 %v2095, %v2501
    %v2503 = vrot.slane %v1688, %v2502
    %v2504 = vsel %vm2100, %v2503, %v2499
    %v2505 = vlaneseq
    %v2506 = vshrl.u32 %v2505, 7
    %v2507 = vsub.s32 %v2102, %v2506
    %v2508 = vrot.slane %v1690, %v2507
    %v2509 = vsel %vm2107, %v2508, %v2504
    %v2510 = vlaneseq
    %v2511 = vshrl.u32 %v2510, 7
    %v2512 = vsub.s32 %v2109, %v2511
    %v2513 = vrot.slane %v1692, %v2512
    %v2514 = vsel %vm2114, %v2513, %v2509
    %v2515 = vlaneseq
    %v2516 = vshrl.u32 %v2515, 7
    %v2517 = vsub.s32 %v2116, %v2516
    %v2518 = vrot.slane %v1694, %v2517
    %v2519 = vsel %vm2121, %v2518, %v2514
    %v2520 = vlaneseq
    %v2521 = vshrl.u32 %v2520, 7
    %v2522 = vsub.s32 %v2123, %v2521
    %v2523 = vrot.slane %v1696, %v2522
    %v2524 = vsel %vm2128, %v2523, %v2519
    %v2525 = vlaneseq
    %v2526 = vshrl.u32 %v2525, 7
    %v2527 = vsub.s32 %v2020, %v2526
    %v2528 = vrot.slane %v1698, %v2527
    %v2529 = vlaneseq
    %v2530 = vshrl.u32 %v2529, 7
    %v2531 = vsub.s32 %v2025, %v2530
    %v2532 = vrot.slane %v1700, %v2531
    %v2533 = vsel %vm2030, %v2532, %v2528
    %v2534 = vlaneseq
    %v2535 = vshrl.u32 %v2534, 7
    %v2536 = vsub.s32 %v2032, %v2535
    %v2537 = vrot.slane %v1702, %v2536
    %v2538 = vsel %vm2037, %v2537, %v2533
    %v2539 = vlaneseq
    %v2540 = vshrl.u32 %v2539, 7
    %v2541 = vsub.s32 %v2039, %v2540
    %v2542 = vrot.slane %v1704, %v2541
    %v2543 = vsel %vm2044, %v2542, %v2538
    %v2544 = vlaneseq
    %v2545 = vshrl.u32 %v2544, 7
    %v2546 = vsub.s32 %v2046, %v2545
    %v2547 = vrot.slane %v1706, %v2546
    %v2548 = vsel %vm2051, %v2547, %v2543
    %v2549 = vlaneseq
    %v2550 = vshrl.u32 %v2549, 7
    %v2551 = vsub.s32 %v2053, %v2550
    %v2552 = vrot.slane %v1708, %v2551
    %v2553 = vsel %vm2058, %v2552, %v2548
    %v2554 = vlaneseq
    %v2555 = vshrl.u32 %v2554, 7
    %v2556 = vsub.s32 %v2060, %v2555
    %v2557 = vrot.slane %v1710, %v2556
    %v2558 = vsel %vm2065, %v2557, %v2553
    %v2559 = vlaneseq
    %v2560 = vshrl.u32 %v2559, 7
    %v2561 = vsub.s32 %v2067, %v2560
    %v2562 = vrot.slane %v1712, %v2561
    %v2563 = vsel %vm2072, %v2562, %v2558
    %v2564 = vlaneseq
    %v2565 = vshrl.u32 %v2564, 7
    %v2566 = vsub.s32 %v2074, %v2565
    %v2567 = vrot.slane %v1714, %v2566
    %v2568 = vsel %vm2079, %v2567, %v2563
    %v2569 = vlaneseq
    %v2570 = vshrl.u32 %v2569, 7
    %v2571 = vsub.s32 %v2081, %v2570
    %v2572 = vrot.slane %v1716, %v2571
    %v2573 = vsel %vm2086, %v2572, %v2568
    %v2574 = vlaneseq
    %v2575 = vshrl.u32 %v2574, 7
    %v2576 = vsub.s32 %v2088, %v2575
    %v2577 = vrot.slane %v1718, %v2576
    %v2578 = vsel %vm2093, %v2577, %v2573
    %v2579 = vlaneseq
    %v2580 = vshrl.u32 %v2579, 7
    %v2581 = vsub.s32 %v2095, %v2580
    %v2582 = vrot.slane %v1720, %v2581
    %v2583 = vsel %vm2100, %v2582, %v2578
    %v2584 = vlaneseq
    %v2585 = vshrl.u32 %v2584, 7
    %v2586 = vsub.s32 %v2102, %v2585
    %v2587 = vrot.slane %v1722, %v2586
    %v2588 = vsel %vm2107, %v2587, %v2583
    %v2589 = vlaneseq
    %v2590 = vshrl.u32 %v2589, 7
    %v2591 = vsub.s32 %v2109, %v2590
    %v2592 = vrot.slane %v1724, %v2591
    %v2593 = vsel %vm2114, %v2592, %v2588
    %v2594 = vlaneseq
    %v2595 = vshrl.u32 %v2594, 7
    %v2596 = vsub.s32 %v2116, %v2595
    %v2597 = vrot.slane %v1726, %v2596
    %v2598 = vsel %vm2121, %v2597, %v2593
    %v2599 = vlaneseq
    %v2600 = vshrl.u32 %v2599, 7
    %v2601 = vsub.s32 %v2123, %v2600
    %v2602 = vrot.slane %v1728, %v2601
    %v2603 = vsel %vm2128, %v2602, %v2598
    %v2604 = vlaneseq
    %v2605 = vshrl.u32 %v2604, 7
    %v2606 = vsub.s32 %v2020, %v2605
    %v2607 = vrot.slane %v1730, %v2606
    %v2608 = vlaneseq
    %v2609 = vshrl.u32 %v2608, 7
    %v2610 = vsub.s32 %v2025, %v2609
    %v2611 = vrot.slane %v1732, %v2610
    %v2612 = vsel %vm2030, %v2611, %v2607
    %v2613 = vlaneseq
    %v2614 = vshrl.u32 %v2613, 7
    %v2615 = vsub.s32 %v2032, %v2614
    %v2616 = vrot.slane %v1734, %v2615
    %v2617 = vsel %vm2037, %v2616, %v2612
    %v2618 = vlaneseq
    %v2619 = vshrl.u32 %v2618, 7
    %v2620 = vsub.s32 %v2039, %v2619
    %v2621 = vrot.slane %v1736, %v2620
    %v2622 = vsel %vm2044, %v2621, %v2617
    %v2623 = vlaneseq
    %v2624 = vshrl.u32 %v2623, 7
    %v2625 = vsub.s32 %v2046, %v2624
    %v2626 = vrot.slane %v1738, %v2625
    %v2627 = vsel %vm2051, %v2626, %v2622
    %v2628 = vlaneseq
    %v2629 = vshrl.u32 %v2628, 7
    %v2630 = vsub.s32 %v2053, %v2629
    %v2631 = vrot.slane %v1740, %v2630
    %v2632 = vsel %vm2058, %v2631, %v2627
    %v2633 = vlaneseq
    %v2634 = vshrl.u32 %v2633, 7
    %v2635 = vsub.s32 %v2060, %v2634
    %v2636 = vrot.slane %v1742, %v2635
    %v2637 = vsel %vm2065, %v2636, %v2632
    %v2638 = vlaneseq
    %v2639 = vshrl.u32 %v2638, 7
    %v2640 = vsub.s32 %v2067, %v2639
    %v2641 = vrot.slane %v1744, %v2640
    %v2642 = vsel %vm2072, %v2641, %v2637
    %v2643 = vlaneseq
    %v2644 = vshrl.u32 %v2643, 7
    %v2645 = vsub.s32 %v2074, %v2644
    %v2646 = vrot.slane %v1746, %v2645
    %v2647 = vsel %vm2079, %v2646, %v2642
    %v2648 = vlaneseq
    %v2649 = vshrl.u32 %v2648, 7
    %v2650 = vsub.s32 %v2081, %v2649
    %v2651 = vrot.slane %v1748, %v2650
    %v2652 = vsel %vm2086, %v2651, %v2647
    %v2653 = vlaneseq
    %v2654 = vshrl.u32 %v2653, 7
    %v2655 = vsub.s32 %v2088, %v2654
    %v2656 = vrot.slane %v1750, %v2655
    %v2657 = vsel %vm2093, %v2656, %v2652
    %v2658 = vlaneseq
    %v2659 = vshrl.u32 %v2658, 7
    %v2660 = vsub.s32 %v2095, %v2659
    %v2661 = vrot.slane %v1752, %v2660
    %v2662 = vsel %vm2100, %v2661, %v2657
    %v2663 = vlaneseq
    %v2664 = vshrl.u32 %v2663, 7
    %v2665 = vsub.s32 %v2102, %v2664
    %v2666 = vrot.slane %v1754, %v2665
    %v2667 = vsel %vm2107, %v2666, %v2662
    %v2668 = vlaneseq
    %v2669 = vshrl.u32 %v2668, 7
    %v2670 = vsub.s32 %v2109, %v2669
    %v2671 = vrot.slane %v1756, %v2670
    %v2672 = vsel %vm2114, %v2671, %v2667
    %v2673 = vlaneseq
    %v2674 = vshrl.u32 %v2673, 7
    %v2675 = vsub.s32 %v2116, %v2674
    %v2676 = vrot.slane %v1758, %v2675
    %v2677 = vsel %vm2121, %v2676, %v2672
    %v2678 = vlaneseq
    %v2679 = vshrl.u32 %v2678, 7
    %v2680 = vsub.s32 %v2123, %v2679
    %v2681 = vrot.slane %v1760, %v2680
    %v2682 = vsel %vm2128, %v2681, %v2677
    %vm2683 = vcmask 1041409
    %v2684 = vsel %vm2683, %v2208, %v2129
    %vm2685 = vcmask 1042434
    %v2686 = vsel %vm2685, %v2287, %v2684
    %vm2687 = vcmask 1043459
    %v2688 = vsel %vm2687, %v2366, %v2686
    %vm2689 = vcmask 1044484
    %v2690 = vsel %vm2689, %v2445, %v2688
    %vm2691 = vcmask 1045509
    %v2692 = vsel %vm2691, %v2524, %v2690
    %vm2693 = vcmask 1046534
    %v2694 = vsel %vm2693, %v2603, %v2692
    %vm2695 = vcmask 1047559
    %v2696 = vsel %vm2695, %v2682, %v2694
    %v2826 = vlaneseq
    %v2827 = vshrl.u32 %v2826, 7
    %v2828 = vsub.s32 %v2020, %v2827
    %v2829 = vrot.slane %v1763, %v2828
    %v2830 = vlaneseq
    %v2831 = vshrl.u32 %v2830, 7
    %v2832 = vsub.s32 %v2025, %v2831
    %v2833 = vrot.slane %v1764, %v2832
    %v2834 = vsel %vm2030, %v2833, %v2829
    %v2835 = vlaneseq
    %v2836 = vshrl.u32 %v2835, 7
    %v2837 = vsub.s32 %v2032, %v2836
    %v2838 = vrot.slane %v1765, %v2837
    %v2839 = vsel %vm2037, %v2838, %v2834
    %v2840 = vlaneseq
    %v2841 = vshrl.u32 %v2840, 7
    %v2842 = vsub.s32 %v2039, %v2841
    %v2843 = vrot.slane %v1766, %v2842
    %v2844 = vsel %vm2044, %v2843, %v2839
    %v2845 = vlaneseq
    %v2846 = vshrl.u32 %v2845, 7
    %v2847 = vsub.s32 %v2046, %v2846
    %v2848 = vrot.slane %v1767, %v2847
    %v2849 = vsel %vm2051, %v2848, %v2844
    %v2850 = vlaneseq
    %v2851 = vshrl.u32 %v2850, 7
    %v2852 = vsub.s32 %v2053, %v2851
    %v2853 = vrot.slane %v1768, %v2852
    %v2854 = vsel %vm2058, %v2853, %v2849
    %v2855 = vlaneseq
    %v2856 = vshrl.u32 %v2855, 7
    %v2857 = vsub.s32 %v2060, %v2856
    %v2858 = vrot.slane %v1769, %v2857
    %v2859 = vsel %vm2065, %v2858, %v2854
    %v2860 = vlaneseq
    %v2861 = vshrl.u32 %v2860, 7
    %v2862 = vsub.s32 %v2067, %v2861
    %v2863 = vrot.slane %v1770, %v2862
    %v2864 = vsel %vm2072, %v2863, %v2859
    %v2865 = vlaneseq
    %v2866 = vshrl.u32 %v2865, 7
    %v2867 = vsub.s32 %v2074, %v2866
    %v2868 = vrot.slane %v1771, %v2867
    %v2869 = vsel %vm2079, %v2868, %v2864
    %v2870 = vlaneseq
    %v2871 = vshrl.u32 %v2870, 7
    %v2872 = vsub.s32 %v2081, %v2871
    %v2873 = vrot.slane %v1772, %v2872
    %v2874 = vsel %vm2086, %v2873, %v2869
    %v2875 = vlaneseq
    %v2876 = vshrl.u32 %v2875, 7
    %v2877 = vsub.s32 %v2088, %v2876
    %v2878 = vrot.slane %v1773, %v2877
    %v2879 = vsel %vm2093, %v2878, %v2874
    %v2880 = vlaneseq
    %v2881 = vshrl.u32 %v2880, 7
    %v2882 = vsub.s32 %v2095, %v2881
    %v2883 = vrot.slane %v1774, %v2882
    %v2884 = vsel %vm2100, %v2883, %v2879
    %v2885 = vlaneseq
    %v2886 = vshrl.u32 %v2885, 7
    %v2887 = vsub.s32 %v2102, %v2886
    %v2888 = vrot.slane %v1775, %v2887
    %v2889 = vsel %vm2107, %v2888, %v2884
    %v2890 = vlaneseq
    %v2891 = vshrl.u32 %v2890, 7
    %v2892 = vsub.s32 %v2109, %v2891
    %v2893 = vrot.slane %v1776, %v2892
    %v2894 = vsel %vm2114, %v2893, %v2889
    %v2895 = vlaneseq
    %v2896 = vshrl.u32 %v2895, 7
    %v2897 = vsub.s32 %v2116, %v2896
    %v2898 = vrot.slane %v1777, %v2897
    %v2899 = vsel %vm2121, %v2898, %v2894
    %v2900 = vlaneseq
    %v2901 = vshrl.u32 %v2900, 7
    %v2902 = vsub.s32 %v2123, %v2901
    %v2903 = vrot.slane %v1778, %v2902
    %v2904 = vsel %vm2128, %v2903, %v2899
    %v2905 = vlaneseq
    %v2906 = vshrl.u32 %v2905, 7
    %v2907 = vsub.s32 %v2020, %v2906
    %v2908 = vrot.slane %v1779, %v2907
    %v2909 = vlaneseq
    %v2910 = vshrl.u32 %v2909, 7
    %v2911 = vsub.s32 %v2025, %v2910
    %v2912 = vrot.slane %v1780, %v2911
    %v2913 = vsel %vm2030, %v2912, %v2908
    %v2914 = vlaneseq
    %v2915 = vshrl.u32 %v2914, 7
    %v2916 = vsub.s32 %v2032, %v2915
    %v2917 = vrot.slane %v1781, %v2916
    %v2918 = vsel %vm2037, %v2917, %v2913
    %v2919 = vlaneseq
    %v2920 = vshrl.u32 %v2919, 7
    %v2921 = vsub.s32 %v2039, %v2920
    %v2922 = vrot.slane %v1782, %v2921
    %v2923 = vsel %vm2044, %v2922, %v2918
    %v2924 = vlaneseq
    %v2925 = vshrl.u32 %v2924, 7
    %v2926 = vsub.s32 %v2046, %v2925
    %v2927 = vrot.slane %v1783, %v2926
    %v2928 = vsel %vm2051, %v2927, %v2923
    %v2929 = vlaneseq
    %v2930 = vshrl.u32 %v2929, 7
    %v2931 = vsub.s32 %v2053, %v2930
    %v2932 = vrot.slane %v1784, %v2931
    %v2933 = vsel %vm2058, %v2932, %v2928
    %v2934 = vlaneseq
    %v2935 = vshrl.u32 %v2934, 7
    %v2936 = vsub.s32 %v2060, %v2935
    %v2937 = vrot.slane %v1785, %v2936
    %v2938 = vsel %vm2065, %v2937, %v2933
    %v2939 = vlaneseq
    %v2940 = vshrl.u32 %v2939, 7
    %v2941 = vsub.s32 %v2067, %v2940
    %v2942 = vrot.slane %v1786, %v2941
    %v2943 = vsel %vm2072, %v2942, %v2938
    %v2944 = vlaneseq
    %v2945 = vshrl.u32 %v2944, 7
    %v2946 = vsub.s32 %v2074, %v2945
    %v2947 = vrot.slane %v1787, %v2946
    %v2948 = vsel %vm2079, %v2947, %v2943
    %v2949 = vlaneseq
    %v2950 = vshrl.u32 %v2949, 7
    %v2951 = vsub.s32 %v2081, %v2950
    %v2952 = vrot.slane %v1788, %v2951
    %v2953 = vsel %vm2086, %v2952, %v2948
    %v2954 = vlaneseq
    %v2955 = vshrl.u32 %v2954, 7
    %v2956 = vsub.s32 %v2088, %v2955
    %v2957 = vrot.slane %v1789, %v2956
    %v2958 = vsel %vm2093, %v2957, %v2953
    %v2959 = vlaneseq
    %v2960 = vshrl.u32 %v2959, 7
    %v2961 = vsub.s32 %v2095, %v2960
    %v2962 = vrot.slane %v1790, %v2961
    %v2963 = vsel %vm2100, %v2962, %v2958
    %v2964 = vlaneseq
    %v2965 = vshrl.u32 %v2964, 7
    %v2966 = vsub.s32 %v2102, %v2965
    %v2967 = vrot.slane %v1791, %v2966
    %v2968 = vsel %vm2107, %v2967, %v2963
    %v2969 = vlaneseq
    %v2970 = vshrl.u32 %v2969, 7
    %v2971 = vsub.s32 %v2109, %v2970
    %v2972 = vrot.slane %v1792, %v2971
    %v2973 = vsel %vm2114, %v2972, %v2968
    %v2974 = vlaneseq
    %v2975 = vshrl.u32 %v2974, 7
    %v2976 = vsub.s32 %v2116, %v2975
    %v2977 = vrot.slane %v1793, %v2976
    %v2978 = vsel %vm2121, %v2977, %v2973
    %v2979 = vlaneseq
    %v2980 = vshrl.u32 %v2979, 7
    %v2981 = vsub.s32 %v2123, %v2980
    %v2982 = vrot.slane %v1794, %v2981
    %v2983 = vsel %vm2128, %v2982, %v2978
    %v2984 = vlaneseq
    %v2985 = vshrl.u32 %v2984, 7
    %v2986 = vsub.s32 %v2020, %v2985
    %v2987 = vrot.slane %v1795, %v2986
    %v2988 = vlaneseq
    %v2989 = vshrl.u32 %v2988, 7
    %v2990 = vsub.s32 %v2025, %v2989
    %v2991 = vrot.slane %v1796, %v2990
    %v2992 = vsel %vm2030, %v2991, %v2987
    %v2993 = vlaneseq
    %v2994 = vshrl.u32 %v2993, 7
    %v2995 = vsub.s32 %v2032, %v2994
    %v2996 = vrot.slane %v1797, %v2995
    %v2997 = vsel %vm2037, %v2996, %v2992
    %v2998 = vlaneseq
    %v2999 = vshrl.u32 %v2998, 7
    %v3000 = vsub.s32 %v2039, %v2999
    %v3001 = vrot.slane %v1798, %v3000
    %v3002 = vsel %vm2044, %v3001, %v2997
    %v3003 = vlaneseq
    %v3004 = vshrl.u32 %v3003, 7
    %v3005 = vsub.s32 %v2046, %v3004
    %v3006 = vrot.slane %v1799, %v3005
    %v3007 = vsel %vm2051, %v3006, %v3002
    %v3008 = vlaneseq
    %v3009 = vshrl.u32 %v3008, 7
    %v3010 = vsub.s32 %v2053, %v3009
    %v3011 = vrot.slane %v1800, %v3010
    %v3012 = vsel %vm2058, %v3011, %v3007
    %v3013 = vlaneseq
    %v3014 = vshrl.u32 %v3013, 7
    %v3015 = vsub.s32 %v2060, %v3014
    %v3016 = vrot.slane %v1801, %v3015
    %v3017 = vsel %vm2065, %v3016, %v3012
    %v3018 = vlaneseq
    %v3019 = vshrl.u32 %v3018, 7
    %v3020 = vsub.s32 %v2067, %v3019
    %v3021 = vrot.slane %v1802, %v3020
    %v3022 = vsel %vm2072, %v3021, %v3017
    %v3023 = vlaneseq
    %v3024 = vshrl.u32 %v3023, 7
    %v3025 = vsub.s32 %v2074, %v3024
    %v3026 = vrot.slane %v1803, %v3025
    %v3027 = vsel %vm2079, %v3026, %v3022
    %v3028 = vlaneseq
    %v3029 = vshrl.u32 %v3028, 7
    %v3030 = vsub.s32 %v2081, %v3029
    %v3031 = vrot.slane %v1804, %v3030
    %v3032 = vsel %vm2086, %v3031, %v3027
    %v3033 = vlaneseq
    %v3034 = vshrl.u32 %v3033, 7
    %v3035 = vsub.s32 %v2088, %v3034
    %v3036 = vrot.slane %v1805, %v3035
    %v3037 = vsel %vm2093, %v3036, %v3032
    %v3038 = vlaneseq
    %v3039 = vshrl.u32 %v3038, 7
    %v3040 = vsub.s32 %v2095, %v3039
    %v3041 = vrot.slane %v1806, %v3040
    %v3042 = vsel %vm2100, %v3041, %v3037
    %v3043 = vlaneseq
    %v3044 = vshrl.u32 %v3043, 7
    %v3045 = vsub.s32 %v2102, %v3044
    %v3046 = vrot.slane %v1807, %v3045
    %v3047 = vsel %vm2107, %v3046, %v3042
    %v3048 = vlaneseq
    %v3049 = vshrl.u32 %v3048, 7
    %v3050 = vsub.s32 %v2109, %v3049
    %v3051 = vrot.slane %v1808, %v3050
    %v3052 = vsel %vm2114, %v3051, %v3047
    %v3053 = vlaneseq
    %v3054 = vshrl.u32 %v3053, 7
    %v3055 = vsub.s32 %v2116, %v3054
    %v3056 = vrot.slane %v1809, %v3055
    %v3057 = vsel %vm2121, %v3056, %v3052
    %v3058 = vlaneseq
    %v3059 = vshrl.u32 %v3058, 7
    %v3060 = vsub.s32 %v2123, %v3059
    %v3061 = vrot.slane %v1810, %v3060
    %v3062 = vsel %vm2128, %v3061, %v3057
    %v3063 = vlaneseq
    %v3064 = vshrl.u32 %v3063, 7
    %v3065 = vsub.s32 %v2020, %v3064
    %v3066 = vrot.slane %v1811, %v3065
    %v3067 = vlaneseq
    %v3068 = vshrl.u32 %v3067, 7
    %v3069 = vsub.s32 %v2025, %v3068
    %v3070 = vrot.slane %v1812, %v3069
    %v3071 = vsel %vm2030, %v3070, %v3066
    %v3072 = vlaneseq
    %v3073 = vshrl.u32 %v3072, 7
    %v3074 = vsub.s32 %v2032, %v3073
    %v3075 = vrot.slane %v1813, %v3074
    %v3076 = vsel %vm2037, %v3075, %v3071
    %v3077 = vlaneseq
    %v3078 = vshrl.u32 %v3077, 7
    %v3079 = vsub.s32 %v2039, %v3078
    %v3080 = vrot.slane %v1814, %v3079
    %v3081 = vsel %vm2044, %v3080, %v3076
    %v3082 = vlaneseq
    %v3083 = vshrl.u32 %v3082, 7
    %v3084 = vsub.s32 %v2046, %v3083
    %v3085 = vrot.slane %v1815, %v3084
    %v3086 = vsel %vm2051, %v3085, %v3081
    %v3087 = vlaneseq
    %v3088 = vshrl.u32 %v3087, 7
    %v3089 = vsub.s32 %v2053, %v3088
    %v3090 = vrot.slane %v1816, %v3089
    %v3091 = vsel %vm2058, %v3090, %v3086
    %v3092 = vlaneseq
    %v3093 = vshrl.u32 %v3092, 7
    %v3094 = vsub.s32 %v2060, %v3093
    %v3095 = vrot.slane %v1817, %v3094
    %v3096 = vsel %vm2065, %v3095, %v3091
    %v3097 = vlaneseq
    %v3098 = vshrl.u32 %v3097, 7
    %v3099 = vsub.s32 %v2067, %v3098
    %v3100 = vrot.slane %v1818, %v3099
    %v3101 = vsel %vm2072, %v3100, %v3096
    %v3102 = vlaneseq
    %v3103 = vshrl.u32 %v3102, 7
    %v3104 = vsub.s32 %v2074, %v3103
    %v3105 = vrot.slane %v1819, %v3104
    %v3106 = vsel %vm2079, %v3105, %v3101
    %v3107 = vlaneseq
    %v3108 = vshrl.u32 %v3107, 7
    %v3109 = vsub.s32 %v2081, %v3108
    %v3110 = vrot.slane %v1820, %v3109
    %v3111 = vsel %vm2086, %v3110, %v3106
    %v3112 = vlaneseq
    %v3113 = vshrl.u32 %v3112, 7
    %v3114 = vsub.s32 %v2088, %v3113
    %v3115 = vrot.slane %v1821, %v3114
    %v3116 = vsel %vm2093, %v3115, %v3111
    %v3117 = vlaneseq
    %v3118 = vshrl.u32 %v3117, 7
    %v3119 = vsub.s32 %v2095, %v3118
    %v3120 = vrot.slane %v1822, %v3119
    %v3121 = vsel %vm2100, %v3120, %v3116
    %v3122 = vlaneseq
    %v3123 = vshrl.u32 %v3122, 7
    %v3124 = vsub.s32 %v2102, %v3123
    %v3125 = vrot.slane %v1823, %v3124
    %v3126 = vsel %vm2107, %v3125, %v3121
    %v3127 = vlaneseq
    %v3128 = vshrl.u32 %v3127, 7
    %v3129 = vsub.s32 %v2109, %v3128
    %v3130 = vrot.slane %v1824, %v3129
    %v3131 = vsel %vm2114, %v3130, %v3126
    %v3132 = vlaneseq
    %v3133 = vshrl.u32 %v3132, 7
    %v3134 = vsub.s32 %v2116, %v3133
    %v3135 = vrot.slane %v1825, %v3134
    %v3136 = vsel %vm2121, %v3135, %v3131
    %v3137 = vlaneseq
    %v3138 = vshrl.u32 %v3137, 7
    %v3139 = vsub.s32 %v2123, %v3138
    %v3140 = vrot.slane %v1826, %v3139
    %v3141 = vsel %vm2128, %v3140, %v3136
    %v3142 = vlaneseq
    %v3143 = vshrl.u32 %v3142, 7
    %v3144 = vsub.s32 %v2020, %v3143
    %v3145 = vrot.slane %v1827, %v3144
    %v3146 = vlaneseq
    %v3147 = vshrl.u32 %v3146, 7
    %v3148 = vsub.s32 %v2025, %v3147
    %v3149 = vrot.slane %v1828, %v3148
    %v3150 = vsel %vm2030, %v3149, %v3145
    %v3151 = vlaneseq
    %v3152 = vshrl.u32 %v3151, 7
    %v3153 = vsub.s32 %v2032, %v3152
    %v3154 = vrot.slane %v1829, %v3153
    %v3155 = vsel %vm2037, %v3154, %v3150
    %v3156 = vlaneseq
    %v3157 = vshrl.u32 %v3156, 7
    %v3158 = vsub.s32 %v2039, %v3157
    %v3159 = vrot.slane %v1830, %v3158
    %v3160 = vsel %vm2044, %v3159, %v3155
    %v3161 = vlaneseq
    %v3162 = vshrl.u32 %v3161, 7
    %v3163 = vsub.s32 %v2046, %v3162
    %v3164 = vrot.slane %v1831, %v3163
    %v3165 = vsel %vm2051, %v3164, %v3160
    %v3166 = vlaneseq
    %v3167 = vshrl.u32 %v3166, 7
    %v3168 = vsub.s32 %v2053, %v3167
    %v3169 = vrot.slane %v1832, %v3168
    %v3170 = vsel %vm2058, %v3169, %v3165
    %v3171 = vlaneseq
    %v3172 = vshrl.u32 %v3171, 7
    %v3173 = vsub.s32 %v2060, %v3172
    %v3174 = vrot.slane %v1833, %v3173
    %v3175 = vsel %vm2065, %v3174, %v3170
    %v3176 = vlaneseq
    %v3177 = vshrl.u32 %v3176, 7
    %v3178 = vsub.s32 %v2067, %v3177
    %v3179 = vrot.slane %v1834, %v3178
    %v3180 = vsel %vm2072, %v3179, %v3175
    %v3181 = vlaneseq
    %v3182 = vshrl.u32 %v3181, 7
    %v3183 = vsub.s32 %v2074, %v3182
    %v3184 = vrot.slane %v1835, %v3183
    %v3185 = vsel %vm2079, %v3184, %v3180
    %v3186 = vlaneseq
    %v3187 = vshrl.u32 %v3186, 7
    %v3188 = vsub.s32 %v2081, %v3187
    %v3189 = vrot.slane %v1836, %v3188
    %v3190 = vsel %vm2086, %v3189, %v3185
    %v3191 = vlaneseq
    %v3192 = vshrl.u32 %v3191, 7
    %v3193 = vsub.s32 %v2088, %v3192
    %v3194 = vrot.slane %v1837, %v3193
    %v3195 = vsel %vm2093, %v3194, %v3190
    %v3196 = vlaneseq
    %v3197 = vshrl.u32 %v3196, 7
    %v3198 = vsub.s32 %v2095, %v3197
    %v3199 = vrot.slane %v1838, %v3198
    %v3200 = vsel %vm2100, %v3199, %v3195
    %v3201 = vlaneseq
    %v3202 = vshrl.u32 %v3201, 7
    %v3203 = vsub.s32 %v2102, %v3202
    %v3204 = vrot.slane %v1839, %v3203
    %v3205 = vsel %vm2107, %v3204, %v3200
    %v3206 = vlaneseq
    %v3207 = vshrl.u32 %v3206, 7
    %v3208 = vsub.s32 %v2109, %v3207
    %v3209 = vrot.slane %v1840, %v3208
    %v3210 = vsel %vm2114, %v3209, %v3205
    %v3211 = vlaneseq
    %v3212 = vshrl.u32 %v3211, 7
    %v3213 = vsub.s32 %v2116, %v3212
    %v3214 = vrot.slane %v1841, %v3213
    %v3215 = vsel %vm2121, %v3214, %v3210
    %v3216 = vlaneseq
    %v3217 = vshrl.u32 %v3216, 7
    %v3218 = vsub.s32 %v2123, %v3217
    %v3219 = vrot.slane %v1842, %v3218
    %v3220 = vsel %vm2128, %v3219, %v3215
    %v3221 = vlaneseq
    %v3222 = vshrl.u32 %v3221, 7
    %v3223 = vsub.s32 %v2020, %v3222
    %v3224 = vrot.slane %v1843, %v3223
    %v3225 = vlaneseq
    %v3226 = vshrl.u32 %v3225, 7
    %v3227 = vsub.s32 %v2025, %v3226
    %v3228 = vrot.slane %v1844, %v3227
    %v3229 = vsel %vm2030, %v3228, %v3224
    %v3230 = vlaneseq
    %v3231 = vshrl.u32 %v3230, 7
    %v3232 = vsub.s32 %v2032, %v3231
    %v3233 = vrot.slane %v1845, %v3232
    %v3234 = vsel %vm2037, %v3233, %v3229
    %v3235 = vlaneseq
    %v3236 = vshrl.u32 %v3235, 7
    %v3237 = vsub.s32 %v2039, %v3236
    %v3238 = vrot.slane %v1846, %v3237
    %v3239 = vsel %vm2044, %v3238, %v3234
    %v3240 = vlaneseq
    %v3241 = vshrl.u32 %v3240, 7
    %v3242 = vsub.s32 %v2046, %v3241
    %v3243 = vrot.slane %v1847, %v3242
    %v3244 = vsel %vm2051, %v3243, %v3239
    %v3245 = vlaneseq
    %v3246 = vshrl.u32 %v3245, 7
    %v3247 = vsub.s32 %v2053, %v3246
    %v3248 = vrot.slane %v1848, %v3247
    %v3249 = vsel %vm2058, %v3248, %v3244
    %v3250 = vlaneseq
    %v3251 = vshrl.u32 %v3250, 7
    %v3252 = vsub.s32 %v2060, %v3251
    %v3253 = vrot.slane %v1849, %v3252
    %v3254 = vsel %vm2065, %v3253, %v3249
    %v3255 = vlaneseq
    %v3256 = vshrl.u32 %v3255, 7
    %v3257 = vsub.s32 %v2067, %v3256
    %v3258 = vrot.slane %v1850, %v3257
    %v3259 = vsel %vm2072, %v3258, %v3254
    %v3260 = vlaneseq
    %v3261 = vshrl.u32 %v3260, 7
    %v3262 = vsub.s32 %v2074, %v3261
    %v3263 = vrot.slane %v1851, %v3262
    %v3264 = vsel %vm2079, %v3263, %v3259
    %v3265 = vlaneseq
    %v3266 = vshrl.u32 %v3265, 7
    %v3267 = vsub.s32 %v2081, %v3266
    %v3268 = vrot.slane %v1852, %v3267
    %v3269 = vsel %vm2086, %v3268, %v3264
    %v3270 = vlaneseq
    %v3271 = vshrl.u32 %v3270, 7
    %v3272 = vsub.s32 %v2088, %v3271
    %v3273 = vrot.slane %v1853, %v3272
    %v3274 = vsel %vm2093, %v3273, %v3269
    %v3275 = vlaneseq
    %v3276 = vshrl.u32 %v3275, 7
    %v3277 = vsub.s32 %v2095, %v3276
    %v3278 = vrot.slane %v1854, %v3277
    %v3279 = vsel %vm2100, %v3278, %v3274
    %v3280 = vlaneseq
    %v3281 = vshrl.u32 %v3280, 7
    %v3282 = vsub.s32 %v2102, %v3281
    %v3283 = vrot.slane %v1855, %v3282
    %v3284 = vsel %vm2107, %v3283, %v3279
    %v3285 = vlaneseq
    %v3286 = vshrl.u32 %v3285, 7
    %v3287 = vsub.s32 %v2109, %v3286
    %v3288 = vrot.slane %v1856, %v3287
    %v3289 = vsel %vm2114, %v3288, %v3284
    %v3290 = vlaneseq
    %v3291 = vshrl.u32 %v3290, 7
    %v3292 = vsub.s32 %v2116, %v3291
    %v3293 = vrot.slane %v1857, %v3292
    %v3294 = vsel %vm2121, %v3293, %v3289
    %v3295 = vlaneseq
    %v3296 = vshrl.u32 %v3295, 7
    %v3297 = vsub.s32 %v2123, %v3296
    %v3298 = vrot.slane %v1858, %v3297
    %v3299 = vsel %vm2128, %v3298, %v3294
    %v3300 = vlaneseq
    %v3301 = vshrl.u32 %v3300, 7
    %v3302 = vsub.s32 %v2020, %v3301
    %v3303 = vrot.slane %v1859, %v3302
    %v3304 = vlaneseq
    %v3305 = vshrl.u32 %v3304, 7
    %v3306 = vsub.s32 %v2025, %v3305
    %v3307 = vrot.slane %v1860, %v3306
    %v3308 = vsel %vm2030, %v3307, %v3303
    %v3309 = vlaneseq
    %v3310 = vshrl.u32 %v3309, 7
    %v3311 = vsub.s32 %v2032, %v3310
    %v3312 = vrot.slane %v1861, %v3311
    %v3313 = vsel %vm2037, %v3312, %v3308
    %v3314 = vlaneseq
    %v3315 = vshrl.u32 %v3314, 7
    %v3316 = vsub.s32 %v2039, %v3315
    %v3317 = vrot.slane %v1862, %v3316
    %v3318 = vsel %vm2044, %v3317, %v3313
    %v3319 = vlaneseq
    %v3320 = vshrl.u32 %v3319, 7
    %v3321 = vsub.s32 %v2046, %v3320
    %v3322 = vrot.slane %v1863, %v3321
    %v3323 = vsel %vm2051, %v3322, %v3318
    %v3324 = vlaneseq
    %v3325 = vshrl.u32 %v3324, 7
    %v3326 = vsub.s32 %v2053, %v3325
    %v3327 = vrot.slane %v1864, %v3326
    %v3328 = vsel %vm2058, %v3327, %v3323
    %v3329 = vlaneseq
    %v3330 = vshrl.u32 %v3329, 7
    %v3331 = vsub.s32 %v2060, %v3330
    %v3332 = vrot.slane %v1865, %v3331
    %v3333 = vsel %vm2065, %v3332, %v3328
    %v3334 = vlaneseq
    %v3335 = vshrl.u32 %v3334, 7
    %v3336 = vsub.s32 %v2067, %v3335
    %v3337 = vrot.slane %v1866, %v3336
    %v3338 = vsel %vm2072, %v3337, %v3333
    %v3339 = vlaneseq
    %v3340 = vshrl.u32 %v3339, 7
    %v3341 = vsub.s32 %v2074, %v3340
    %v3342 = vrot.slane %v1867, %v3341
    %v3343 = vsel %vm2079, %v3342, %v3338
    %v3344 = vlaneseq
    %v3345 = vshrl.u32 %v3344, 7
    %v3346 = vsub.s32 %v2081, %v3345
    %v3347 = vrot.slane %v1868, %v3346
    %v3348 = vsel %vm2086, %v3347, %v3343
    %v3349 = vlaneseq
    %v3350 = vshrl.u32 %v3349, 7
    %v3351 = vsub.s32 %v2088, %v3350
    %v3352 = vrot.slane %v1869, %v3351
    %v3353 = vsel %vm2093, %v3352, %v3348
    %v3354 = vlaneseq
    %v3355 = vshrl.u32 %v3354, 7
    %v3356 = vsub.s32 %v2095, %v3355
    %v3357 = vrot.slane %v1870, %v3356
    %v3358 = vsel %vm2100, %v3357, %v3353
    %v3359 = vlaneseq
    %v3360 = vshrl.u32 %v3359, 7
    %v3361 = vsub.s32 %v2102, %v3360
    %v3362 = vrot.slane %v1871, %v3361
    %v3363 = vsel %vm2107, %v3362, %v3358
    %v3364 = vlaneseq
    %v3365 = vshrl.u32 %v3364, 7
    %v3366 = vsub.s32 %v2109, %v3365
    %v3367 = vrot.slane %v1872, %v3366
    %v3368 = vsel %vm2114, %v3367, %v3363
    %v3369 = vlaneseq
    %v3370 = vshrl.u32 %v3369, 7
    %v3371 = vsub.s32 %v2116, %v3370
    %v3372 = vrot.slane %v1873, %v3371
    %v3373 = vsel %vm2121, %v3372, %v3368
    %v3374 = vlaneseq
    %v3375 = vshrl.u32 %v3374, 7
    %v3376 = vsub.s32 %v2123, %v3375
    %v3377 = vrot.slane %v1874, %v3376
    %v3378 = vsel %vm2128, %v3377, %v3373
    %v3379 = vlaneseq
    %v3380 = vshrl.u32 %v3379, 7
    %v3381 = vsub.s32 %v2020, %v3380
    %v3382 = vrot.slane %v1875, %v3381
    %v3383 = vlaneseq
    %v3384 = vshrl.u32 %v3383, 7
    %v3385 = vsub.s32 %v2025, %v3384
    %v3386 = vrot.slane %v1876, %v3385
    %v3387 = vsel %vm2030, %v3386, %v3382
    %v3388 = vlaneseq
    %v3389 = vshrl.u32 %v3388, 7
    %v3390 = vsub.s32 %v2032, %v3389
    %v3391 = vrot.slane %v1877, %v3390
    %v3392 = vsel %vm2037, %v3391, %v3387
    %v3393 = vlaneseq
    %v3394 = vshrl.u32 %v3393, 7
    %v3395 = vsub.s32 %v2039, %v3394
    %v3396 = vrot.slane %v1878, %v3395
    %v3397 = vsel %vm2044, %v3396, %v3392
    %v3398 = vlaneseq
    %v3399 = vshrl.u32 %v3398, 7
    %v3400 = vsub.s32 %v2046, %v3399
    %v3401 = vrot.slane %v1879, %v3400
    %v3402 = vsel %vm2051, %v3401, %v3397
    %v3403 = vlaneseq
    %v3404 = vshrl.u32 %v3403, 7
    %v3405 = vsub.s32 %v2053, %v3404
    %v3406 = vrot.slane %v1880, %v3405
    %v3407 = vsel %vm2058, %v3406, %v3402
    %v3408 = vlaneseq
    %v3409 = vshrl.u32 %v3408, 7
    %v3410 = vsub.s32 %v2060, %v3409
    %v3411 = vrot.slane %v1881, %v3410
    %v3412 = vsel %vm2065, %v3411, %v3407
    %v3413 = vlaneseq
    %v3414 = vshrl.u32 %v3413, 7
    %v3415 = vsub.s32 %v2067, %v3414
    %v3416 = vrot.slane %v1882, %v3415
    %v3417 = vsel %vm2072, %v3416, %v3412
    %v3418 = vlaneseq
    %v3419 = vshrl.u32 %v3418, 7
    %v3420 = vsub.s32 %v2074, %v3419
    %v3421 = vrot.slane %v1883, %v3420
    %v3422 = vsel %vm2079, %v3421, %v3417
    %v3423 = vlaneseq
    %v3424 = vshrl.u32 %v3423, 7
    %v3425 = vsub.s32 %v2081, %v3424
    %v3426 = vrot.slane %v1884, %v3425
    %v3427 = vsel %vm2086, %v3426, %v3422
    %v3428 = vlaneseq
    %v3429 = vshrl.u32 %v3428, 7
    %v3430 = vsub.s32 %v2088, %v3429
    %v3431 = vrot.slane %v1885, %v3430
    %v3432 = vsel %vm2093, %v3431, %v3427
    %v3433 = vlaneseq
    %v3434 = vshrl.u32 %v3433, 7
    %v3435 = vsub.s32 %v2095, %v3434
    %v3436 = vrot.slane %v1886, %v3435
    %v3437 = vsel %vm2100, %v3436, %v3432
    %v3438 = vlaneseq
    %v3439 = vshrl.u32 %v3438, 7
    %v3440 = vsub.s32 %v2102, %v3439
    %v3441 = vrot.slane %v1887, %v3440
    %v3442 = vsel %vm2107, %v3441, %v3437
    %v3443 = vlaneseq
    %v3444 = vshrl.u32 %v3443, 7
    %v3445 = vsub.s32 %v2109, %v3444
    %v3446 = vrot.slane %v1888, %v3445
    %v3447 = vsel %vm2114, %v3446, %v3442
    %v3448 = vlaneseq
    %v3449 = vshrl.u32 %v3448, 7
    %v3450 = vsub.s32 %v2116, %v3449
    %v3451 = vrot.slane %v1889, %v3450
    %v3452 = vsel %vm2121, %v3451, %v3447
    %v3453 = vlaneseq
    %v3454 = vshrl.u32 %v3453, 7
    %v3455 = vsub.s32 %v2123, %v3454
    %v3456 = vrot.slane %v1890, %v3455
    %v3457 = vsel %vm2128, %v3456, %v3452
    %v3458 = vsel %vm2683, %v2983, %v2904
    %v3459 = vsel %vm2685, %v3062, %v3458
    %v3460 = vsel %vm2687, %v3141, %v3459
    %v3461 = vsel %vm2689, %v3220, %v3460
    %v3462 = vsel %vm2691, %v3299, %v3461
    %v3463 = vsel %vm2693, %v3378, %v3462
    %v3464 = vsel %vm2695, %v3457, %v3463
    %v3466 = vsel %vm1762, %v2696, %v3464
    %vm3467 = vcmp.lt.s32.totalorder %v2020, 8
    %v3468 = vsel %vm3467, %v3466, -1e+30
    %3469 = vmax.xlane.f32.xlu0 %v3468
    %v3470 = vpop.xlane.xlu0 %3469
    %v3471 = vsub.f32 %v3468, %v3470
    %v3472 = vmul.f32 %v3471, 1.442695
    %v3473 = vpow.pop %v3472
    %3474 = vadd.xlane.f32.xlu0 %v3473
    %v3475 = vpop.xlane.xlu0 %3474
    %v3476 = vlog2.pop %v3475
    %v3477 = vmul.f32 %v3476, 0.6931472
    %v3478 = vsub.f32 %v3471, %v3477
    %3479 = vst [vmem:[#allocation11] sm:$0xff] %v3478
    // Predicated region
    $region46: #{tpu_custom_call.1} parent=1 // pred_check
      _
    $region47: #{tpu_custom_call.1} parent=1 // pred_check_branch
      %3481 = sbr.rel (0) target = $region49
    $region48: #{tpu_custom_call.1} parent=1 // pred_region
      %s3483 = ssub.s32 128, 128
      %3484 = vsyncadd [#allocation4], %s3483
      %s3486 = sshll.u32 [#allocation11], 4
      %s3487 = int_to_ptr.vmem [resolvable:$true] %s3486
      %3489 = dma.vmem_to_hbm [thread:$0]  %s3487, 128, %s6, [#allocation4]
    $region49: #{tpu_custom_call.1} parent=1 // pred_fallthru
      _
    // Predicated region
    $region50: #{tpu_custom_call.1} parent=1 // pred_check
      _
    $region51: #{tpu_custom_call.1} parent=1 // pred_check_branch
      %3491 = sbr.rel (0) target = $region53
    $region52: #{tpu_custom_call.1} parent=1 // pred_region
      %3492 = dma.done [#allocation4], 128
    $region53: #{tpu_custom_call.1} parent=1 // pred_fallthru
      _
    %3493 = vsyncpa [#allocation3], 1
    %3494 = vsyncpa [#allocation6], 1
    %3495 = vsyncpa [#allocation9], 1
    %3496 = vsyncpa [#allocation4], 1

</llo_original>
